<compile_context>
chip_gen: v6e
topology: v6e:2x2x1
jax: 0.10.0
libtpu: 0.0.40
codegen_flags: <defaults>
</compile_context>

<pallas_src>
import functools

import jax
import jax.numpy as jnp
from jax.experimental import pallas as pl
from jax.experimental.pallas import tpu as pltpu


# ---------------------------------------------------------------------------
# Fully-fused RFB kernel (one grid step == one batch element)
# ---------------------------------------------------------------------------
def _rfb_fused_kernel(
    x_ref, col_ref, w5_ref, b5_ref,
    b1_wa_ref, b1_ba_ref, b1_wb_ref, b1_bb_ref, b1_wc_ref, b1_bc_ref,
    b2_wa_ref, b2_ba_ref, b2_wb_ref, b2_bb_ref, b2_wc_ref, b2_bc_ref,
    b3_wa_ref, b3_ba_ref, b3_wb_ref, b3_bb_ref, b3_wc_ref, b3_bc_ref,
    wcat_ref, bcat_ref,
    o_ref,
    buf_ref,
    *, H, W, C, branch_kd, padf):
    HW = H * W
    col = col_ref[...]                       # (1, HW) int32: w-coordinate of p

    # Zero only the halo strips of the flattened scratch row; the interior is
    # fully overwritten before every use (cheap: 2*C*padf elements).
    buf_ref[:, :padf] = jnp.zeros((C, padf), jnp.float32)
    buf_ref[:, padf + HW:] = jnp.zeros((C, padf), jnp.float32)

    def shifted(dh, dw):
        """Activation in buf shifted by (dh, dw) with zero padding, (C, HW)."""
        s = dh * W + dw                      # static python int
        y = buf_ref[:, padf + s: padf + s + HW]
        # Rows are contiguous length-W chunks of the flattened axis, so a pure
        # H shift never leaks across rows; a W shift leaks at row boundaries
        # and is masked with the precomputed column index.
        if dw > 0:
            y = jnp.where(col < W - dw, y, 0.0)
        elif dw < 0:
            y = jnp.where(col >= -dw, y, 0.0)
        return y

    def conv_tap_sum(v, taps, w):
        """sum_t  W_t @ shift_t(v) as ONE fat-K matmul.  v:(C,HW) w:(C,T*C)."""
        buf_ref[:, padf:padf + HW] = v       # lane-aligned (padf % 128 == 0)
        patch = jnp.concatenate([shifted(dh, dw) for dh, dw in taps], axis=0)
        return jnp.dot(w, patch, preferred_element_type=jnp.float32)

    taps_3x3_1 = [(dh, dw) for dh in (-1, 0, 1) for dw in (-1, 0, 1)]

    # ---- 1) merged 1x1 heads: [x0 | b1_in | b2_in | b3_in | res] ----------
    x = x_ref[0]                                                 # (Cin, HW)
    y5 = jnp.dot(w5_ref[...], x, preferred_element_type=jnp.float32)
    y5 = y5 + b5_ref[...]                                        # (5C, HW)

    # ---- 2) branch0 contribution to conv_cat (branch0 == its 1x1 head) ----
    acc = conv_tap_sum(y5[0:C], taps_3x3_1, wcat_ref[0])

    branch_layers = (
        (b1_wa_ref, b1_ba_ref, b1_wb_ref, b1_bb_ref, b1_wc_ref, b1_bc_ref),
        (b2_wa_ref, b2_ba_ref, b2_wb_ref, b2_bb_ref, b2_wc_ref, b2_bc_ref),
        (b3_wa_ref, b3_ba_ref, b3_wb_ref, b3_bb_ref, b3_wc_ref, b3_bc_ref),
    )

    # ---- 3) branches 1..3: (1,k) -> (k,1) -> 3x3(dilation d) -> conv_cat ---
    for b, (k, d) in enumerate(branch_kd):
        wa, ba, wb, bb, wc, bc = branch_layers[b]
        p = (k - 1) // 2
        v = y5[(b + 1) * C:(b + 2) * C]                          # branch input
        v = conv_tap_sum(v, [(0, j - p) for j in range(k)], wa[...]) + ba[...]
        v = conv_tap_sum(v, [(i - p, 0) for i in range(k)], wb[...]) + bb[...]
        v = conv_tap_sum(v, [((i - 1) * d, (j - 1) * d)
                             for i in range(3) for j in range(3)],
                         wc[...]) + bc[...]
        # conv_cat accumulated per branch: K = 9*C instead of one 36*C patch.
        acc = acc + conv_tap_sum(v, taps_3x3_1, wcat_ref[b + 1])

    # ---- 4) conv_cat bias + residual + ReLU, lane-dense store --------------
    res = y5[4 * C:5 * C]
    out = jnp.maximum(acc + bcat_ref[...] + res, 0.0)
    o_ref[...] = out.reshape(1, C, HW).astype(o_ref.dtype)


# ---------------------------------------------------------------------------
# pallas_call wrapper
# ---------------------------------------------------------------------------
def _vmem_limit_bytes(required):
    cap = 128 * 1024 * 1024
    try:
        cap = int(getattr(pltpu.get_tpu_info(), "vmem_capacity_bytes", cap))
    except Exception:
        pass
    return int(min(max(4 * required, 16 * 1024 * 1024), int(0.75 * cap)))


def rfb_modified_forward(fused, x_nchw):
    """x_nchw: (N, Cin, H, W) float32 -> (N, C, H, W) float32."""
    N, Cin, H, W = x_nchw.shape
    C = fused["C"]
    HW = H * W
    max_d = max(br["d"] for br in fused["branches"])
    assert min(H, W) > max_d, "feature map must exceed the largest dilation"
    # Halo width of the flattened scratch; multiple of 128 -> lane-aligned
    # interior stores.
    padf = pl.cdiv(max_d * W + max_d, 128) * 128

    x = x_nchw.reshape(N, Cin, HW)                         # spatial -> lanes
    col = (jnp.arange(HW, dtype=jnp.int32) % W).reshape(1, HW)

    weights = [fused["w5"], fused["b5"]]
    for br in fused["branches"]:
        weights += [br["wa"], br["ba"], br["wb"], br["bb"], br["wc"], br["bc"]]
    weights += [fused["wcat"], fused["bcat"]]

    kern = functools.partial(
        _rfb_fused_kernel, H=H, W=W, C=C,
        branch_kd=tuple((br["k"], br["d"]) for br in fused["branches"]),
        padf=padf)

    def const_spec(a):
        if a.ndim == 2:
            return pl.BlockSpec(tuple(a.shape), lambda n: (0, 0))
        return pl.BlockSpec(tuple(a.shape), lambda n: (0, 0, 0))

    in_specs = ([pl.BlockSpec((1, Cin, HW), lambda n: (n, 0, 0)),
                 const_spec(col)] +
                [const_spec(a) for a in weights])

    scratch_shapes = [pltpu.VMEM((C, HW + 2 * padf), jnp.float32)]

    block_bytes = 4 * (2 * (Cin * HW + C * HW) + HW
                       + sum(int(a.size) for a in weights)
                       + C * (HW + 2 * padf))
    interm_bytes = 4 * HW * (5 * C + 2 * 9 * C + 4 * C)   # y5 + patches + tmps
    limit = _vmem_limit_bytes(block_bytes + interm_bytes)

    out = pl.pallas_call(
        kern,
        out_shape=jax.ShapeDtypeStruct((N, C, HW), jnp.float32),
        grid_spec=pltpu.PrefetchScalarGridSpec(
            num_scalar_prefetch=0,
            grid=(N,),
            in_specs=in_specs,
            out_specs=pl.BlockSpec((1, C, HW), lambda n: (n, 0, 0)),
            scratch_shapes=scratch_shapes,
        ),
        compiler_params=pltpu.CompilerParams(
            dimension_semantics=("parallel",),
            vmem_limit_bytes=limit),
        # TODO(synk): on v7x, sweep pipeline_mode=pl.Buffered(3) on the x spec
        #             once a spatial grid axis is added for large images.
    )(x, col, *weights)
    return out.reshape(N, C, H, W)


# ---------------------------------------------------------------------------
# Deterministic parameter construction (mirrors RFB_modified.__init__ shapes)
# ---------------------------------------------------------------------------
def _pair(v):
    return (v, v) if isinstance(v, int) else tuple(v)


def _make_conv(key, cin, cout, ksize, padding=0, dilation=1):
    kh, kw = _pair(ksize)
    k_w, k_g, k_b, k_m, k_v = jax.random.split(key, 5)
    fan_in = cin * kh * kw
    w = jax.random.normal(k_w, (kh, kw, cin, cout), jnp.float32) / jnp.sqrt(fan_in)
    gamma = 1.0 + 0.1 * jax.random.normal(k_g, (cout,), jnp.float32)
    beta = 0.1 * jax.random.normal(k_b, (cout,), jnp.float32)
    mean = 0.1 * jax.random.normal(k_m, (cout,), jnp.float32)
    var = 1.0 + 0.1 * jnp.abs(jax.random.normal(k_v, (cout,), jnp.float32))
    eps = 1e-5
    scale = gamma / jnp.sqrt(var + eps)
    bias = beta - mean * scale
    return dict(w=w, scale=scale, bias=bias,
                padding=_pair(padding), dilation=_pair(dilation))


def init_rfb_modified(key, in_channel, out_channel):
    ks = jax.random.split(key, 15)
    p = {}
    p["branch0"] = [_make_conv(ks[0], in_channel, out_channel, 1)]
    p["branch1"] = [
        _make_conv(ks[1], in_channel, out_channel, 1),
        _make_conv(ks[2], out_channel, out_channel, (1, 3), padding=(0, 1)),
        _make_conv(ks[3], out_channel, out_channel, (3, 1), padding=(1, 0)),
        _make_conv(ks[4], out_channel, out_channel, 3, padding=3, dilation=3),
    ]
    p["branch2"] = [
        _make_conv(ks[5], in_channel, out_channel, 1),
        _make_conv(ks[6], out_channel, out_channel, (1, 5), padding=(0, 2)),
        _make_conv(ks[7], out_channel, out_channel, (5, 1), padding=(2, 0)),
        _make_conv(ks[8], out_channel, out_channel, 3, padding=5, dilation=5),
    ]
    p["branch3"] = [
        _make_conv(ks[9], in_channel, out_channel, 1),
        _make_conv(ks[10], out_channel, out_channel, (1, 7), padding=(0, 3)),
        _make_conv(ks[11], out_channel, out_channel, (7, 1), padding=(3, 0)),
        _make_conv(ks[12], out_channel, out_channel, 3, padding=7, dilation=7),
    ]
    p["conv_cat"] = _make_conv(ks[13], 4 * out_channel, out_channel, 3, padding=1)
    p["conv_res"] = _make_conv(ks[14], in_channel, out_channel, 1)
    return p


def prepare_fused_params(p):
    """One-time weight preprocessing (hoisted out of the forward pass).

    Produces (Cout, K) matrices with BN scale folded in, K ordered as
    (kh, kw, cin) to match the in-kernel tap enumeration, plus (Cout, 1)
    biases. conv_cat is pre-split per cat-input branch as (4, C, 9C)."""
    C = p["conv_res"]["w"].shape[-1]

    def fold(layer):
        w = layer["w"] * layer["scale"]                   # (KH,KW,Cin,Cout)
        KH, KW, Cin, Cout = w.shape
        wf = jnp.transpose(w, (3, 0, 1, 2)).reshape(Cout, KH * KW * Cin)
        return wf, layer["bias"].reshape(Cout, 1)

    # Merge the five shared-input 1x1 convs along Cout:
    # [branch0_out | branch1_in | branch2_in | branch3_in | conv_res].
    heads = [p["branch0"][0], p["branch1"][0], p["branch2"][0],
             p["branch3"][0], p["conv_res"]]
    hw, hb = zip(*[fold(l) for l in heads])
    w5 = jnp.concatenate(hw, axis=0)                      # (5C, Cin)
    b5 = jnp.concatenate(hb, axis=0)                      # (5C, 1)

    branches = []
    for name, k in (("branch1", 3), ("branch2", 5), ("branch3", 7)):
        la, lb, lc = p[name][1:4]
        wa, ba = fold(la)
        wb, bb = fold(lb)
        wc, bc = fold(lc)
        branches.append(dict(k=k, d=k, wa=wa, ba=ba, wb=wb, bb=bb,
                             wc=wc, bc=bc))

    wcat = p["conv_cat"]["w"] * p["conv_cat"]["scale"]    # (3, 3, 4C, C)
    wcat = wcat.reshape(3, 3, 4, C, C)                    # (kh, kw, b, i, o)
    wcat = jnp.transpose(wcat, (2, 4, 0, 1, 3)).reshape(4, C, 9 * C)
    bcat = p["conv_cat"]["bias"].reshape(C, 1)
    return dict(C=C, w5=w5, b5=b5, branches=branches, wcat=wcat, bcat=bcat)


# ---------------------------------------------------------------------------
# Pure-JAX reference (high-precision) for the numerical cross-check
# ---------------------------------------------------------------------------
def _ref_basic_conv(x, layer):
    ph, pw = layer["padding"]
    dh, dw = layer["dilation"]
    y = jax.lax.conv_general_dilated(
        x, layer["w"], window_strides=(1, 1),
        padding=((ph, ph), (pw, pw)), rhs_dilation=(dh, dw),
        dimension_numbers=("NHWC", "HWIO", "NHWC"),
        precision=jax.lax.Precision.HIGHEST)
    return y * layer["scale"] + layer["bias"]


def rfb_reference(params, x_nchw):
    x = jnp.transpose(x_nchw, (0, 2, 3, 1))

    def run(layers, inp):
        h = inp
        for l in layers:
            h = _ref_basic_conv(h, l)
        return h

    x0 = run(params["branch0"], x)
    x1 = run(params["branch1"], x)
    x2 = run(params["branch2"], x)
    x3 = run(params["branch3"], x)
    xc = _ref_basic_conv(jnp.concatenate([x0, x1, x2, x3], axis=-1),
                         params["conv_cat"])
    xr = _ref_basic_conv(x, params["conv_res"])
    return jnp.transpose(jnp.maximum(xc + xr, 0.0), (0, 3, 1, 2))


# ---------------------------------------------------------------------------
if __name__ == "__main__":
    key = jax.random.PRNGKey(0)
    k_param, k_x = jax.random.split(key)

    in_channel, out_channel = 4, 8
    N, H, W = 2, 16, 16

    params = init_rfb_modified(k_param, in_channel, out_channel)
    fused = prepare_fused_params(params)          # hoisted: one-time weight prep
    x = jax.random.normal(k_x, (N, in_channel, H, W), jnp.float32)   # NCHW

    y = rfb_modified_forward(fused, x)
    jax.block_until_ready(y)

    assert y.shape == (N, out_channel, H, W)
    assert bool(jnp.all(y >= 0.0))                # final ReLU

    # With f32 accumulation both paths agree to ~1e-5 in practice; the 1e-2
    # bound leaves margin for platform-dependent reduced-precision MXU passes
    # while still catching any tap-ordering / weight-layout bug (O(1) errors).
    y_ref = rfb_reference(params, x)
    err = float(jnp.max(jnp.abs(y - y_ref)))
    assert err < 1e-2, f"mismatch vs reference: {err}"

    print("KERNEL_OK")
</pallas_src>

<mosaic_0001>
module attributes {stable_mosaic.version = 11 : i64} {
  func.func @_rfb_fused_kernel(%arg0: i32, %arg1: memref<1x4x256xf32, #tpu.memory_space<vmem>>, %arg2: memref<1x256xi32, #tpu.memory_space<vmem>>, %arg3: memref<40x4xf32, #tpu.memory_space<vmem>>, %arg4: memref<40x1xf32, #tpu.memory_space<vmem>>, %arg5: memref<8x24xf32, #tpu.memory_space<vmem>>, %arg6: memref<8x1xf32, #tpu.memory_space<vmem>>, %arg7: memref<8x24xf32, #tpu.memory_space<vmem>>, %arg8: memref<8x1xf32, #tpu.memory_space<vmem>>, %arg9: memref<8x72xf32, #tpu.memory_space<vmem>>, %arg10: memref<8x1xf32, #tpu.memory_space<vmem>>, %arg11: memref<8x40xf32, #tpu.memory_space<vmem>>, %arg12: memref<8x1xf32, #tpu.memory_space<vmem>>, %arg13: memref<8x40xf32, #tpu.memory_space<vmem>>, %arg14: memref<8x1xf32, #tpu.memory_space<vmem>>, %arg15: memref<8x72xf32, #tpu.memory_space<vmem>>, %arg16: memref<8x1xf32, #tpu.memory_space<vmem>>, %arg17: memref<8x56xf32, #tpu.memory_space<vmem>>, %arg18: memref<8x1xf32, #tpu.memory_space<vmem>>, %arg19: memref<8x56xf32, #tpu.memory_space<vmem>>, %arg20: memref<8x1xf32, #tpu.memory_space<vmem>>, %arg21: memref<8x72xf32, #tpu.memory_space<vmem>>, %arg22: memref<8x1xf32, #tpu.memory_space<vmem>>, %arg23: memref<4x8x72xf32, #tpu.memory_space<vmem>>, %arg24: memref<8x1xf32, #tpu.memory_space<vmem>>, %arg25: memref<1x8x256xf32, #tpu.memory_space<vmem>>, %arg26: memref<8x512xf32, #tpu.memory_space<vmem>>) attributes {dimension_semantics = [#tpu.dimension_semantics<parallel>], iteration_bounds = array<i64: 2>, scalar_prefetch = 0 : i64, scratch_operands = 1 : i64, tpu.core_type = #tpu.core_type<tc>, window_params = [{transform_indices = @transform_0, window_bounds = array<i64: 1, 4, 256>}, {pipeline_mode = #tpu.pipeline_mode<synchronous>, transform_indices = @transform_1, window_bounds = array<i64: 1, 256>}, {pipeline_mode = #tpu.pipeline_mode<synchronous>, transform_indices = @transform_2, window_bounds = array<i64: 40, 4>}, {pipeline_mode = #tpu.pipeline_mode<synchronous>, transform_indices = @transform_3, window_bounds = array<i64: 40, 1>}, {pipeline_mode = #tpu.pipeline_mode<synchronous>, transform_indices = @transform_4, window_bounds = array<i64: 8, 24>}, {pipeline_mode = #tpu.pipeline_mode<synchronous>, transform_indices = @transform_5, window_bounds = array<i64: 8, 1>}, {pipeline_mode = #tpu.pipeline_mode<synchronous>, transform_indices = @transform_6, window_bounds = array<i64: 8, 24>}, {pipeline_mode = #tpu.pipeline_mode<synchronous>, transform_indices = @transform_7, window_bounds = array<i64: 8, 1>}, {pipeline_mode = #tpu.pipeline_mode<synchronous>, transform_indices = @transform_8, window_bounds = array<i64: 8, 72>}, {pipeline_mode = #tpu.pipeline_mode<synchronous>, transform_indices = @transform_9, window_bounds = array<i64: 8, 1>}, {pipeline_mode = #tpu.pipeline_mode<synchronous>, transform_indices = @transform_10, window_bounds = array<i64: 8, 40>}, {pipeline_mode = #tpu.pipeline_mode<synchronous>, transform_indices = @transform_11, window_bounds = array<i64: 8, 1>}, {pipeline_mode = #tpu.pipeline_mode<synchronous>, transform_indices = @transform_12, window_bounds = array<i64: 8, 40>}, {pipeline_mode = #tpu.pipeline_mode<synchronous>, transform_indices = @transform_13, window_bounds = array<i64: 8, 1>}, {pipeline_mode = #tpu.pipeline_mode<synchronous>, transform_indices = @transform_14, window_bounds = array<i64: 8, 72>}, {pipeline_mode = #tpu.pipeline_mode<synchronous>, transform_indices = @transform_15, window_bounds = array<i64: 8, 1>}, {pipeline_mode = #tpu.pipeline_mode<synchronous>, transform_indices = @transform_16, window_bounds = array<i64: 8, 56>}, {pipeline_mode = #tpu.pipeline_mode<synchronous>, transform_indices = @transform_17, window_bounds = array<i64: 8, 1>}, {pipeline_mode = #tpu.pipeline_mode<synchronous>, transform_indices = @transform_18, window_bounds = array<i64: 8, 56>}, {pipeline_mode = #tpu.pipeline_mode<synchronous>, transform_indices = @transform_19, window_bounds = array<i64: 8, 1>}, {pipeline_mode = #tpu.pipeline_mode<synchronous>, transform_indices = @transform_20, window_bounds = array<i64: 8, 72>}, {pipeline_mode = #tpu.pipeline_mode<synchronous>, transform_indices = @transform_21, window_bounds = array<i64: 8, 1>}, {pipeline_mode = #tpu.pipeline_mode<synchronous>, transform_indices = @transform_22, window_bounds = array<i64: 4, 8, 72>}, {pipeline_mode = #tpu.pipeline_mode<synchronous>, transform_indices = @transform_23, window_bounds = array<i64: 8, 1>}, {transform_indices = @transform_24, window_bounds = array<i64: 1, 8, 256>}]} {
    %c0 = arith.constant 0 : index
    %c0_0 = arith.constant 0 : index
    %0 = vector.load %arg2[%c0, %c0_0] : memref<1x256xi32, #tpu.memory_space<vmem>>, vector<1x256xi32>
    %cst = arith.constant 0.000000e+00 : f32
    %1 = vector.broadcast %cst : f32 to vector<8x128xf32>
    %c0_1 = arith.constant 0 : index
    %c0_2 = arith.constant 0 : index
    %2 = vector.load %arg26[%c0_1, %c0_2] : memref<8x512xf32, #tpu.memory_space<vmem>>, vector<8x128xf32>
    tpu.vector_store %arg26[%c0_1, %c0_2], %1 {strides = array<i32>} : memref<8x512xf32, #tpu.memory_space<vmem>>, vector<8x128xf32>,
    %cst_3 = arith.constant 0.000000e+00 : f32
    %3 = vector.broadcast %cst_3 : f32 to vector<8x128xf32>
    %c0_4 = arith.constant 0 : index
    %c384 = arith.constant 384 : index
    %4 = vector.load %arg26[%c0_4, %c384] : memref<8x512xf32, #tpu.memory_space<vmem>>, vector<8x128xf32>
    tpu.vector_store %arg26[%c0_4, %c384], %3 {strides = array<i32>} : memref<8x512xf32, #tpu.memory_space<vmem>>, vector<8x128xf32>,
    %c0_5 = arith.constant 0 : index
    %c0_6 = arith.constant 0 : index
    %c0_7 = arith.constant 0 : index
    %5 = vector.load %arg1[%c0_5, %c0_6, %c0_7] : memref<1x4x256xf32, #tpu.memory_space<vmem>>, vector<1x4x256xf32>
    %6 = vector.shape_cast %5 : vector<1x4x256xf32> to vector<4x256xf32>
    %c0_8 = arith.constant 0 : index
    %c0_9 = arith.constant 0 : index
    %7 = vector.load %arg3[%c0_8, %c0_9] : memref<40x4xf32, #tpu.memory_space<vmem>>, vector<40x4xf32>
    %cst_10 = arith.constant dense<0.000000e+00> : vector<40x256xf32>
    %8 = tpu.matmul %7, %6, %cst_10 {dimension_numbers = #tpu.dot_dimension_numbers<[1], [0], [0], [1], [0, 0, 1, 1], [], []>} : vector<40x4xf32>, vector<4x256xf32>, vector<40x256xf32> -> vector<40x256xf32>
    %c0_11 = arith.constant 0 : index
    %c0_12 = arith.constant 0 : index
    %9 = vector.load %arg4[%c0_11, %c0_12] : memref<40x1xf32, #tpu.memory_space<vmem>>, vector<40x1xf32>
    %10 = vector.broadcast %9 : vector<40x1xf32> to vector<40x256xf32>
    %11 = arith.addf %8, %10 : vector<40x256xf32>
    %12 = vector.extract_strided_slice %11 {offsets = [0, 0], sizes = [8, 256], strides = [1, 1]} : vector<40x256xf32> to vector<8x256xf32>
    %c0_13 = arith.constant 0 : index
    %c0_14 = arith.constant 0 : index
    %c0_15 = arith.constant 0 : index
    %13 = vector.load %arg23[%c0_13, %c0_14, %c0_15] : memref<4x8x72xf32, #tpu.memory_space<vmem>>, vector<1x8x72xf32>
    %14 = vector.shape_cast %13 : vector<1x8x72xf32> to vector<8x72xf32>
    %c0_16 = arith.constant 0 : index
    %c128 = arith.constant 128 : index
    %15 = vector.load %arg26[%c0_16, %c128] : memref<8x512xf32, #tpu.memory_space<vmem>>, vector<8x256xf32>
    tpu.vector_store %arg26[%c0_16, %c128], %12 {strides = array<i32>} : memref<8x512xf32, #tpu.memory_space<vmem>>, vector<8x256xf32>,
    %c0_17 = arith.constant 0 : index
    %c111 = arith.constant 111 : index
    %16 = vector.load %arg26[%c0_17, %c111] : memref<8x512xf32, #tpu.memory_space<vmem>>, vector<8x256xf32>
    %c1_i32 = arith.constant 1 : i32
    %17 = vector.broadcast %c1_i32 : i32 to vector<1x256xi32>
    %18 = arith.cmpi sge, %0, %17 : vector<1x256xi32>
    %cst_18 = arith.constant 0.000000e+00 : f32
    %19 = vector.shape_cast %18 : vector<1x256xi1> to vector<1x256xi1>
    %20 = vector.broadcast %19 : vector<1x256xi1> to vector<8x256xi1>
    %21 = vector.broadcast %cst_18 : f32 to vector<8x256xf32>
    %22 = arith.select %20, %16, %21 : vector<8x256xi1>, vector<8x256xf32>
    %c0_19 = arith.constant 0 : index
    %c112 = arith.constant 112 : index
    %23 = vector.load %arg26[%c0_19, %c112] : memref<8x512xf32, #tpu.memory_space<vmem>>, vector<8x256xf32>
    %c0_20 = arith.constant 0 : index
    %c113 = arith.constant 113 : index
    %24 = vector.load %arg26[%c0_20, %c113] : memref<8x512xf32, #tpu.memory_space<vmem>>, vector<8x256xf32>
    %c15_i32 = arith.constant 15 : i32
    %25 = vector.broadcast %c15_i32 : i32 to vector<1x256xi32>
    %26 = arith.cmpi slt, %0, %25 : vector<1x256xi32>
    %cst_21 = arith.constant 0.000000e+00 : f32
    %27 = vector.shape_cast %26 : vector<1x256xi1> to vector<1x256xi1>
    %28 = vector.broadcast %27 : vector<1x256xi1> to vector<8x256xi1>
    %29 = vector.broadcast %cst_21 : f32 to vector<8x256xf32>
    %30 = arith.select %28, %24, %29 : vector<8x256xi1>, vector<8x256xf32>
    %c0_22 = arith.constant 0 : index
    %c127 = arith.constant 127 : index
    %31 = vector.load %arg26[%c0_22, %c127] : memref<8x512xf32, #tpu.memory_space<vmem>>, vector<8x256xf32>
    %c1_i32_23 = arith.constant 1 : i32
    %32 = vector.broadcast %c1_i32_23 : i32 to vector<1x256xi32>
    %33 = arith.cmpi sge, %0, %32 : vector<1x256xi32>
    %cst_24 = arith.constant 0.000000e+00 : f32
    %34 = vector.shape_cast %33 : vector<1x256xi1> to vector<1x256xi1>
    %35 = vector.broadcast %34 : vector<1x256xi1> to vector<8x256xi1>
    %36 = vector.broadcast %cst_24 : f32 to vector<8x256xf32>
    %37 = arith.select %35, %31, %36 : vector<8x256xi1>, vector<8x256xf32>
    %c0_25 = arith.constant 0 : index
    %c128_26 = arith.constant 128 : index
    %38 = vector.load %arg26[%c0_25, %c128_26] : memref<8x512xf32, #tpu.memory_space<vmem>>, vector<8x256xf32>
    %c0_27 = arith.constant 0 : index
    %c129 = arith.constant 129 : index
    %39 = vector.load %arg26[%c0_27, %c129] : memref<8x512xf32, #tpu.memory_space<vmem>>, vector<8x256xf32>
    %c15_i32_28 = arith.constant 15 : i32
    %40 = vector.broadcast %c15_i32_28 : i32 to vector<1x256xi32>
    %41 = arith.cmpi slt, %0, %40 : vector<1x256xi32>
    %cst_29 = arith.constant 0.000000e+00 : f32
    %42 = vector.shape_cast %41 : vector<1x256xi1> to vector<1x256xi1>
    %43 = vector.broadcast %42 : vector<1x256xi1> to vector<8x256xi1>
    %44 = vector.broadcast %cst_29 : f32 to vector<8x256xf32>
    %45 = arith.select %43, %39, %44 : vector<8x256xi1>, vector<8x256xf32>
    %c0_30 = arith.constant 0 : index
    %c143 = arith.constant 143 : index
    %46 = vector.load %arg26[%c0_30, %c143] : memref<8x512xf32, #tpu.memory_space<vmem>>, vector<8x256xf32>
    %c1_i32_31 = arith.constant 1 : i32
    %47 = vector.broadcast %c1_i32_31 : i32 to vector<1x256xi32>
    %48 = arith.cmpi sge, %0, %47 : vector<1x256xi32>
    %cst_32 = arith.constant 0.000000e+00 : f32
    %49 = vector.shape_cast %48 : vector<1x256xi1> to vector<1x256xi1>
    %50 = vector.broadcast %49 : vector<1x256xi1> to vector<8x256xi1>
    %51 = vector.broadcast %cst_32 : f32 to vector<8x256xf32>
    %52 = arith.select %50, %46, %51 : vector<8x256xi1>, vector<8x256xf32>
    %c0_33 = arith.constant 0 : index
    %c144 = arith.constant 144 : index
    %53 = vector.load %arg26[%c0_33, %c144] : memref<8x512xf32, #tpu.memory_space<vmem>>, vector<8x256xf32>
    %c0_34 = arith.constant 0 : index
    %c145 = arith.constant 145 : index
    %54 = vector.load %arg26[%c0_34, %c145] : memref<8x512xf32, #tpu.memory_space<vmem>>, vector<8x256xf32>
    %c15_i32_35 = arith.constant 15 : i32
    %55 = vector.broadcast %c15_i32_35 : i32 to vector<1x256xi32>
    %56 = arith.cmpi slt, %0, %55 : vector<1x256xi32>
    %cst_36 = arith.constant 0.000000e+00 : f32
    %57 = vector.shape_cast %56 : vector<1x256xi1> to vector<1x256xi1>
    %58 = vector.broadcast %57 : vector<1x256xi1> to vector<8x256xi1>
    %59 = vector.broadcast %cst_36 : f32 to vector<8x256xf32>
    %60 = arith.select %58, %54, %59 : vector<8x256xi1>, vector<8x256xf32>
    %61 = tpu.concatenate %22, %23, %30, %37, %38, %45, %52, %53, %60 in 0 : vector<8x256xf32>, vector<8x256xf32>, vector<8x256xf32>, vector<8x256xf32>, vector<8x256xf32>, vector<8x256xf32>, vector<8x256xf32>, vector<8x256xf32>, vector<8x256xf32> -> vector<72x256xf32>
    %cst_37 = arith.constant dense<0.000000e+00> : vector<8x256xf32>
    %62 = tpu.matmul %14, %61, %cst_37 {dimension_numbers = #tpu.dot_dimension_numbers<[1], [0], [0], [1], [0, 0, 1, 1], [], []>} : vector<8x72xf32>, vector<72x256xf32>, vector<8x256xf32> -> vector<8x256xf32>
    %63 = vector.extract_strided_slice %11 {offsets = [8, 0], sizes = [8, 256], strides = [1, 1]} : vector<40x256xf32> to vector<8x256xf32>
    %c0_38 = arith.constant 0 : index
    %c0_39 = arith.constant 0 : index
    %64 = vector.load %arg5[%c0_38, %c0_39] : memref<8x24xf32, #tpu.memory_space<vmem>>, vector<8x24xf32>
    %c0_40 = arith.constant 0 : index
    %c128_41 = arith.constant 128 : index
    %65 = vector.load %arg26[%c0_40, %c128_41] : memref<8x512xf32, #tpu.memory_space<vmem>>, vector<8x256xf32>
    tpu.vector_store %arg26[%c0_40, %c128_41], %63 {strides = array<i32>} : memref<8x512xf32, #tpu.memory_space<vmem>>, vector<8x256xf32>,
    %c0_42 = arith.constant 0 : index
    %c127_43 = arith.constant 127 : index
    %66 = vector.load %arg26[%c0_42, %c127_43] : memref<8x512xf32, #tpu.memory_space<vmem>>, vector<8x256xf32>
    %c1_i32_44 = arith.constant 1 : i32
    %67 = vector.broadcast %c1_i32_44 : i32 to vector<1x256xi32>
    %68 = arith.cmpi sge, %0, %67 : vector<1x256xi32>
    %cst_45 = arith.constant 0.000000e+00 : f32
    %69 = vector.shape_cast %68 : vector<1x256xi1> to vector<1x256xi1>
    %70 = vector.broadcast %69 : vector<1x256xi1> to vector<8x256xi1>
    %71 = vector.broadcast %cst_45 : f32 to vector<8x256xf32>
    %72 = arith.select %70, %66, %71 : vector<8x256xi1>, vector<8x256xf32>
    %c0_46 = arith.constant 0 : index
    %c128_47 = arith.constant 128 : index
    %73 = vector.load %arg26[%c0_46, %c128_47] : memref<8x512xf32, #tpu.memory_space<vmem>>, vector<8x256xf32>
    %c0_48 = arith.constant 0 : index
    %c129_49 = arith.constant 129 : index
    %74 = vector.load %arg26[%c0_48, %c129_49] : memref<8x512xf32, #tpu.memory_space<vmem>>, vector<8x256xf32>
    %c15_i32_50 = arith.constant 15 : i32
    %75 = vector.broadcast %c15_i32_50 : i32 to vector<1x256xi32>
    %76 = arith.cmpi slt, %0, %75 : vector<1x256xi32>
    %cst_51 = arith.constant 0.000000e+00 : f32
    %77 = vector.shape_cast %76 : vector<1x256xi1> to vector<1x256xi1>
    %78 = vector.broadcast %77 : vector<1x256xi1> to vector<8x256xi1>
    %79 = vector.broadcast %cst_51 : f32 to vector<8x256xf32>
    %80 = arith.select %78, %74, %79 : vector<8x256xi1>, vector<8x256xf32>
    %81 = tpu.concatenate %72, %73, %80 in 0 : vector<8x256xf32>, vector<8x256xf32>, vector<8x256xf32> -> vector<24x256xf32>
    %cst_52 = arith.constant dense<0.000000e+00> : vector<8x256xf32>
    %82 = tpu.matmul %64, %81, %cst_52 {dimension_numbers = #tpu.dot_dimension_numbers<[1], [0], [0], [1], [0, 0, 1, 1], [], []>} : vector<8x24xf32>, vector<24x256xf32>, vector<8x256xf32> -> vector<8x256xf32>
    %c0_53 = arith.constant 0 : index
    %c0_54 = arith.constant 0 : index
    %83 = vector.load %arg6[%c0_53, %c0_54] : memref<8x1xf32, #tpu.memory_space<vmem>>, vector<8x1xf32>
    %84 = vector.broadcast %83 : vector<8x1xf32> to vector<8x256xf32>
    %85 = arith.addf %82, %84 : vector<8x256xf32>
    %c0_55 = arith.constant 0 : index
    %c0_56 = arith.constant 0 : index
    %86 = vector.load %arg7[%c0_55, %c0_56] : memref<8x24xf32, #tpu.memory_space<vmem>>, vector<8x24xf32>
    %c0_57 = arith.constant 0 : index
    %c128_58 = arith.constant 128 : index
    %87 = vector.load %arg26[%c0_57, %c128_58] : memref<8x512xf32, #tpu.memory_space<vmem>>, vector<8x256xf32>
    tpu.vector_store %arg26[%c0_57, %c128_58], %85 {strides = array<i32>} : memref<8x512xf32, #tpu.memory_space<vmem>>, vector<8x256xf32>,
    %c0_59 = arith.constant 0 : index
    %c112_60 = arith.constant 112 : index
    %88 = vector.load %arg26[%c0_59, %c112_60] : memref<8x512xf32, #tpu.memory_space<vmem>>, vector<8x256xf32>
    %c0_61 = arith.constant 0 : index
    %c128_62 = arith.constant 128 : index
    %89 = vector.load %arg26[%c0_61, %c128_62] : memref<8x512xf32, #tpu.memory_space<vmem>>, vector<8x256xf32>
    %c0_63 = arith.constant 0 : index
    %c144_64 = arith.constant 144 : index
    %90 = vector.load %arg26[%c0_63, %c144_64] : memref<8x512xf32, #tpu.memory_space<vmem>>, vector<8x256xf32>
    %91 = tpu.concatenate %88, %89, %90 in 0 : vector<8x256xf32>, vector<8x256xf32>, vector<8x256xf32> -> vector<24x256xf32>
    %cst_65 = arith.constant dense<0.000000e+00> : vector<8x256xf32>
    %92 = tpu.matmul %86, %91, %cst_65 {dimension_numbers = #tpu.dot_dimension_numbers<[1], [0], [0], [1], [0, 0, 1, 1], [], []>} : vector<8x24xf32>, vector<24x256xf32>, vector<8x256xf32> -> vector<8x256xf32>
    %c0_66 = arith.constant 0 : index
    %c0_67 = arith.constant 0 : index
    %93 = vector.load %arg8[%c0_66, %c0_67] : memref<8x1xf32, #tpu.memory_space<vmem>>, vector<8x1xf32>
    %94 = vector.broadcast %93 : vector<8x1xf32> to vector<8x256xf32>
    %95 = arith.addf %92, %94 : vector<8x256xf32>
    %c0_68 = arith.constant 0 : index
    %c0_69 = arith.constant 0 : index
    %96 = vector.load %arg9[%c0_68, %c0_69] : memref<8x72xf32, #tpu.memory_space<vmem>>, vector<8x72xf32>
    %c0_70 = arith.constant 0 : index
    %c128_71 = arith.constant 128 : index
    %97 = vector.load %arg26[%c0_70, %c128_71] : memref<8x512xf32, #tpu.memory_space<vmem>>, vector<8x256xf32>
    tpu.vector_store %arg26[%c0_70, %c128_71], %95 {strides = array<i32>} : memref<8x512xf32, #tpu.memory_space<vmem>>, vector<8x256xf32>,
    %c0_72 = arith.constant 0 : index
    %c77 = arith.constant 77 : index
    %98 = vector.load %arg26[%c0_72, %c77] : memref<8x512xf32, #tpu.memory_space<vmem>>, vector<8x256xf32>
    %c3_i32 = arith.constant 3 : i32
    %99 = vector.broadcast %c3_i32 : i32 to vector<1x256xi32>
    %100 = arith.cmpi sge, %0, %99 : vector<1x256xi32>
    %cst_73 = arith.constant 0.000000e+00 : f32
    %101 = vector.shape_cast %100 : vector<1x256xi1> to vector<1x256xi1>
    %102 = vector.broadcast %101 : vector<1x256xi1> to vector<8x256xi1>
    %103 = vector.broadcast %cst_73 : f32 to vector<8x256xf32>
    %104 = arith.select %102, %98, %103 : vector<8x256xi1>, vector<8x256xf32>
    %c0_74 = arith.constant 0 : index
    %c80 = arith.constant 80 : index
    %105 = vector.load %arg26[%c0_74, %c80] : memref<8x512xf32, #tpu.memory_space<vmem>>, vector<8x256xf32>
    %c0_75 = arith.constant 0 : index
    %c83 = arith.constant 83 : index
    %106 = vector.load %arg26[%c0_75, %c83] : memref<8x512xf32, #tpu.memory_space<vmem>>, vector<8x256xf32>
    %c13_i32 = arith.constant 13 : i32
    %107 = vector.broadcast %c13_i32 : i32 to vector<1x256xi32>
    %108 = arith.cmpi slt, %0, %107 : vector<1x256xi32>
    %cst_76 = arith.constant 0.000000e+00 : f32
    %109 = vector.shape_cast %108 : vector<1x256xi1> to vector<1x256xi1>
    %110 = vector.broadcast %109 : vector<1x256xi1> to vector<8x256xi1>
    %111 = vector.broadcast %cst_76 : f32 to vector<8x256xf32>
    %112 = arith.select %110, %106, %111 : vector<8x256xi1>, vector<8x256xf32>
    %c0_77 = arith.constant 0 : index
    %c125 = arith.constant 125 : index
    %113 = vector.load %arg26[%c0_77, %c125] : memref<8x512xf32, #tpu.memory_space<vmem>>, vector<8x256xf32>
    %c3_i32_78 = arith.constant 3 : i32
    %114 = vector.broadcast %c3_i32_78 : i32 to vector<1x256xi32>
    %115 = arith.cmpi sge, %0, %114 : vector<1x256xi32>
    %cst_79 = arith.constant 0.000000e+00 : f32
    %116 = vector.shape_cast %115 : vector<1x256xi1> to vector<1x256xi1>
    %117 = vector.broadcast %116 : vector<1x256xi1> to vector<8x256xi1>
    %118 = vector.broadcast %cst_79 : f32 to vector<8x256xf32>
    %119 = arith.select %117, %113, %118 : vector<8x256xi1>, vector<8x256xf32>
    %c0_80 = arith.constant 0 : index
    %c128_81 = arith.constant 128 : index
    %120 = vector.load %arg26[%c0_80, %c128_81] : memref<8x512xf32, #tpu.memory_space<vmem>>, vector<8x256xf32>
    %c0_82 = arith.constant 0 : index
    %c131 = arith.constant 131 : index
    %121 = vector.load %arg26[%c0_82, %c131] : memref<8x512xf32, #tpu.memory_space<vmem>>, vector<8x256xf32>
    %c13_i32_83 = arith.constant 13 : i32
    %122 = vector.broadcast %c13_i32_83 : i32 to vector<1x256xi32>
    %123 = arith.cmpi slt, %0, %122 : vector<1x256xi32>
    %cst_84 = arith.constant 0.000000e+00 : f32
    %124 = vector.shape_cast %123 : vector<1x256xi1> to vector<1x256xi1>
    %125 = vector.broadcast %124 : vector<1x256xi1> to vector<8x256xi1>
    %126 = vector.broadcast %cst_84 : f32 to vector<8x256xf32>
    %127 = arith.select %125, %121, %126 : vector<8x256xi1>, vector<8x256xf32>
    %c0_85 = arith.constant 0 : index
    %c173 = arith.constant 173 : index
    %128 = vector.load %arg26[%c0_85, %c173] : memref<8x512xf32, #tpu.memory_space<vmem>>, vector<8x256xf32>
    %c3_i32_86 = arith.constant 3 : i32
    %129 = vector.broadcast %c3_i32_86 : i32 to vector<1x256xi32>
    %130 = arith.cmpi sge, %0, %129 : vector<1x256xi32>
    %cst_87 = arith.constant 0.000000e+00 : f32
    %131 = vector.shape_cast %130 : vector<1x256xi1> to vector<1x256xi1>
    %132 = vector.broadcast %131 : vector<1x256xi1> to vector<8x256xi1>
    %133 = vector.broadcast %cst_87 : f32 to vector<8x256xf32>
    %134 = arith.select %132, %128, %133 : vector<8x256xi1>, vector<8x256xf32>
    %c0_88 = arith.constant 0 : index
    %c176 = arith.constant 176 : index
    %135 = vector.load %arg26[%c0_88, %c176] : memref<8x512xf32, #tpu.memory_space<vmem>>, vector<8x256xf32>
    %c0_89 = arith.constant 0 : index
    %c179 = arith.constant 179 : index
    %136 = vector.load %arg26[%c0_89, %c179] : memref<8x512xf32, #tpu.memory_space<vmem>>, vector<8x256xf32>
    %c13_i32_90 = arith.constant 13 : i32
    %137 = vector.broadcast %c13_i32_90 : i32 to vector<1x256xi32>
    %138 = arith.cmpi slt, %0, %137 : vector<1x256xi32>
    %cst_91 = arith.constant 0.000000e+00 : f32
    %139 = vector.shape_cast %138 : vector<1x256xi1> to vector<1x256xi1>
    %140 = vector.broadcast %139 : vector<1x256xi1> to vector<8x256xi1>
    %141 = vector.broadcast %cst_91 : f32 to vector<8x256xf32>
    %142 = arith.select %140, %136, %141 : vector<8x256xi1>, vector<8x256xf32>
    %143 = tpu.concatenate %104, %105, %112, %119, %120, %127, %134, %135, %142 in 0 : vector<8x256xf32>, vector<8x256xf32>, vector<8x256xf32>, vector<8x256xf32>, vector<8x256xf32>, vector<8x256xf32>, vector<8x256xf32>, vector<8x256xf32>, vector<8x256xf32> -> vector<72x256xf32>
    %cst_92 = arith.constant dense<0.000000e+00> : vector<8x256xf32>
    %144 = tpu.matmul %96, %143, %cst_92 {dimension_numbers = #tpu.dot_dimension_numbers<[1], [0], [0], [1], [0, 0, 1, 1], [], []>} : vector<8x72xf32>, vector<72x256xf32>, vector<8x256xf32> -> vector<8x256xf32>
    %c0_93 = arith.constant 0 : index
    %c0_94 = arith.constant 0 : index
    %145 = vector.load %arg10[%c0_93, %c0_94] : memref<8x1xf32, #tpu.memory_space<vmem>>, vector<8x1xf32>
    %146 = vector.broadcast %145 : vector<8x1xf32> to vector<8x256xf32>
    %147 = arith.addf %144, %146 : vector<8x256xf32>
    %c1 = arith.constant 1 : index
    %c0_95 = arith.constant 0 : index
    %c0_96 = arith.constant 0 : index
    %148 = vector.load %arg23[%c1, %c0_95, %c0_96] : memref<4x8x72xf32, #tpu.memory_space<vmem>>, vector<1x8x72xf32>
    %149 = vector.shape_cast %148 : vector<1x8x72xf32> to vector<8x72xf32>
    %c0_97 = arith.constant 0 : index
    %c128_98 = arith.constant 128 : index
    %150 = vector.load %arg26[%c0_97, %c128_98] : memref<8x512xf32, #tpu.memory_space<vmem>>, vector<8x256xf32>
    tpu.vector_store %arg26[%c0_97, %c128_98], %147 {strides = array<i32>} : memref<8x512xf32, #tpu.memory_space<vmem>>, vector<8x256xf32>,
    %c0_99 = arith.constant 0 : index
    %c111_100 = arith.constant 111 : index
    %151 = vector.load %arg26[%c0_99, %c111_100] : memref<8x512xf32, #tpu.memory_space<vmem>>, vector<8x256xf32>
    %c1_i32_101 = arith.constant 1 : i32
    %152 = vector.broadcast %c1_i32_101 : i32 to vector<1x256xi32>
    %153 = arith.cmpi sge, %0, %152 : vector<1x256xi32>
    %cst_102 = arith.constant 0.000000e+00 : f32
    %154 = vector.shape_cast %153 : vector<1x256xi1> to vector<1x256xi1>
    %155 = vector.broadcast %154 : vector<1x256xi1> to vector<8x256xi1>
    %156 = vector.broadcast %cst_102 : f32 to vector<8x256xf32>
    %157 = arith.select %155, %151, %156 : vector<8x256xi1>, vector<8x256xf32>
    %c0_103 = arith.constant 0 : index
    %c112_104 = arith.constant 112 : index
    %158 = vector.load %arg26[%c0_103, %c112_104] : memref<8x512xf32, #tpu.memory_space<vmem>>, vector<8x256xf32>
    %c0_105 = arith.constant 0 : index
    %c113_106 = arith.constant 113 : index
    %159 = vector.load %arg26[%c0_105, %c113_106] : memref<8x512xf32, #tpu.memory_space<vmem>>, vector<8x256xf32>
    %c15_i32_107 = arith.constant 15 : i32
    %160 = vector.broadcast %c15_i32_107 : i32 to vector<1x256xi32>
    %161 = arith.cmpi slt, %0, %160 : vector<1x256xi32>
    %cst_108 = arith.constant 0.000000e+00 : f32
    %162 = vector.shape_cast %161 : vector<1x256xi1> to vector<1x256xi1>
    %163 = vector.broadcast %162 : vector<1x256xi1> to vector<8x256xi1>
    %164 = vector.broadcast %cst_108 : f32 to vector<8x256xf32>
    %165 = arith.select %163, %159, %164 : vector<8x256xi1>, vector<8x256xf32>
    %c0_109 = arith.constant 0 : index
    %c127_110 = arith.constant 127 : index
    %166 = vector.load %arg26[%c0_109, %c127_110] : memref<8x512xf32, #tpu.memory_space<vmem>>, vector<8x256xf32>
    %c1_i32_111 = arith.constant 1 : i32
    %167 = vector.broadcast %c1_i32_111 : i32 to vector<1x256xi32>
    %168 = arith.cmpi sge, %0, %167 : vector<1x256xi32>
    %cst_112 = arith.constant 0.000000e+00 : f32
    %169 = vector.shape_cast %168 : vector<1x256xi1> to vector<1x256xi1>
    %170 = vector.broadcast %169 : vector<1x256xi1> to vector<8x256xi1>
    %171 = vector.broadcast %cst_112 : f32 to vector<8x256xf32>
    %172 = arith.select %170, %166, %171 : vector<8x256xi1>, vector<8x256xf32>
    %c0_113 = arith.constant 0 : index
    %c128_114 = arith.constant 128 : index
    %173 = vector.load %arg26[%c0_113, %c128_114] : memref<8x512xf32, #tpu.memory_space<vmem>>, vector<8x256xf32>
    %c0_115 = arith.constant 0 : index
    %c129_116 = arith.constant 129 : index
    %174 = vector.load %arg26[%c0_115, %c129_116] : memref<8x512xf32, #tpu.memory_space<vmem>>, vector<8x256xf32>
    %c15_i32_117 = arith.constant 15 : i32
    %175 = vector.broadcast %c15_i32_117 : i32 to vector<1x256xi32>
    %176 = arith.cmpi slt, %0, %175 : vector<1x256xi32>
    %cst_118 = arith.constant 0.000000e+00 : f32
    %177 = vector.shape_cast %176 : vector<1x256xi1> to vector<1x256xi1>
    %178 = vector.broadcast %177 : vector<1x256xi1> to vector<8x256xi1>
    %179 = vector.broadcast %cst_118 : f32 to vector<8x256xf32>
    %180 = arith.select %178, %174, %179 : vector<8x256xi1>, vector<8x256xf32>
    %c0_119 = arith.constant 0 : index
    %c143_120 = arith.constant 143 : index
    %181 = vector.load %arg26[%c0_119, %c143_120] : memref<8x512xf32, #tpu.memory_space<vmem>>, vector<8x256xf32>
    %c1_i32_121 = arith.constant 1 : i32
    %182 = vector.broadcast %c1_i32_121 : i32 to vector<1x256xi32>
    %183 = arith.cmpi sge, %0, %182 : vector<1x256xi32>
    %cst_122 = arith.constant 0.000000e+00 : f32
    %184 = vector.shape_cast %183 : vector<1x256xi1> to vector<1x256xi1>
    %185 = vector.broadcast %184 : vector<1x256xi1> to vector<8x256xi1>
    %186 = vector.broadcast %cst_122 : f32 to vector<8x256xf32>
    %187 = arith.select %185, %181, %186 : vector<8x256xi1>, vector<8x256xf32>
    %c0_123 = arith.constant 0 : index
    %c144_124 = arith.constant 144 : index
    %188 = vector.load %arg26[%c0_123, %c144_124] : memref<8x512xf32, #tpu.memory_space<vmem>>, vector<8x256xf32>
    %c0_125 = arith.constant 0 : index
    %c145_126 = arith.constant 145 : index
    %189 = vector.load %arg26[%c0_125, %c145_126] : memref<8x512xf32, #tpu.memory_space<vmem>>, vector<8x256xf32>
    %c15_i32_127 = arith.constant 15 : i32
    %190 = vector.broadcast %c15_i32_127 : i32 to vector<1x256xi32>
    %191 = arith.cmpi slt, %0, %190 : vector<1x256xi32>
    %cst_128 = arith.constant 0.000000e+00 : f32
    %192 = vector.shape_cast %191 : vector<1x256xi1> to vector<1x256xi1>
    %193 = vector.broadcast %192 : vector<1x256xi1> to vector<8x256xi1>
    %194 = vector.broadcast %cst_128 : f32 to vector<8x256xf32>
    %195 = arith.select %193, %189, %194 : vector<8x256xi1>, vector<8x256xf32>
    %196 = tpu.concatenate %157, %158, %165, %172, %173, %180, %187, %188, %195 in 0 : vector<8x256xf32>, vector<8x256xf32>, vector<8x256xf32>, vector<8x256xf32>, vector<8x256xf32>, vector<8x256xf32>, vector<8x256xf32>, vector<8x256xf32>, vector<8x256xf32> -> vector<72x256xf32>
    %cst_129 = arith.constant dense<0.000000e+00> : vector<8x256xf32>
    %197 = tpu.matmul %149, %196, %cst_129 {dimension_numbers = #tpu.dot_dimension_numbers<[1], [0], [0], [1], [0, 0, 1, 1], [], []>} : vector<8x72xf32>, vector<72x256xf32>, vector<8x256xf32> -> vector<8x256xf32>
    %198 = arith.addf %62, %197 : vector<8x256xf32>
    %199 = vector.extract_strided_slice %11 {offsets = [16, 0], sizes = [8, 256], strides = [1, 1]} : vector<40x256xf32> to vector<8x256xf32>
    %c0_130 = arith.constant 0 : index
    %c0_131 = arith.constant 0 : index
    %200 = vector.load %arg11[%c0_130, %c0_131] : memref<8x40xf32, #tpu.memory_space<vmem>>, vector<8x40xf32>
    %c0_132 = arith.constant 0 : index
    %c128_133 = arith.constant 128 : index
    %201 = vector.load %arg26[%c0_132, %c128_133] : memref<8x512xf32, #tpu.memory_space<vmem>>, vector<8x256xf32>
    tpu.vector_store %arg26[%c0_132, %c128_133], %199 {strides = array<i32>} : memref<8x512xf32, #tpu.memory_space<vmem>>, vector<8x256xf32>,
    %c0_134 = arith.constant 0 : index
    %c126 = arith.constant 126 : index
    %202 = vector.load %arg26[%c0_134, %c126] : memref<8x512xf32, #tpu.memory_space<vmem>>, vector<8x256xf32>
    %c2_i32 = arith.constant 2 : i32
    %203 = vector.broadcast %c2_i32 : i32 to vector<1x256xi32>
    %204 = arith.cmpi sge, %0, %203 : vector<1x256xi32>
    %cst_135 = arith.constant 0.000000e+00 : f32
    %205 = vector.shape_cast %204 : vector<1x256xi1> to vector<1x256xi1>
    %206 = vector.broadcast %205 : vector<1x256xi1> to vector<8x256xi1>
    %207 = vector.broadcast %cst_135 : f32 to vector<8x256xf32>
    %208 = arith.select %206, %202, %207 : vector<8x256xi1>, vector<8x256xf32>
    %c0_136 = arith.constant 0 : index
    %c127_137 = arith.constant 127 : index
    %209 = vector.load %arg26[%c0_136, %c127_137] : memref<8x512xf32, #tpu.memory_space<vmem>>, vector<8x256xf32>
    %c1_i32_138 = arith.constant 1 : i32
    %210 = vector.broadcast %c1_i32_138 : i32 to vector<1x256xi32>
    %211 = arith.cmpi sge, %0, %210 : vector<1x256xi32>
    %cst_139 = arith.constant 0.000000e+00 : f32
    %212 = vector.shape_cast %211 : vector<1x256xi1> to vector<1x256xi1>
    %213 = vector.broadcast %212 : vector<1x256xi1> to vector<8x256xi1>
    %214 = vector.broadcast %cst_139 : f32 to vector<8x256xf32>
    %215 = arith.select %213, %209, %214 : vector<8x256xi1>, vector<8x256xf32>
    %c0_140 = arith.constant 0 : index
    %c128_141 = arith.constant 128 : index
    %216 = vector.load %arg26[%c0_140, %c128_141] : memref<8x512xf32, #tpu.memory_space<vmem>>, vector<8x256xf32>
    %c0_142 = arith.constant 0 : index
    %c129_143 = arith.constant 129 : index
    %217 = vector.load %arg26[%c0_142, %c129_143] : memref<8x512xf32, #tpu.memory_space<vmem>>, vector<8x256xf32>
    %c15_i32_144 = arith.constant 15 : i32
    %218 = vector.broadcast %c15_i32_144 : i32 to vector<1x256xi32>
    %219 = arith.cmpi slt, %0, %218 : vector<1x256xi32>
    %cst_145 = arith.constant 0.000000e+00 : f32
    %220 = vector.shape_cast %219 : vector<1x256xi1> to vector<1x256xi1>
    %221 = vector.broadcast %220 : vector<1x256xi1> to vector<8x256xi1>
    %222 = vector.broadcast %cst_145 : f32 to vector<8x256xf32>
    %223 = arith.select %221, %217, %222 : vector<8x256xi1>, vector<8x256xf32>
    %c0_146 = arith.constant 0 : index
    %c130 = arith.constant 130 : index
    %224 = vector.load %arg26[%c0_146, %c130] : memref<8x512xf32, #tpu.memory_space<vmem>>, vector<8x256xf32>
    %c14_i32 = arith.constant 14 : i32
    %225 = vector.broadcast %c14_i32 : i32 to vector<1x256xi32>
    %226 = arith.cmpi slt, %0, %225 : vector<1x256xi32>
    %cst_147 = arith.constant 0.000000e+00 : f32
    %227 = vector.shape_cast %226 : vector<1x256xi1> to vector<1x256xi1>
    %228 = vector.broadcast %227 : vector<1x256xi1> to vector<8x256xi1>
    %229 = vector.broadcast %cst_147 : f32 to vector<8x256xf32>
    %230 = arith.select %228, %224, %229 : vector<8x256xi1>, vector<8x256xf32>
    %231 = tpu.concatenate %208, %215, %216, %223, %230 in 0 : vector<8x256xf32>, vector<8x256xf32>, vector<8x256xf32>, vector<8x256xf32>, vector<8x256xf32> -> vector<40x256xf32>
    %cst_148 = arith.constant dense<0.000000e+00> : vector<8x256xf32>
    %232 = tpu.matmul %200, %231, %cst_148 {dimension_numbers = #tpu.dot_dimension_numbers<[1], [0], [0], [1], [0, 0, 1, 1], [], []>} : vector<8x40xf32>, vector<40x256xf32>, vector<8x256xf32> -> vector<8x256xf32>
    %c0_149 = arith.constant 0 : index
    %c0_150 = arith.constant 0 : index
    %233 = vector.load %arg12[%c0_149, %c0_150] : memref<8x1xf32, #tpu.memory_space<vmem>>, vector<8x1xf32>
    %234 = vector.broadcast %233 : vector<8x1xf32> to vector<8x256xf32>
    %235 = arith.addf %232, %234 : vector<8x256xf32>
    %c0_151 = arith.constant 0 : index
    %c0_152 = arith.constant 0 : index
    %236 = vector.load %arg13[%c0_151, %c0_152] : memref<8x40xf32, #tpu.memory_space<vmem>>, vector<8x40xf32>
    %c0_153 = arith.constant 0 : index
    %c128_154 = arith.constant 128 : index
    %237 = vector.load %arg26[%c0_153, %c128_154] : memref<8x512xf32, #tpu.memory_space<vmem>>, vector<8x256xf32>
    tpu.vector_store %arg26[%c0_153, %c128_154], %235 {strides = array<i32>} : memref<8x512xf32, #tpu.memory_space<vmem>>, vector<8x256xf32>,
    %c0_155 = arith.constant 0 : index
    %c96 = arith.constant 96 : index
    %238 = vector.load %arg26[%c0_155, %c96] : memref<8x512xf32, #tpu.memory_space<vmem>>, vector<8x256xf32>
    %c0_156 = arith.constant 0 : index
    %c112_157 = arith.constant 112 : index
    %239 = vector.load %arg26[%c0_156, %c112_157] : memref<8x512xf32, #tpu.memory_space<vmem>>, vector<8x256xf32>
    %c0_158 = arith.constant 0 : index
    %c128_159 = arith.constant 128 : index
    %240 = vector.load %arg26[%c0_158, %c128_159] : memref<8x512xf32, #tpu.memory_space<vmem>>, vector<8x256xf32>
    %c0_160 = arith.constant 0 : index
    %c144_161 = arith.constant 144 : index
    %241 = vector.load %arg26[%c0_160, %c144_161] : memref<8x512xf32, #tpu.memory_space<vmem>>, vector<8x256xf32>
    %c0_162 = arith.constant 0 : index
    %c160 = arith.constant 160 : index
    %242 = vector.load %arg26[%c0_162, %c160] : memref<8x512xf32, #tpu.memory_space<vmem>>, vector<8x256xf32>
    %243 = tpu.concatenate %238, %239, %240, %241, %242 in 0 : vector<8x256xf32>, vector<8x256xf32>, vector<8x256xf32>, vector<8x256xf32>, vector<8x256xf32> -> vector<40x256xf32>
    %cst_163 = arith.constant dense<0.000000e+00> : vector<8x256xf32>
    %244 = tpu.matmul %236, %243, %cst_163 {dimension_numbers = #tpu.dot_dimension_numbers<[1], [0], [0], [1], [0, 0, 1, 1], [], []>} : vector<8x40xf32>, vector<40x256xf32>, vector<8x256xf32> -> vector<8x256xf32>
    %c0_164 = arith.constant 0 : index
    %c0_165 = arith.constant 0 : index
    %245 = vector.load %arg14[%c0_164, %c0_165] : memref<8x1xf32, #tpu.memory_space<vmem>>, vector<8x1xf32>
    %246 = vector.broadcast %245 : vector<8x1xf32> to vector<8x256xf32>
    %247 = arith.addf %244, %246 : vector<8x256xf32>
    %c0_166 = arith.constant 0 : index
    %c0_167 = arith.constant 0 : index
    %248 = vector.load %arg15[%c0_166, %c0_167] : memref<8x72xf32, #tpu.memory_space<vmem>>, vector<8x72xf32>
    %c0_168 = arith.constant 0 : index
    %c128_169 = arith.constant 128 : index
    %249 = vector.load %arg26[%c0_168, %c128_169] : memref<8x512xf32, #tpu.memory_space<vmem>>, vector<8x256xf32>
    tpu.vector_store %arg26[%c0_168, %c128_169], %247 {strides = array<i32>} : memref<8x512xf32, #tpu.memory_space<vmem>>, vector<8x256xf32>,
    %c0_170 = arith.constant 0 : index
    %c43 = arith.constant 43 : index
    %250 = vector.load %arg26[%c0_170, %c43] : memref<8x512xf32, #tpu.memory_space<vmem>>, vector<8x256xf32>
    %c5_i32 = arith.constant 5 : i32
    %251 = vector.broadcast %c5_i32 : i32 to vector<1x256xi32>
    %252 = arith.cmpi sge, %0, %251 : vector<1x256xi32>
    %cst_171 = arith.constant 0.000000e+00 : f32
    %253 = vector.shape_cast %252 : vector<1x256xi1> to vector<1x256xi1>
    %254 = vector.broadcast %253 : vector<1x256xi1> to vector<8x256xi1>
    %255 = vector.broadcast %cst_171 : f32 to vector<8x256xf32>
    %256 = arith.select %254, %250, %255 : vector<8x256xi1>, vector<8x256xf32>
    %c0_172 = arith.constant 0 : index
    %c48 = arith.constant 48 : index
    %257 = vector.load %arg26[%c0_172, %c48] : memref<8x512xf32, #tpu.memory_space<vmem>>, vector<8x256xf32>
    %c0_173 = arith.constant 0 : index
    %c53 = arith.constant 53 : index
    %258 = vector.load %arg26[%c0_173, %c53] : memref<8x512xf32, #tpu.memory_space<vmem>>, vector<8x256xf32>
    %c11_i32 = arith.constant 11 : i32
    %259 = vector.broadcast %c11_i32 : i32 to vector<1x256xi32>
    %260 = arith.cmpi slt, %0, %259 : vector<1x256xi32>
    %cst_174 = arith.constant 0.000000e+00 : f32
    %261 = vector.shape_cast %260 : vector<1x256xi1> to vector<1x256xi1>
    %262 = vector.broadcast %261 : vector<1x256xi1> to vector<8x256xi1>
    %263 = vector.broadcast %cst_174 : f32 to vector<8x256xf32>
    %264 = arith.select %262, %258, %263 : vector<8x256xi1>, vector<8x256xf32>
    %c0_175 = arith.constant 0 : index
    %c123 = arith.constant 123 : index
    %265 = vector.load %arg26[%c0_175, %c123] : memref<8x512xf32, #tpu.memory_space<vmem>>, vector<8x256xf32>
    %c5_i32_176 = arith.constant 5 : i32
    %266 = vector.broadcast %c5_i32_176 : i32 to vector<1x256xi32>
    %267 = arith.cmpi sge, %0, %266 : vector<1x256xi32>
    %cst_177 = arith.constant 0.000000e+00 : f32
    %268 = vector.shape_cast %267 : vector<1x256xi1> to vector<1x256xi1>
    %269 = vector.broadcast %268 : vector<1x256xi1> to vector<8x256xi1>
    %270 = vector.broadcast %cst_177 : f32 to vector<8x256xf32>
    %271 = arith.select %269, %265, %270 : vector<8x256xi1>, vector<8x256xf32>
    %c0_178 = arith.constant 0 : index
    %c128_179 = arith.constant 128 : index
    %272 = vector.load %arg26[%c0_178, %c128_179] : memref<8x512xf32, #tpu.memory_space<vmem>>, vector<8x256xf32>
    %c0_180 = arith.constant 0 : index
    %c133 = arith.constant 133 : index
    %273 = vector.load %arg26[%c0_180, %c133] : memref<8x512xf32, #tpu.memory_space<vmem>>, vector<8x256xf32>
    %c11_i32_181 = arith.constant 11 : i32
    %274 = vector.broadcast %c11_i32_181 : i32 to vector<1x256xi32>
    %275 = arith.cmpi slt, %0, %274 : vector<1x256xi32>
    %cst_182 = arith.constant 0.000000e+00 : f32
    %276 = vector.shape_cast %275 : vector<1x256xi1> to vector<1x256xi1>
    %277 = vector.broadcast %276 : vector<1x256xi1> to vector<8x256xi1>
    %278 = vector.broadcast %cst_182 : f32 to vector<8x256xf32>
    %279 = arith.select %277, %273, %278 : vector<8x256xi1>, vector<8x256xf32>
    %c0_183 = arith.constant 0 : index
    %c203 = arith.constant 203 : index
    %280 = vector.load %arg26[%c0_183, %c203] : memref<8x512xf32, #tpu.memory_space<vmem>>, vector<8x256xf32>
    %c5_i32_184 = arith.constant 5 : i32
    %281 = vector.broadcast %c5_i32_184 : i32 to vector<1x256xi32>
    %282 = arith.cmpi sge, %0, %281 : vector<1x256xi32>
    %cst_185 = arith.constant 0.000000e+00 : f32
    %283 = vector.shape_cast %282 : vector<1x256xi1> to vector<1x256xi1>
    %284 = vector.broadcast %283 : vector<1x256xi1> to vector<8x256xi1>
    %285 = vector.broadcast %cst_185 : f32 to vector<8x256xf32>
    %286 = arith.select %284, %280, %285 : vector<8x256xi1>, vector<8x256xf32>
    %c0_186 = arith.constant 0 : index
    %c208 = arith.constant 208 : index
    %287 = vector.load %arg26[%c0_186, %c208] : memref<8x512xf32, #tpu.memory_space<vmem>>, vector<8x256xf32>
    %c0_187 = arith.constant 0 : index
    %c213 = arith.constant 213 : index
    %288 = vector.load %arg26[%c0_187, %c213] : memref<8x512xf32, #tpu.memory_space<vmem>>, vector<8x256xf32>
    %c11_i32_188 = arith.constant 11 : i32
    %289 = vector.broadcast %c11_i32_188 : i32 to vector<1x256xi32>
    %290 = arith.cmpi slt, %0, %289 : vector<1x256xi32>
    %cst_189 = arith.constant 0.000000e+00 : f32
    %291 = vector.shape_cast %290 : vector<1x256xi1> to vector<1x256xi1>
    %292 = vector.broadcast %291 : vector<1x256xi1> to vector<8x256xi1>
    %293 = vector.broadcast %cst_189 : f32 to vector<8x256xf32>
    %294 = arith.select %292, %288, %293 : vector<8x256xi1>, vector<8x256xf32>
    %295 = tpu.concatenate %256, %257, %264, %271, %272, %279, %286, %287, %294 in 0 : vector<8x256xf32>, vector<8x256xf32>, vector<8x256xf32>, vector<8x256xf32>, vector<8x256xf32>, vector<8x256xf32>, vector<8x256xf32>, vector<8x256xf32>, vector<8x256xf32> -> vector<72x256xf32>
    %cst_190 = arith.constant dense<0.000000e+00> : vector<8x256xf32>
    %296 = tpu.matmul %248, %295, %cst_190 {dimension_numbers = #tpu.dot_dimension_numbers<[1], [0], [0], [1], [0, 0, 1, 1], [], []>} : vector<8x72xf32>, vector<72x256xf32>, vector<8x256xf32> -> vector<8x256xf32>
    %c0_191 = arith.constant 0 : index
    %c0_192 = arith.constant 0 : index
    %297 = vector.load %arg16[%c0_191, %c0_192] : memref<8x1xf32, #tpu.memory_space<vmem>>, vector<8x1xf32>
    %298 = vector.broadcast %297 : vector<8x1xf32> to vector<8x256xf32>
    %299 = arith.addf %296, %298 : vector<8x256xf32>
    %c2 = arith.constant 2 : index
    %c0_193 = arith.constant 0 : index
    %c0_194 = arith.constant 0 : index
    %300 = vector.load %arg23[%c2, %c0_193, %c0_194] : memref<4x8x72xf32, #tpu.memory_space<vmem>>, vector<1x8x72xf32>
    %301 = vector.shape_cast %300 : vector<1x8x72xf32> to vector<8x72xf32>
    %c0_195 = arith.constant 0 : index
    %c128_196 = arith.constant 128 : index
    %302 = vector.load %arg26[%c0_195, %c128_196] : memref<8x512xf32, #tpu.memory_space<vmem>>, vector<8x256xf32>
    tpu.vector_store %arg26[%c0_195, %c128_196], %299 {strides = array<i32>} : memref<8x512xf32, #tpu.memory_space<vmem>>, vector<8x256xf32>,
    %c0_197 = arith.constant 0 : index
    %c111_198 = arith.constant 111 : index
    %303 = vector.load %arg26[%c0_197, %c111_198] : memref<8x512xf32, #tpu.memory_space<vmem>>, vector<8x256xf32>
    %c1_i32_199 = arith.constant 1 : i32
    %304 = vector.broadcast %c1_i32_199 : i32 to vector<1x256xi32>
    %305 = arith.cmpi sge, %0, %304 : vector<1x256xi32>
    %cst_200 = arith.constant 0.000000e+00 : f32
    %306 = vector.shape_cast %305 : vector<1x256xi1> to vector<1x256xi1>
    %307 = vector.broadcast %306 : vector<1x256xi1> to vector<8x256xi1>
    %308 = vector.broadcast %cst_200 : f32 to vector<8x256xf32>
    %309 = arith.select %307, %303, %308 : vector<8x256xi1>, vector<8x256xf32>
    %c0_201 = arith.constant 0 : index
    %c112_202 = arith.constant 112 : index
    %310 = vector.load %arg26[%c0_201, %c112_202] : memref<8x512xf32, #tpu.memory_space<vmem>>, vector<8x256xf32>
    %c0_203 = arith.constant 0 : index
    %c113_204 = arith.constant 113 : index
    %311 = vector.load %arg26[%c0_203, %c113_204] : memref<8x512xf32, #tpu.memory_space<vmem>>, vector<8x256xf32>
    %c15_i32_205 = arith.constant 15 : i32
    %312 = vector.broadcast %c15_i32_205 : i32 to vector<1x256xi32>
    %313 = arith.cmpi slt, %0, %312 : vector<1x256xi32>
    %cst_206 = arith.constant 0.000000e+00 : f32
    %314 = vector.shape_cast %313 : vector<1x256xi1> to vector<1x256xi1>
    %315 = vector.broadcast %314 : vector<1x256xi1> to vector<8x256xi1>
    %316 = vector.broadcast %cst_206 : f32 to vector<8x256xf32>
    %317 = arith.select %315, %311, %316 : vector<8x256xi1>, vector<8x256xf32>
    %c0_207 = arith.constant 0 : index
    %c127_208 = arith.constant 127 : index
    %318 = vector.load %arg26[%c0_207, %c127_208] : memref<8x512xf32, #tpu.memory_space<vmem>>, vector<8x256xf32>
    %c1_i32_209 = arith.constant 1 : i32
    %319 = vector.broadcast %c1_i32_209 : i32 to vector<1x256xi32>
    %320 = arith.cmpi sge, %0, %319 : vector<1x256xi32>
    %cst_210 = arith.constant 0.000000e+00 : f32
    %321 = vector.shape_cast %320 : vector<1x256xi1> to vector<1x256xi1>
    %322 = vector.broadcast %321 : vector<1x256xi1> to vector<8x256xi1>
    %323 = vector.broadcast %cst_210 : f32 to vector<8x256xf32>
    %324 = arith.select %322, %318, %323 : vector<8x256xi1>, vector<8x256xf32>
    %c0_211 = arith.constant 0 : index
    %c128_212 = arith.constant 128 : index
    %325 = vector.load %arg26[%c0_211, %c128_212] : memref<8x512xf32, #tpu.memory_space<vmem>>, vector<8x256xf32>
    %c0_213 = arith.constant 0 : index
    %c129_214 = arith.constant 129 : index
    %326 = vector.load %arg26[%c0_213, %c129_214] : memref<8x512xf32, #tpu.memory_space<vmem>>, vector<8x256xf32>
    %c15_i32_215 = arith.constant 15 : i32
    %327 = vector.broadcast %c15_i32_215 : i32 to vector<1x256xi32>
    %328 = arith.cmpi slt, %0, %327 : vector<1x256xi32>
    %cst_216 = arith.constant 0.000000e+00 : f32
    %329 = vector.shape_cast %328 : vector<1x256xi1> to vector<1x256xi1>
    %330 = vector.broadcast %329 : vector<1x256xi1> to vector<8x256xi1>
    %331 = vector.broadcast %cst_216 : f32 to vector<8x256xf32>
    %332 = arith.select %330, %326, %331 : vector<8x256xi1>, vector<8x256xf32>
    %c0_217 = arith.constant 0 : index
    %c143_218 = arith.constant 143 : index
    %333 = vector.load %arg26[%c0_217, %c143_218] : memref<8x512xf32, #tpu.memory_space<vmem>>, vector<8x256xf32>
    %c1_i32_219 = arith.constant 1 : i32
    %334 = vector.broadcast %c1_i32_219 : i32 to vector<1x256xi32>
    %335 = arith.cmpi sge, %0, %334 : vector<1x256xi32>
    %cst_220 = arith.constant 0.000000e+00 : f32
    %336 = vector.shape_cast %335 : vector<1x256xi1> to vector<1x256xi1>
    %337 = vector.broadcast %336 : vector<1x256xi1> to vector<8x256xi1>
    %338 = vector.broadcast %cst_220 : f32 to vector<8x256xf32>
    %339 = arith.select %337, %333, %338 : vector<8x256xi1>, vector<8x256xf32>
    %c0_221 = arith.constant 0 : index
    %c144_222 = arith.constant 144 : index
    %340 = vector.load %arg26[%c0_221, %c144_222] : memref<8x512xf32, #tpu.memory_space<vmem>>, vector<8x256xf32>
    %c0_223 = arith.constant 0 : index
    %c145_224 = arith.constant 145 : index
    %341 = vector.load %arg26[%c0_223, %c145_224] : memref<8x512xf32, #tpu.memory_space<vmem>>, vector<8x256xf32>
    %c15_i32_225 = arith.constant 15 : i32
    %342 = vector.broadcast %c15_i32_225 : i32 to vector<1x256xi32>
    %343 = arith.cmpi slt, %0, %342 : vector<1x256xi32>
    %cst_226 = arith.constant 0.000000e+00 : f32
    %344 = vector.shape_cast %343 : vector<1x256xi1> to vector<1x256xi1>
    %345 = vector.broadcast %344 : vector<1x256xi1> to vector<8x256xi1>
    %346 = vector.broadcast %cst_226 : f32 to vector<8x256xf32>
    %347 = arith.select %345, %341, %346 : vector<8x256xi1>, vector<8x256xf32>
    %348 = tpu.concatenate %309, %310, %317, %324, %325, %332, %339, %340, %347 in 0 : vector<8x256xf32>, vector<8x256xf32>, vector<8x256xf32>, vector<8x256xf32>, vector<8x256xf32>, vector<8x256xf32>, vector<8x256xf32>, vector<8x256xf32>, vector<8x256xf32> -> vector<72x256xf32>
    %cst_227 = arith.constant dense<0.000000e+00> : vector<8x256xf32>
    %349 = tpu.matmul %301, %348, %cst_227 {dimension_numbers = #tpu.dot_dimension_numbers<[1], [0], [0], [1], [0, 0, 1, 1], [], []>} : vector<8x72xf32>, vector<72x256xf32>, vector<8x256xf32> -> vector<8x256xf32>
    %350 = arith.addf %198, %349 : vector<8x256xf32>
    %351 = vector.extract_strided_slice %11 {offsets = [24, 0], sizes = [8, 256], strides = [1, 1]} : vector<40x256xf32> to vector<8x256xf32>
    %c0_228 = arith.constant 0 : index
    %c0_229 = arith.constant 0 : index
    %352 = vector.load %arg17[%c0_228, %c0_229] : memref<8x56xf32, #tpu.memory_space<vmem>>, vector<8x56xf32>
    %c0_230 = arith.constant 0 : index
    %c128_231 = arith.constant 128 : index
    %353 = vector.load %arg26[%c0_230, %c128_231] : memref<8x512xf32, #tpu.memory_space<vmem>>, vector<8x256xf32>
    tpu.vector_store %arg26[%c0_230, %c128_231], %351 {strides = array<i32>} : memref<8x512xf32, #tpu.memory_space<vmem>>, vector<8x256xf32>,
    %c0_232 = arith.constant 0 : index
    %c125_233 = arith.constant 125 : index
    %354 = vector.load %arg26[%c0_232, %c125_233] : memref<8x512xf32, #tpu.memory_space<vmem>>, vector<8x256xf32>
    %c3_i32_234 = arith.constant 3 : i32
    %355 = vector.broadcast %c3_i32_234 : i32 to vector<1x256xi32>
    %356 = arith.cmpi sge, %0, %355 : vector<1x256xi32>
    %cst_235 = arith.constant 0.000000e+00 : f32
    %357 = vector.shape_cast %356 : vector<1x256xi1> to vector<1x256xi1>
    %358 = vector.broadcast %357 : vector<1x256xi1> to vector<8x256xi1>
    %359 = vector.broadcast %cst_235 : f32 to vector<8x256xf32>
    %360 = arith.select %358, %354, %359 : vector<8x256xi1>, vector<8x256xf32>
    %c0_236 = arith.constant 0 : index
    %c126_237 = arith.constant 126 : index
    %361 = vector.load %arg26[%c0_236, %c126_237] : memref<8x512xf32, #tpu.memory_space<vmem>>, vector<8x256xf32>
    %c2_i32_238 = arith.constant 2 : i32
    %362 = vector.broadcast %c2_i32_238 : i32 to vector<1x256xi32>
    %363 = arith.cmpi sge, %0, %362 : vector<1x256xi32>
    %cst_239 = arith.constant 0.000000e+00 : f32
    %364 = vector.shape_cast %363 : vector<1x256xi1> to vector<1x256xi1>
    %365 = vector.broadcast %364 : vector<1x256xi1> to vector<8x256xi1>
    %366 = vector.broadcast %cst_239 : f32 to vector<8x256xf32>
    %367 = arith.select %365, %361, %366 : vector<8x256xi1>, vector<8x256xf32>
    %c0_240 = arith.constant 0 : index
    %c127_241 = arith.constant 127 : index
    %368 = vector.load %arg26[%c0_240, %c127_241] : memref<8x512xf32, #tpu.memory_space<vmem>>, vector<8x256xf32>
    %c1_i32_242 = arith.constant 1 : i32
    %369 = vector.broadcast %c1_i32_242 : i32 to vector<1x256xi32>
    %370 = arith.cmpi sge, %0, %369 : vector<1x256xi32>
    %cst_243 = arith.constant 0.000000e+00 : f32
    %371 = vector.shape_cast %370 : vector<1x256xi1> to vector<1x256xi1>
    %372 = vector.broadcast %371 : vector<1x256xi1> to vector<8x256xi1>
    %373 = vector.broadcast %cst_243 : f32 to vector<8x256xf32>
    %374 = arith.select %372, %368, %373 : vector<8x256xi1>, vector<8x256xf32>
    %c0_244 = arith.constant 0 : index
    %c128_245 = arith.constant 128 : index
    %375 = vector.load %arg26[%c0_244, %c128_245] : memref<8x512xf32, #tpu.memory_space<vmem>>, vector<8x256xf32>
    %c0_246 = arith.constant 0 : index
    %c129_247 = arith.constant 129 : index
    %376 = vector.load %arg26[%c0_246, %c129_247] : memref<8x512xf32, #tpu.memory_space<vmem>>, vector<8x256xf32>
    %c15_i32_248 = arith.constant 15 : i32
    %377 = vector.broadcast %c15_i32_248 : i32 to vector<1x256xi32>
    %378 = arith.cmpi slt, %0, %377 : vector<1x256xi32>
    %cst_249 = arith.constant 0.000000e+00 : f32
    %379 = vector.shape_cast %378 : vector<1x256xi1> to vector<1x256xi1>
    %380 = vector.broadcast %379 : vector<1x256xi1> to vector<8x256xi1>
    %381 = vector.broadcast %cst_249 : f32 to vector<8x256xf32>
    %382 = arith.select %380, %376, %381 : vector<8x256xi1>, vector<8x256xf32>
    %c0_250 = arith.constant 0 : index
    %c130_251 = arith.constant 130 : index
    %383 = vector.load %arg26[%c0_250, %c130_251] : memref<8x512xf32, #tpu.memory_space<vmem>>, vector<8x256xf32>
    %c14_i32_252 = arith.constant 14 : i32
    %384 = vector.broadcast %c14_i32_252 : i32 to vector<1x256xi32>
    %385 = arith.cmpi slt, %0, %384 : vector<1x256xi32>
    %cst_253 = arith.constant 0.000000e+00 : f32
    %386 = vector.shape_cast %385 : vector<1x256xi1> to vector<1x256xi1>
    %387 = vector.broadcast %386 : vector<1x256xi1> to vector<8x256xi1>
    %388 = vector.broadcast %cst_253 : f32 to vector<8x256xf32>
    %389 = arith.select %387, %383, %388 : vector<8x256xi1>, vector<8x256xf32>
    %c0_254 = arith.constant 0 : index
    %c131_255 = arith.constant 131 : index
    %390 = vector.load %arg26[%c0_254, %c131_255] : memref<8x512xf32, #tpu.memory_space<vmem>>, vector<8x256xf32>
    %c13_i32_256 = arith.constant 13 : i32
    %391 = vector.broadcast %c13_i32_256 : i32 to vector<1x256xi32>
    %392 = arith.cmpi slt, %0, %391 : vector<1x256xi32>
    %cst_257 = arith.constant 0.000000e+00 : f32
    %393 = vector.shape_cast %392 : vector<1x256xi1> to vector<1x256xi1>
    %394 = vector.broadcast %393 : vector<1x256xi1> to vector<8x256xi1>
    %395 = vector.broadcast %cst_257 : f32 to vector<8x256xf32>
    %396 = arith.select %394, %390, %395 : vector<8x256xi1>, vector<8x256xf32>
    %397 = tpu.concatenate %360, %367, %374, %375, %382, %389, %396 in 0 : vector<8x256xf32>, vector<8x256xf32>, vector<8x256xf32>, vector<8x256xf32>, vector<8x256xf32>, vector<8x256xf32>, vector<8x256xf32> -> vector<56x256xf32>
    %cst_258 = arith.constant dense<0.000000e+00> : vector<8x256xf32>
    %398 = tpu.matmul %352, %397, %cst_258 {dimension_numbers = #tpu.dot_dimension_numbers<[1], [0], [0], [1], [0, 0, 1, 1], [], []>} : vector<8x56xf32>, vector<56x256xf32>, vector<8x256xf32> -> vector<8x256xf32>
    %c0_259 = arith.constant 0 : index
    %c0_260 = arith.constant 0 : index
    %399 = vector.load %arg18[%c0_259, %c0_260] : memref<8x1xf32, #tpu.memory_space<vmem>>, vector<8x1xf32>
    %400 = vector.broadcast %399 : vector<8x1xf32> to vector<8x256xf32>
    %401 = arith.addf %398, %400 : vector<8x256xf32>
    %c0_261 = arith.constant 0 : index
    %c0_262 = arith.constant 0 : index
    %402 = vector.load %arg19[%c0_261, %c0_262] : memref<8x56xf32, #tpu.memory_space<vmem>>, vector<8x56xf32>
    %c0_263 = arith.constant 0 : index
    %c128_264 = arith.constant 128 : index
    %403 = vector.load %arg26[%c0_263, %c128_264] : memref<8x512xf32, #tpu.memory_space<vmem>>, vector<8x256xf32>
    tpu.vector_store %arg26[%c0_263, %c128_264], %401 {strides = array<i32>} : memref<8x512xf32, #tpu.memory_space<vmem>>, vector<8x256xf32>,
    %c0_265 = arith.constant 0 : index
    %c80_266 = arith.constant 80 : index
    %404 = vector.load %arg26[%c0_265, %c80_266] : memref<8x512xf32, #tpu.memory_space<vmem>>, vector<8x256xf32>
    %c0_267 = arith.constant 0 : index
    %c96_268 = arith.constant 96 : index
    %405 = vector.load %arg26[%c0_267, %c96_268] : memref<8x512xf32, #tpu.memory_space<vmem>>, vector<8x256xf32>
    %c0_269 = arith.constant 0 : index
    %c112_270 = arith.constant 112 : index
    %406 = vector.load %arg26[%c0_269, %c112_270] : memref<8x512xf32, #tpu.memory_space<vmem>>, vector<8x256xf32>
    %c0_271 = arith.constant 0 : index
    %c128_272 = arith.constant 128 : index
    %407 = vector.load %arg26[%c0_271, %c128_272] : memref<8x512xf32, #tpu.memory_space<vmem>>, vector<8x256xf32>
    %c0_273 = arith.constant 0 : index
    %c144_274 = arith.constant 144 : index
    %408 = vector.load %arg26[%c0_273, %c144_274] : memref<8x512xf32, #tpu.memory_space<vmem>>, vector<8x256xf32>
    %c0_275 = arith.constant 0 : index
    %c160_276 = arith.constant 160 : index
    %409 = vector.load %arg26[%c0_275, %c160_276] : memref<8x512xf32, #tpu.memory_space<vmem>>, vector<8x256xf32>
    %c0_277 = arith.constant 0 : index
    %c176_278 = arith.constant 176 : index
    %410 = vector.load %arg26[%c0_277, %c176_278] : memref<8x512xf32, #tpu.memory_space<vmem>>, vector<8x256xf32>
    %411 = tpu.concatenate %404, %405, %406, %407, %408, %409, %410 in 0 : vector<8x256xf32>, vector<8x256xf32>, vector<8x256xf32>, vector<8x256xf32>, vector<8x256xf32>, vector<8x256xf32>, vector<8x256xf32> -> vector<56x256xf32>
    %cst_279 = arith.constant dense<0.000000e+00> : vector<8x256xf32>
    %412 = tpu.matmul %402, %411, %cst_279 {dimension_numbers = #tpu.dot_dimension_numbers<[1], [0], [0], [1], [0, 0, 1, 1], [], []>} : vector<8x56xf32>, vector<56x256xf32>, vector<8x256xf32> -> vector<8x256xf32>
    %c0_280 = arith.constant 0 : index
    %c0_281 = arith.constant 0 : index
    %413 = vector.load %arg20[%c0_280, %c0_281] : memref<8x1xf32, #tpu.memory_space<vmem>>, vector<8x1xf32>
    %414 = vector.broadcast %413 : vector<8x1xf32> to vector<8x256xf32>
    %415 = arith.addf %412, %414 : vector<8x256xf32>
    %c0_282 = arith.constant 0 : index
    %c0_283 = arith.constant 0 : index
    %416 = vector.load %arg21[%c0_282, %c0_283] : memref<8x72xf32, #tpu.memory_space<vmem>>, vector<8x72xf32>
    %c0_284 = arith.constant 0 : index
    %c128_285 = arith.constant 128 : index
    %417 = vector.load %arg26[%c0_284, %c128_285] : memref<8x512xf32, #tpu.memory_space<vmem>>, vector<8x256xf32>
    tpu.vector_store %arg26[%c0_284, %c128_285], %415 {strides = array<i32>} : memref<8x512xf32, #tpu.memory_space<vmem>>, vector<8x256xf32>,
    %c0_286 = arith.constant 0 : index
    %c9 = arith.constant 9 : index
    %418 = vector.load %arg26[%c0_286, %c9] : memref<8x512xf32, #tpu.memory_space<vmem>>, vector<8x256xf32>
    %c7_i32 = arith.constant 7 : i32
    %419 = vector.broadcast %c7_i32 : i32 to vector<1x256xi32>
    %420 = arith.cmpi sge, %0, %419 : vector<1x256xi32>
    %cst_287 = arith.constant 0.000000e+00 : f32
    %421 = vector.shape_cast %420 : vector<1x256xi1> to vector<1x256xi1>
    %422 = vector.broadcast %421 : vector<1x256xi1> to vector<8x256xi1>
    %423 = vector.broadcast %cst_287 : f32 to vector<8x256xf32>
    %424 = arith.select %422, %418, %423 : vector<8x256xi1>, vector<8x256xf32>
    %c0_288 = arith.constant 0 : index
    %c16 = arith.constant 16 : index
    %425 = vector.load %arg26[%c0_288, %c16] : memref<8x512xf32, #tpu.memory_space<vmem>>, vector<8x256xf32>
    %c0_289 = arith.constant 0 : index
    %c23 = arith.constant 23 : index
    %426 = vector.load %arg26[%c0_289, %c23] : memref<8x512xf32, #tpu.memory_space<vmem>>, vector<8x256xf32>
    %c9_i32 = arith.constant 9 : i32
    %427 = vector.broadcast %c9_i32 : i32 to vector<1x256xi32>
    %428 = arith.cmpi slt, %0, %427 : vector<1x256xi32>
    %cst_290 = arith.constant 0.000000e+00 : f32
    %429 = vector.shape_cast %428 : vector<1x256xi1> to vector<1x256xi1>
    %430 = vector.broadcast %429 : vector<1x256xi1> to vector<8x256xi1>
    %431 = vector.broadcast %cst_290 : f32 to vector<8x256xf32>
    %432 = arith.select %430, %426, %431 : vector<8x256xi1>, vector<8x256xf32>
    %c0_291 = arith.constant 0 : index
    %c121 = arith.constant 121 : index
    %433 = vector.load %arg26[%c0_291, %c121] : memref<8x512xf32, #tpu.memory_space<vmem>>, vector<8x256xf32>
    %c7_i32_292 = arith.constant 7 : i32
    %434 = vector.broadcast %c7_i32_292 : i32 to vector<1x256xi32>
    %435 = arith.cmpi sge, %0, %434 : vector<1x256xi32>
    %cst_293 = arith.constant 0.000000e+00 : f32
    %436 = vector.shape_cast %435 : vector<1x256xi1> to vector<1x256xi1>
    %437 = vector.broadcast %436 : vector<1x256xi1> to vector<8x256xi1>
    %438 = vector.broadcast %cst_293 : f32 to vector<8x256xf32>
    %439 = arith.select %437, %433, %438 : vector<8x256xi1>, vector<8x256xf32>
    %c0_294 = arith.constant 0 : index
    %c128_295 = arith.constant 128 : index
    %440 = vector.load %arg26[%c0_294, %c128_295] : memref<8x512xf32, #tpu.memory_space<vmem>>, vector<8x256xf32>
    %c0_296 = arith.constant 0 : index
    %c135 = arith.constant 135 : index
    %441 = vector.load %arg26[%c0_296, %c135] : memref<8x512xf32, #tpu.memory_space<vmem>>, vector<8x256xf32>
    %c9_i32_297 = arith.constant 9 : i32
    %442 = vector.broadcast %c9_i32_297 : i32 to vector<1x256xi32>
    %443 = arith.cmpi slt, %0, %442 : vector<1x256xi32>
    %cst_298 = arith.constant 0.000000e+00 : f32
    %444 = vector.shape_cast %443 : vector<1x256xi1> to vector<1x256xi1>
    %445 = vector.broadcast %444 : vector<1x256xi1> to vector<8x256xi1>
    %446 = vector.broadcast %cst_298 : f32 to vector<8x256xf32>
    %447 = arith.select %445, %441, %446 : vector<8x256xi1>, vector<8x256xf32>
    %c0_299 = arith.constant 0 : index
    %c233 = arith.constant 233 : index
    %448 = vector.load %arg26[%c0_299, %c233] : memref<8x512xf32, #tpu.memory_space<vmem>>, vector<8x256xf32>
    %c7_i32_300 = arith.constant 7 : i32
    %449 = vector.broadcast %c7_i32_300 : i32 to vector<1x256xi32>
    %450 = arith.cmpi sge, %0, %449 : vector<1x256xi32>
    %cst_301 = arith.constant 0.000000e+00 : f32
    %451 = vector.shape_cast %450 : vector<1x256xi1> to vector<1x256xi1>
    %452 = vector.broadcast %451 : vector<1x256xi1> to vector<8x256xi1>
    %453 = vector.broadcast %cst_301 : f32 to vector<8x256xf32>
    %454 = arith.select %452, %448, %453 : vector<8x256xi1>, vector<8x256xf32>
    %c0_302 = arith.constant 0 : index
    %c240 = arith.constant 240 : index
    %455 = vector.load %arg26[%c0_302, %c240] : memref<8x512xf32, #tpu.memory_space<vmem>>, vector<8x256xf32>
    %c0_303 = arith.constant 0 : index
    %c247 = arith.constant 247 : index
    %456 = vector.load %arg26[%c0_303, %c247] : memref<8x512xf32, #tpu.memory_space<vmem>>, vector<8x256xf32>
    %c9_i32_304 = arith.constant 9 : i32
    %457 = vector.broadcast %c9_i32_304 : i32 to vector<1x256xi32>
    %458 = arith.cmpi slt, %0, %457 : vector<1x256xi32>
    %cst_305 = arith.constant 0.000000e+00 : f32
    %459 = vector.shape_cast %458 : vector<1x256xi1> to vector<1x256xi1>
    %460 = vector.broadcast %459 : vector<1x256xi1> to vector<8x256xi1>
    %461 = vector.broadcast %cst_305 : f32 to vector<8x256xf32>
    %462 = arith.select %460, %456, %461 : vector<8x256xi1>, vector<8x256xf32>
    %463 = tpu.concatenate %424, %425, %432, %439, %440, %447, %454, %455, %462 in 0 : vector<8x256xf32>, vector<8x256xf32>, vector<8x256xf32>, vector<8x256xf32>, vector<8x256xf32>, vector<8x256xf32>, vector<8x256xf32>, vector<8x256xf32>, vector<8x256xf32> -> vector<72x256xf32>
    %cst_306 = arith.constant dense<0.000000e+00> : vector<8x256xf32>
    %464 = tpu.matmul %416, %463, %cst_306 {dimension_numbers = #tpu.dot_dimension_numbers<[1], [0], [0], [1], [0, 0, 1, 1], [], []>} : vector<8x72xf32>, vector<72x256xf32>, vector<8x256xf32> -> vector<8x256xf32>
    %c0_307 = arith.constant 0 : index
    %c0_308 = arith.constant 0 : index
    %465 = vector.load %arg22[%c0_307, %c0_308] : memref<8x1xf32, #tpu.memory_space<vmem>>, vector<8x1xf32>
    %466 = vector.broadcast %465 : vector<8x1xf32> to vector<8x256xf32>
    %467 = arith.addf %464, %466 : vector<8x256xf32>
    %c3 = arith.constant 3 : index
    %c0_309 = arith.constant 0 : index
    %c0_310 = arith.constant 0 : index
    %468 = vector.load %arg23[%c3, %c0_309, %c0_310] : memref<4x8x72xf32, #tpu.memory_space<vmem>>, vector<1x8x72xf32>
    %469 = vector.shape_cast %468 : vector<1x8x72xf32> to vector<8x72xf32>
    %c0_311 = arith.constant 0 : index
    %c128_312 = arith.constant 128 : index
    %470 = vector.load %arg26[%c0_311, %c128_312] : memref<8x512xf32, #tpu.memory_space<vmem>>, vector<8x256xf32>
    tpu.vector_store %arg26[%c0_311, %c128_312], %467 {strides = array<i32>} : memref<8x512xf32, #tpu.memory_space<vmem>>, vector<8x256xf32>,
    %c0_313 = arith.constant 0 : index
    %c111_314 = arith.constant 111 : index
    %471 = vector.load %arg26[%c0_313, %c111_314] : memref<8x512xf32, #tpu.memory_space<vmem>>, vector<8x256xf32>
    %c1_i32_315 = arith.constant 1 : i32
    %472 = vector.broadcast %c1_i32_315 : i32 to vector<1x256xi32>
    %473 = arith.cmpi sge, %0, %472 : vector<1x256xi32>
    %cst_316 = arith.constant 0.000000e+00 : f32
    %474 = vector.shape_cast %473 : vector<1x256xi1> to vector<1x256xi1>
    %475 = vector.broadcast %474 : vector<1x256xi1> to vector<8x256xi1>
    %476 = vector.broadcast %cst_316 : f32 to vector<8x256xf32>
    %477 = arith.select %475, %471, %476 : vector<8x256xi1>, vector<8x256xf32>
    %c0_317 = arith.constant 0 : index
    %c112_318 = arith.constant 112 : index
    %478 = vector.load %arg26[%c0_317, %c112_318] : memref<8x512xf32, #tpu.memory_space<vmem>>, vector<8x256xf32>
    %c0_319 = arith.constant 0 : index
    %c113_320 = arith.constant 113 : index
    %479 = vector.load %arg26[%c0_319, %c113_320] : memref<8x512xf32, #tpu.memory_space<vmem>>, vector<8x256xf32>
    %c15_i32_321 = arith.constant 15 : i32
    %480 = vector.broadcast %c15_i32_321 : i32 to vector<1x256xi32>
    %481 = arith.cmpi slt, %0, %480 : vector<1x256xi32>
    %cst_322 = arith.constant 0.000000e+00 : f32
    %482 = vector.shape_cast %481 : vector<1x256xi1> to vector<1x256xi1>
    %483 = vector.broadcast %482 : vector<1x256xi1> to vector<8x256xi1>
    %484 = vector.broadcast %cst_322 : f32 to vector<8x256xf32>
    %485 = arith.select %483, %479, %484 : vector<8x256xi1>, vector<8x256xf32>
    %c0_323 = arith.constant 0 : index
    %c127_324 = arith.constant 127 : index
    %486 = vector.load %arg26[%c0_323, %c127_324] : memref<8x512xf32, #tpu.memory_space<vmem>>, vector<8x256xf32>
    %c1_i32_325 = arith.constant 1 : i32
    %487 = vector.broadcast %c1_i32_325 : i32 to vector<1x256xi32>
    %488 = arith.cmpi sge, %0, %487 : vector<1x256xi32>
    %cst_326 = arith.constant 0.000000e+00 : f32
    %489 = vector.shape_cast %488 : vector<1x256xi1> to vector<1x256xi1>
    %490 = vector.broadcast %489 : vector<1x256xi1> to vector<8x256xi1>
    %491 = vector.broadcast %cst_326 : f32 to vector<8x256xf32>
    %492 = arith.select %490, %486, %491 : vector<8x256xi1>, vector<8x256xf32>
    %c0_327 = arith.constant 0 : index
    %c128_328 = arith.constant 128 : index
    %493 = vector.load %arg26[%c0_327, %c128_328] : memref<8x512xf32, #tpu.memory_space<vmem>>, vector<8x256xf32>
    %c0_329 = arith.constant 0 : index
    %c129_330 = arith.constant 129 : index
    %494 = vector.load %arg26[%c0_329, %c129_330] : memref<8x512xf32, #tpu.memory_space<vmem>>, vector<8x256xf32>
    %c15_i32_331 = arith.constant 15 : i32
    %495 = vector.broadcast %c15_i32_331 : i32 to vector<1x256xi32>
    %496 = arith.cmpi slt, %0, %495 : vector<1x256xi32>
    %cst_332 = arith.constant 0.000000e+00 : f32
    %497 = vector.shape_cast %496 : vector<1x256xi1> to vector<1x256xi1>
    %498 = vector.broadcast %497 : vector<1x256xi1> to vector<8x256xi1>
    %499 = vector.broadcast %cst_332 : f32 to vector<8x256xf32>
    %500 = arith.select %498, %494, %499 : vector<8x256xi1>, vector<8x256xf32>
    %c0_333 = arith.constant 0 : index
    %c143_334 = arith.constant 143 : index
    %501 = vector.load %arg26[%c0_333, %c143_334] : memref<8x512xf32, #tpu.memory_space<vmem>>, vector<8x256xf32>
    %c1_i32_335 = arith.constant 1 : i32
    %502 = vector.broadcast %c1_i32_335 : i32 to vector<1x256xi32>
    %503 = arith.cmpi sge, %0, %502 : vector<1x256xi32>
    %cst_336 = arith.constant 0.000000e+00 : f32
    %504 = vector.shape_cast %503 : vector<1x256xi1> to vector<1x256xi1>
    %505 = vector.broadcast %504 : vector<1x256xi1> to vector<8x256xi1>
    %506 = vector.broadcast %cst_336 : f32 to vector<8x256xf32>
    %507 = arith.select %505, %501, %506 : vector<8x256xi1>, vector<8x256xf32>
    %c0_337 = arith.constant 0 : index
    %c144_338 = arith.constant 144 : index
    %508 = vector.load %arg26[%c0_337, %c144_338] : memref<8x512xf32, #tpu.memory_space<vmem>>, vector<8x256xf32>
    %c0_339 = arith.constant 0 : index
    %c145_340 = arith.constant 145 : index
    %509 = vector.load %arg26[%c0_339, %c145_340] : memref<8x512xf32, #tpu.memory_space<vmem>>, vector<8x256xf32>
    %c15_i32_341 = arith.constant 15 : i32
    %510 = vector.broadcast %c15_i32_341 : i32 to vector<1x256xi32>
    %511 = arith.cmpi slt, %0, %510 : vector<1x256xi32>
    %cst_342 = arith.constant 0.000000e+00 : f32
    %512 = vector.shape_cast %511 : vector<1x256xi1> to vector<1x256xi1>
    %513 = vector.broadcast %512 : vector<1x256xi1> to vector<8x256xi1>
    %514 = vector.broadcast %cst_342 : f32 to vector<8x256xf32>
    %515 = arith.select %513, %509, %514 : vector<8x256xi1>, vector<8x256xf32>
    %516 = tpu.concatenate %477, %478, %485, %492, %493, %500, %507, %508, %515 in 0 : vector<8x256xf32>, vector<8x256xf32>, vector<8x256xf32>, vector<8x256xf32>, vector<8x256xf32>, vector<8x256xf32>, vector<8x256xf32>, vector<8x256xf32>, vector<8x256xf32> -> vector<72x256xf32>
    %cst_343 = arith.constant dense<0.000000e+00> : vector<8x256xf32>
    %517 = tpu.matmul %469, %516, %cst_343 {dimension_numbers = #tpu.dot_dimension_numbers<[1], [0], [0], [1], [0, 0, 1, 1], [], []>} : vector<8x72xf32>, vector<72x256xf32>, vector<8x256xf32> -> vector<8x256xf32>
    %518 = arith.addf %350, %517 : vector<8x256xf32>
    %519 = vector.extract_strided_slice %11 {offsets = [32, 0], sizes = [8, 256], strides = [1, 1]} : vector<40x256xf32> to vector<8x256xf32>
    %c0_344 = arith.constant 0 : index
    %c0_345 = arith.constant 0 : index
    %520 = vector.load %arg24[%c0_344, %c0_345] : memref<8x1xf32, #tpu.memory_space<vmem>>, vector<8x1xf32>
    %521 = vector.broadcast %520 : vector<8x1xf32> to vector<8x256xf32>
    %522 = arith.addf %518, %521 : vector<8x256xf32>
    %523 = arith.addf %522, %519 : vector<8x256xf32>
    %cst_346 = arith.constant 0.000000e+00 : f32
    %524 = vector.broadcast %cst_346 : f32 to vector<8x256xf32>
    %525 = arith.maximumf %523, %524 : vector<8x256xf32>
    %526 = vector.shape_cast %525 : vector<8x256xf32> to vector<1x8x256xf32>
    %c0_347 = arith.constant 0 : index
    %c0_348 = arith.constant 0 : index
    %c0_349 = arith.constant 0 : index
    %527 = vector.load %arg25[%c0_347, %c0_348, %c0_349] : memref<1x8x256xf32, #tpu.memory_space<vmem>>, vector<1x8x256xf32>
    tpu.vector_store %arg25[%c0_347, %c0_348, %c0_349], %526 {strides = array<i32>} : memref<1x8x256xf32, #tpu.memory_space<vmem>>, vector<1x8x256xf32>,
    return
  }
  func.func @transform_0(%arg0: i32) -> (i32, i32, i32) {
    %c0_i32 = arith.constant 0 : i32
    %c0_i32_0 = arith.constant 0 : i32
    %c0_i32_1 = arith.constant 0 : i32
    return %arg0, %c0_i32, %c0_i32_0 : i32, i32, i32
  }
  func.func @transform_1(%arg0: i32) -> (i32, i32) {
    %c0_i32 = arith.constant 0 : i32
    %c0_i32_0 = arith.constant 0 : i32
    %c0_i32_1 = arith.constant 0 : i32
    return %c0_i32, %c0_i32_0 : i32, i32
  }
  func.func @transform_2(%arg0: i32) -> (i32, i32) {
    %c0_i32 = arith.constant 0 : i32
    %c0_i32_0 = arith.constant 0 : i32
    %c0_i32_1 = arith.constant 0 : i32
    return %c0_i32, %c0_i32_0 : i32, i32
  }
  func.func @transform_3(%arg0: i32) -> (i32, i32) {
    %c0_i32 = arith.constant 0 : i32
    %c0_i32_0 = arith.constant 0 : i32
    %c0_i32_1 = arith.constant 0 : i32
    return %c0_i32, %c0_i32_0 : i32, i32
  }
  func.func @transform_4(%arg0: i32) -> (i32, i32) {
    %c0_i32 = arith.constant 0 : i32
    %c0_i32_0 = arith.constant 0 : i32
    %c0_i32_1 = arith.constant 0 : i32
    return %c0_i32, %c0_i32_0 : i32, i32
  }
  func.func @transform_5(%arg0: i32) -> (i32, i32) {
    %c0_i32 = arith.constant 0 : i32
    %c0_i32_0 = arith.constant 0 : i32
    %c0_i32_1 = arith.constant 0 : i32
    return %c0_i32, %c0_i32_0 : i32, i32
  }
  func.func @transform_6(%arg0: i32) -> (i32, i32) {
    %c0_i32 = arith.constant 0 : i32
    %c0_i32_0 = arith.constant 0 : i32
    %c0_i32_1 = arith.constant 0 : i32
    return %c0_i32, %c0_i32_0 : i32, i32
  }
  func.func @transform_7(%arg0: i32) -> (i32, i32) {
    %c0_i32 = arith.constant 0 : i32
    %c0_i32_0 = arith.constant 0 : i32
    %c0_i32_1 = arith.constant 0 : i32
    return %c0_i32, %c0_i32_0 : i32, i32
  }
  func.func @transform_8(%arg0: i32) -> (i32, i32) {
    %c0_i32 = arith.constant 0 : i32
    %c0_i32_0 = arith.constant 0 : i32
    %c0_i32_1 = arith.constant 0 : i32
    return %c0_i32, %c0_i32_0 : i32, i32
  }
  func.func @transform_9(%arg0: i32) -> (i32, i32) {
    %c0_i32 = arith.constant 0 : i32
    %c0_i32_0 = arith.constant 0 : i32
    %c0_i32_1 = arith.constant 0 : i32
    return %c0_i32, %c0_i32_0 : i32, i32
  }
  func.func @transform_10(%arg0: i32) -> (i32, i32) {
    %c0_i32 = arith.constant 0 : i32
    %c0_i32_0 = arith.constant 0 : i32
    %c0_i32_1 = arith.constant 0 : i32
    return %c0_i32, %c0_i32_0 : i32, i32
  }
  func.func @transform_11(%arg0: i32) -> (i32, i32) {
    %c0_i32 = arith.constant 0 : i32
    %c0_i32_0 = arith.constant 0 : i32
    %c0_i32_1 = arith.constant 0 : i32
    return %c0_i32, %c0_i32_0 : i32, i32
  }
  func.func @transform_12(%arg0: i32) -> (i32, i32) {
    %c0_i32 = arith.constant 0 : i32
    %c0_i32_0 = arith.constant 0 : i32
    %c0_i32_1 = arith.constant 0 : i32
    return %c0_i32, %c0_i32_0 : i32, i32
  }
  func.func @transform_13(%arg0: i32) -> (i32, i32) {
    %c0_i32 = arith.constant 0 : i32
    %c0_i32_0 = arith.constant 0 : i32
    %c0_i32_1 = arith.constant 0 : i32
    return %c0_i32, %c0_i32_0 : i32, i32
  }
  func.func @transform_14(%arg0: i32) -> (i32, i32) {
    %c0_i32 = arith.constant 0 : i32
    %c0_i32_0 = arith.constant 0 : i32
    %c0_i32_1 = arith.constant 0 : i32
    return %c0_i32, %c0_i32_0 : i32, i32
  }
  func.func @transform_15(%arg0: i32) -> (i32, i32) {
    %c0_i32 = arith.constant 0 : i32
    %c0_i32_0 = arith.constant 0 : i32
    %c0_i32_1 = arith.constant 0 : i32
    return %c0_i32, %c0_i32_0 : i32, i32
  }
  func.func @transform_16(%arg0: i32) -> (i32, i32) {
    %c0_i32 = arith.constant 0 : i32
    %c0_i32_0 = arith.constant 0 : i32
    %c0_i32_1 = arith.constant 0 : i32
    return %c0_i32, %c0_i32_0 : i32, i32
  }
  func.func @transform_17(%arg0: i32) -> (i32, i32) {
    %c0_i32 = arith.constant 0 : i32
    %c0_i32_0 = arith.constant 0 : i32
    %c0_i32_1 = arith.constant 0 : i32
    return %c0_i32, %c0_i32_0 : i32, i32
  }
  func.func @transform_18(%arg0: i32) -> (i32, i32) {
    %c0_i32 = arith.constant 0 : i32
    %c0_i32_0 = arith.constant 0 : i32
    %c0_i32_1 = arith.constant 0 : i32
    return %c0_i32, %c0_i32_0 : i32, i32
  }
  func.func @transform_19(%arg0: i32) -> (i32, i32) {
    %c0_i32 = arith.constant 0 : i32
    %c0_i32_0 = arith.constant 0 : i32
    %c0_i32_1 = arith.constant 0 : i32
    return %c0_i32, %c0_i32_0 : i32, i32
  }
  func.func @transform_20(%arg0: i32) -> (i32, i32) {
    %c0_i32 = arith.constant 0 : i32
    %c0_i32_0 = arith.constant 0 : i32
    %c0_i32_1 = arith.constant 0 : i32
    return %c0_i32, %c0_i32_0 : i32, i32
  }
  func.func @transform_21(%arg0: i32) -> (i32, i32) {
    %c0_i32 = arith.constant 0 : i32
    %c0_i32_0 = arith.constant 0 : i32
    %c0_i32_1 = arith.constant 0 : i32
    return %c0_i32, %c0_i32_0 : i32, i32
  }
  func.func @transform_22(%arg0: i32) -> (i32, i32, i32) {
    %c0_i32 = arith.constant 0 : i32
    %c0_i32_0 = arith.constant 0 : i32
    %c0_i32_1 = arith.constant 0 : i32
    %c0_i32_2 = arith.constant 0 : i32
    return %c0_i32, %c0_i32_0, %c0_i32_1 : i32, i32, i32
  }
  func.func @transform_23(%arg0: i32) -> (i32, i32) {
    %c0_i32 = arith.constant 0 : i32
    %c0_i32_0 = arith.constant 0 : i32
    %c0_i32_1 = arith.constant 0 : i32
    return %c0_i32, %c0_i32_0 : i32, i32
  }
  func.func @transform_24(%arg0: i32) -> (i32, i32, i32) {
    %c0_i32 = arith.constant 0 : i32
    %c0_i32_0 = arith.constant 0 : i32
    %c0_i32_1 = arith.constant 0 : i32
    return %arg0, %c0_i32, %c0_i32_0 : i32, i32, i32
  }
}

</mosaic_0001>

<llo_original>
// kernel: tpu_custom_call.1
$region0: #{tpu_custom_call.1}
  #allocation0 [shape = 'u32[]', space=smem, size = 0x4, offset = 0x4, fixed_abs, tag = 'smem constant byte address 0x4 - core index']
  #allocation1 [shape = 'u32[144,128]{1,0:T(1,128)}', space=vmem, size = 0x12000, scoped, tag = 'internal scratch']
  #allocation2 [shape = 'f32[8,512]{1,0:T(8,128)}', space=vmem, size = 0x4000, scoped, tag = 'scratch operand']
  %s0 = inlined_call_operand.vmem [shape: f32[2,4,256], index: 0, kind: input, shape index: {}]
  %s1 = inlined_call_operand.vmem [shape: s32[1,256], index: 1, kind: input, shape index: {}]
  %s2 = inlined_call_operand.vmem [shape: f32[40,4], index: 2, kind: input, shape index: {}]
  %s3 = inlined_call_operand.vmem [shape: f32[40,1], index: 3, kind: input, shape index: {}]
  %s4 = inlined_call_operand.vmem [shape: f32[8,24], index: 4, kind: input, shape index: {}]
  %s5 = inlined_call_operand.vmem [shape: f32[8,1], index: 5, kind: input, shape index: {}]
  %s6 = inlined_call_operand.vmem [shape: f32[8,24], index: 6, kind: input, shape index: {}]
  %s7 = inlined_call_operand.vmem [shape: f32[8,1], index: 7, kind: input, shape index: {}]
  %s8 = inlined_call_operand.vmem [shape: f32[8,72], index: 8, kind: input, shape index: {}]
  %s9 = inlined_call_operand.vmem [shape: f32[8,1], index: 9, kind: input, shape index: {}]
  %s10 = inlined_call_operand.vmem [shape: f32[8,40], index: 10, kind: input, shape index: {}]
  %s11 = inlined_call_operand.vmem [shape: f32[8,1], index: 11, kind: input, shape index: {}]
  %s12 = inlined_call_operand.vmem [shape: f32[8,40], index: 12, kind: input, shape index: {}]
  %s13 = inlined_call_operand.vmem [shape: f32[8,1], index: 13, kind: input, shape index: {}]
  %s14 = inlined_call_operand.vmem [shape: f32[8,72], index: 14, kind: input, shape index: {}]
  %s15 = inlined_call_operand.vmem [shape: f32[8,1], index: 15, kind: input, shape index: {}]
  %s16 = inlined_call_operand.vmem [shape: f32[8,56], index: 16, kind: input, shape index: {}]
  %s17 = inlined_call_operand.vmem [shape: f32[8,1], index: 17, kind: input, shape index: {}]
  %s18 = inlined_call_operand.vmem [shape: f32[8,56], index: 18, kind: input, shape index: {}]
  %s19 = inlined_call_operand.vmem [shape: f32[8,1], index: 19, kind: input, shape index: {}]
  %s20 = inlined_call_operand.vmem [shape: f32[8,72], index: 20, kind: input, shape index: {}]
  %s21 = inlined_call_operand.vmem [shape: f32[8,1], index: 21, kind: input, shape index: {}]
  %s22 = inlined_call_operand.vmem [shape: f32[4,8,72], index: 22, kind: input, shape index: {}]
  %s23 = inlined_call_operand.vmem [shape: f32[8,1], index: 23, kind: input, shape index: {}]
  %s24 = inlined_call_operand.hbm [shape: f32[2,8,256], index: 24, kind: output, shape index: {}]
  %s25 = sld [smem:[#allocation0]]
  $region129: #{tpu_custom_call.1} parent=0
    _
  %s27 = ssub.s32 1, %s25
  %s28 = scalar_select 0, %s27, %s25
  $region1: #{tpu_custom_call.1} parent=0
    #allocation3 [shape = 'u8[16384]{0}', space=vmem, size = 0x4000, scoped, tag = 'output window, operand 0']
    #allocation4 [shape = 's32[2]{0}', space=sflag, size = 0x8, scoped, tag = 'scoped memory for tpu_custom_call.1']
    %29 = vsyncpa [#allocation4], 0
    %s30 = scalar_lea.sflag [#allocation4], 1
    %31 = vsyncpa %s30, 0
    loop: start=0, step=1, limit=4
    $region2: #{tpu_custom_call.1} parent=1 // loop_pre_header
      _
    $region3: #{tpu_custom_call.1} parent=1 // loop_header
      %s33 = sphi 0, %s37
      %p34 = scmp.ge.s32.totalorder %s33, 4
      %s43 = sphi 0, %s45
      %s46 = sphi 0, %s43
      %s47 = sphi 0, %s46
      %s63 = sphi 0, %s47
      %s67 = sphi 0, %s67
      %s69 = sphi 0, %s67
      %s70 = sphi 0, %s69
      %s84 = sphi 0, %s70
      %s88 = sphi 0, %s88
      %s90 = sphi 0, %s88
      %s91 = sphi 0, %s90
      %s105 = sphi 0, %s91
      %s109 = sphi 0, %s109
      %s111 = sphi 0, %s109
      %s112 = sphi 0, %s111
      %s126 = sphi 0, %s112
      %s130 = sphi 0, %s130
      %s132 = sphi 0, %s130
      %s133 = sphi 0, %s132
      %s147 = sphi 0, %s133
      %s151 = sphi 0, %s151
      %s153 = sphi 0, %s151
      %s154 = sphi 0, %s153
      %s168 = sphi 0, %s154
      %s172 = sphi 0, %s172
      %s174 = sphi 0, %s172
      %s175 = sphi 0, %s174
      %s189 = sphi 0, %s175
      %s193 = sphi 0, %s193
      %s195 = sphi 0, %s193
      %s196 = sphi 0, %s195
      %s210 = sphi 0, %s196
      %s214 = sphi 0, %s214
      %s216 = sphi 0, %s214
      %s217 = sphi 0, %s216
      %s231 = sphi 0, %s217
      %s235 = sphi 0, %s235
      %s237 = sphi 0, %s235
      %s238 = sphi 0, %s237
      %s252 = sphi 0, %s238
      %s256 = sphi 0, %s256
      %s258 = sphi 0, %s256
      %s259 = sphi 0, %s258
      %s273 = sphi 0, %s259
      %s277 = sphi 0, %s277
      %s279 = sphi 0, %s277
      %s280 = sphi 0, %s279
      %s294 = sphi 0, %s280
      %s298 = sphi 0, %s298
      %s300 = sphi 0, %s298
      %s301 = sphi 0, %s300
      %s315 = sphi 0, %s301
      %s319 = sphi 0, %s319
      %s321 = sphi 0, %s319
      %s322 = sphi 0, %s321
      %s336 = sphi 0, %s322
      %s340 = sphi 0, %s340
      %s342 = sphi 0, %s340
      %s343 = sphi 0, %s342
      %s357 = sphi 0, %s343
      %s361 = sphi 0, %s361
      %s363 = sphi 0, %s361
      %s364 = sphi 0, %s363
      %s378 = sphi 0, %s364
      %s382 = sphi 0, %s382
      %s384 = sphi 0, %s382
      %s385 = sphi 0, %s384
      %s399 = sphi 0, %s385
      %s403 = sphi 0, %s403
      %s405 = sphi 0, %s403
      %s406 = sphi 0, %s405
      %s420 = sphi 0, %s406
      %s424 = sphi 0, %s424
      %s426 = sphi 0, %s424
      %s427 = sphi 0, %s426
      %s441 = sphi 0, %s427
      %s445 = sphi 0, %s445
      %s447 = sphi 0, %s445
      %s448 = sphi 0, %s447
      %s462 = sphi 0, %s448
      %s466 = sphi 0, %s466
      %s468 = sphi 0, %s466
      %s469 = sphi 0, %s468
      %s483 = sphi 0, %s469
      %s487 = sphi 0, %s487
      %s489 = sphi 0, %s487
      %s490 = sphi 0, %s489
      %s504 = sphi 0, %s490
      %s508 = sphi 0, %s508
      %s510 = sphi 0, %s508
      %s511 = sphi 0, %s510
      %s525 = sphi 0, %s511
      %s529 = sphi 0, %s529
      %s531 = sphi 0, %s529
      %s532 = sphi 0, %s531
      %s546 = sphi 0, %s532
      %s552 = sphi 0, %s554
      %s555 = sphi 0, %s552
      %s556 = sphi 0, %s555
      %s572 = sphi 0, %s556
    $region4: #{tpu_custom_call.1} parent=1 // loop_header_branch
      %36 = sbr.rel (%p34) target = $region8
    $region5: #{tpu_custom_call.1} parent=1 // loop_body
      %s38 = ssub.s32 %s33, 1
      %s39 = ssub.s32 %s33, 2
      %s40 = sadd.s32 %s33, 1
      %s41 = ssub.s32 %s33, %s40
      %p42 = scmp.eq.s32.totalorder %s41, 0
      %s44 = sadd.s32 %s43, 1
      %s45 = scalar_select %p42, %s43, %s44
      %p48 = pneg %p42
      %p49 = scmp.eq.s32.totalorder %s33, 1
      %p50 = por %p48, %p49
      %p51 = scmp.ne.s32.totalorder %s43, %s46
      %p52 = scmp.eq.s32.totalorder %s33, 0
      %p53 = por %p51, %p52
      %p54 = scmp.ne.s32.totalorder %s43, %s46
      %p55 = scmp.eq.s32.totalorder %s38, 1
      %p56 = por %p54, %p55
      %p57 = scmp.ne.s32.totalorder %s46, %s47
      %p58 = scmp.eq.s32.totalorder %s38, 0
      %p59 = por %p57, %p58
      %p60 = scmp.ne.s32.totalorder %s46, %s47
      %p61 = scmp.eq.s32.totalorder %s39, 1
      %p62 = por %p60, %p61
      %p64 = scmp.ne.s32.totalorder %s47, %s63
      %p65 = scmp.eq.s32.totalorder %s39, 0
      %p66 = por %p64, %p65
      %s68 = sadd.s32 %s67, 1
      %p71 = scmp.eq.s32.totalorder %s33, 1
      %p72 = scmp.ne.s32.totalorder %s67, %s69
      %p73 = scmp.eq.s32.totalorder %s33, 0
      %p74 = por %p72, %p73
      %p75 = scmp.ne.s32.totalorder %s67, %s69
      %p76 = scmp.eq.s32.totalorder %s38, 1
      %p77 = por %p75, %p76
      %p78 = scmp.ne.s32.totalorder %s69, %s70
      %p79 = scmp.eq.s32.totalorder %s38, 0
      %p80 = por %p78, %p79
      %p81 = scmp.ne.s32.totalorder %s69, %s70
      %p82 = scmp.eq.s32.totalorder %s39, 1
      %p83 = por %p81, %p82
      %p85 = scmp.ne.s32.totalorder %s70, %s84
      %p86 = scmp.eq.s32.totalorder %s39, 0
      %p87 = por %p85, %p86
      %s89 = sadd.s32 %s88, 1
      %p92 = scmp.eq.s32.totalorder %s33, 1
      %p93 = scmp.ne.s32.totalorder %s88, %s90
      %p94 = scmp.eq.s32.totalorder %s33, 0
      %p95 = por %p93, %p94
      %p96 = scmp.ne.s32.totalorder %s88, %s90
      %p97 = scmp.eq.s32.totalorder %s38, 1
      %p98 = por %p96, %p97
      %p99 = scmp.ne.s32.totalorder %s90, %s91
      %p100 = scmp.eq.s32.totalorder %s38, 0
      %p101 = por %p99, %p100
      %p102 = scmp.ne.s32.totalorder %s90, %s91
      %p103 = scmp.eq.s32.totalorder %s39, 1
      %p104 = por %p102, %p103
      %p106 = scmp.ne.s32.totalorder %s91, %s105
      %p107 = scmp.eq.s32.totalorder %s39, 0
      %p108 = por %p106, %p107
      %s110 = sadd.s32 %s109, 1
      %p113 = scmp.eq.s32.totalorder %s33, 1
      %p114 = scmp.ne.s32.totalorder %s109, %s111
      %p115 = scmp.eq.s32.totalorder %s33, 0
      %p116 = por %p114, %p115
      %p117 = scmp.ne.s32.totalorder %s109, %s111
      %p118 = scmp.eq.s32.totalorder %s38, 1
      %p119 = por %p117, %p118
      %p120 = scmp.ne.s32.totalorder %s111, %s112
      %p121 = scmp.eq.s32.totalorder %s38, 0
      %p122 = por %p120, %p121
      %p123 = scmp.ne.s32.totalorder %s111, %s112
      %p124 = scmp.eq.s32.totalorder %s39, 1
      %p125 = por %p123, %p124
      %p127 = scmp.ne.s32.totalorder %s112, %s126
      %p128 = scmp.eq.s32.totalorder %s39, 0
      %p129 = por %p127, %p128
      %s131 = sadd.s32 %s130, 1
      %p134 = scmp.eq.s32.totalorder %s33, 1
      %p135 = scmp.ne.s32.totalorder %s130, %s132
      %p136 = scmp.eq.s32.totalorder %s33, 0
      %p137 = por %p135, %p136
      %p138 = scmp.ne.s32.totalorder %s130, %s132
      %p139 = scmp.eq.s32.totalorder %s38, 1
      %p140 = por %p138, %p139
      %p141 = scmp.ne.s32.totalorder %s132, %s133
      %p142 = scmp.eq.s32.totalorder %s38, 0
      %p143 = por %p141, %p142
      %p144 = scmp.ne.s32.totalorder %s132, %s133
      %p145 = scmp.eq.s32.totalorder %s39, 1
      %p146 = por %p144, %p145
      %p148 = scmp.ne.s32.totalorder %s133, %s147
      %p149 = scmp.eq.s32.totalorder %s39, 0
      %p150 = por %p148, %p149
      %s152 = sadd.s32 %s151, 1
      %p155 = scmp.eq.s32.totalorder %s33, 1
      %p156 = scmp.ne.s32.totalorder %s151, %s153
      %p157 = scmp.eq.s32.totalorder %s33, 0
      %p158 = por %p156, %p157
      %p159 = scmp.ne.s32.totalorder %s151, %s153
      %p160 = scmp.eq.s32.totalorder %s38, 1
      %p161 = por %p159, %p160
      %p162 = scmp.ne.s32.totalorder %s153, %s154
      %p163 = scmp.eq.s32.totalorder %s38, 0
      %p164 = por %p162, %p163
      %p165 = scmp.ne.s32.totalorder %s153, %s154
      %p166 = scmp.eq.s32.totalorder %s39, 1
      %p167 = por %p165, %p166
      %p169 = scmp.ne.s32.totalorder %s154, %s168
      %p170 = scmp.eq.s32.totalorder %s39, 0
      %p171 = por %p169, %p170
      %s173 = sadd.s32 %s172, 1
      %p176 = scmp.eq.s32.totalorder %s33, 1
      %p177 = scmp.ne.s32.totalorder %s172, %s174
      %p178 = scmp.eq.s32.totalorder %s33, 0
      %p179 = por %p177, %p178
      %p180 = scmp.ne.s32.totalorder %s172, %s174
      %p181 = scmp.eq.s32.totalorder %s38, 1
      %p182 = por %p180, %p181
      %p183 = scmp.ne.s32.totalorder %s174, %s175
      %p184 = scmp.eq.s32.totalorder %s38, 0
      %p185 = por %p183, %p184
      %p186 = scmp.ne.s32.totalorder %s174, %s175
      %p187 = scmp.eq.s32.totalorder %s39, 1
      %p188 = por %p186, %p187
      %p190 = scmp.ne.s32.totalorder %s175, %s189
      %p191 = scmp.eq.s32.totalorder %s39, 0
      %p192 = por %p190, %p191
      %s194 = sadd.s32 %s193, 1
      %p197 = scmp.eq.s32.totalorder %s33, 1
      %p198 = scmp.ne.s32.totalorder %s193, %s195
      %p199 = scmp.eq.s32.totalorder %s33, 0
      %p200 = por %p198, %p199
      %p201 = scmp.ne.s32.totalorder %s193, %s195
      %p202 = scmp.eq.s32.totalorder %s38, 1
      %p203 = por %p201, %p202
      %p204 = scmp.ne.s32.totalorder %s195, %s196
      %p205 = scmp.eq.s32.totalorder %s38, 0
      %p206 = por %p204, %p205
      %p207 = scmp.ne.s32.totalorder %s195, %s196
      %p208 = scmp.eq.s32.totalorder %s39, 1
      %p209 = por %p207, %p208
      %p211 = scmp.ne.s32.totalorder %s196, %s210
      %p212 = scmp.eq.s32.totalorder %s39, 0
      %p213 = por %p211, %p212
      %s215 = sadd.s32 %s214, 1
      %p218 = scmp.eq.s32.totalorder %s33, 1
      %p219 = scmp.ne.s32.totalorder %s214, %s216
      %p220 = scmp.eq.s32.totalorder %s33, 0
      %p221 = por %p219, %p220
      %p222 = scmp.ne.s32.totalorder %s214, %s216
      %p223 = scmp.eq.s32.totalorder %s38, 1
      %p224 = por %p222, %p223
      %p225 = scmp.ne.s32.totalorder %s216, %s217
      %p226 = scmp.eq.s32.totalorder %s38, 0
      %p227 = por %p225, %p226
      %p228 = scmp.ne.s32.totalorder %s216, %s217
      %p229 = scmp.eq.s32.totalorder %s39, 1
      %p230 = por %p228, %p229
      %p232 = scmp.ne.s32.totalorder %s217, %s231
      %p233 = scmp.eq.s32.totalorder %s39, 0
      %p234 = por %p232, %p233
      %s236 = sadd.s32 %s235, 1
      %p239 = scmp.eq.s32.totalorder %s33, 1
      %p240 = scmp.ne.s32.totalorder %s235, %s237
      %p241 = scmp.eq.s32.totalorder %s33, 0
      %p242 = por %p240, %p241
      %p243 = scmp.ne.s32.totalorder %s235, %s237
      %p244 = scmp.eq.s32.totalorder %s38, 1
      %p245 = por %p243, %p244
      %p246 = scmp.ne.s32.totalorder %s237, %s238
      %p247 = scmp.eq.s32.totalorder %s38, 0
      %p248 = por %p246, %p247
      %p249 = scmp.ne.s32.totalorder %s237, %s238
      %p250 = scmp.eq.s32.totalorder %s39, 1
      %p251 = por %p249, %p250
      %p253 = scmp.ne.s32.totalorder %s238, %s252
      %p254 = scmp.eq.s32.totalorder %s39, 0
      %p255 = por %p253, %p254
      %s257 = sadd.s32 %s256, 1
      %p260 = scmp.eq.s32.totalorder %s33, 1
      %p261 = scmp.ne.s32.totalorder %s256, %s258
      %p262 = scmp.eq.s32.totalorder %s33, 0
      %p263 = por %p261, %p262
      %p264 = scmp.ne.s32.totalorder %s256, %s258
      %p265 = scmp.eq.s32.totalorder %s38, 1
      %p266 = por %p264, %p265
      %p267 = scmp.ne.s32.totalorder %s258, %s259
      %p268 = scmp.eq.s32.totalorder %s38, 0
      %p269 = por %p267, %p268
      %p270 = scmp.ne.s32.totalorder %s258, %s259
      %p271 = scmp.eq.s32.totalorder %s39, 1
      %p272 = por %p270, %p271
      %p274 = scmp.ne.s32.totalorder %s259, %s273
      %p275 = scmp.eq.s32.totalorder %s39, 0
      %p276 = por %p274, %p275
      %s278 = sadd.s32 %s277, 1
      %p281 = scmp.eq.s32.totalorder %s33, 1
      %p282 = scmp.ne.s32.totalorder %s277, %s279
      %p283 = scmp.eq.s32.totalorder %s33, 0
      %p284 = por %p282, %p283
      %p285 = scmp.ne.s32.totalorder %s277, %s279
      %p286 = scmp.eq.s32.totalorder %s38, 1
      %p287 = por %p285, %p286
      %p288 = scmp.ne.s32.totalorder %s279, %s280
      %p289 = scmp.eq.s32.totalorder %s38, 0
      %p290 = por %p288, %p289
      %p291 = scmp.ne.s32.totalorder %s279, %s280
      %p292 = scmp.eq.s32.totalorder %s39, 1
      %p293 = por %p291, %p292
      %p295 = scmp.ne.s32.totalorder %s280, %s294
      %p296 = scmp.eq.s32.totalorder %s39, 0
      %p297 = por %p295, %p296
      %s299 = sadd.s32 %s298, 1
      %p302 = scmp.eq.s32.totalorder %s33, 1
      %p303 = scmp.ne.s32.totalorder %s298, %s300
      %p304 = scmp.eq.s32.totalorder %s33, 0
      %p305 = por %p303, %p304
      %p306 = scmp.ne.s32.totalorder %s298, %s300
      %p307 = scmp.eq.s32.totalorder %s38, 1
      %p308 = por %p306, %p307
      %p309 = scmp.ne.s32.totalorder %s300, %s301
      %p310 = scmp.eq.s32.totalorder %s38, 0
      %p311 = por %p309, %p310
      %p312 = scmp.ne.s32.totalorder %s300, %s301
      %p313 = scmp.eq.s32.totalorder %s39, 1
      %p314 = por %p312, %p313
      %p316 = scmp.ne.s32.totalorder %s301, %s315
      %p317 = scmp.eq.s32.totalorder %s39, 0
      %p318 = por %p316, %p317
      %s320 = sadd.s32 %s319, 1
      %p323 = scmp.eq.s32.totalorder %s33, 1
      %p324 = scmp.ne.s32.totalorder %s319, %s321
      %p325 = scmp.eq.s32.totalorder %s33, 0
      %p326 = por %p324, %p325
      %p327 = scmp.ne.s32.totalorder %s319, %s321
      %p328 = scmp.eq.s32.totalorder %s38, 1
      %p329 = por %p327, %p328
      %p330 = scmp.ne.s32.totalorder %s321, %s322
      %p331 = scmp.eq.s32.totalorder %s38, 0
      %p332 = por %p330, %p331
      %p333 = scmp.ne.s32.totalorder %s321, %s322
      %p334 = scmp.eq.s32.totalorder %s39, 1
      %p335 = por %p333, %p334
      %p337 = scmp.ne.s32.totalorder %s322, %s336
      %p338 = scmp.eq.s32.totalorder %s39, 0
      %p339 = por %p337, %p338
      %s341 = sadd.s32 %s340, 1
      %p344 = scmp.eq.s32.totalorder %s33, 1
      %p345 = scmp.ne.s32.totalorder %s340, %s342
      %p346 = scmp.eq.s32.totalorder %s33, 0
      %p347 = por %p345, %p346
      %p348 = scmp.ne.s32.totalorder %s340, %s342
      %p349 = scmp.eq.s32.totalorder %s38, 1
      %p350 = por %p348, %p349
      %p351 = scmp.ne.s32.totalorder %s342, %s343
      %p352 = scmp.eq.s32.totalorder %s38, 0
      %p353 = por %p351, %p352
      %p354 = scmp.ne.s32.totalorder %s342, %s343
      %p355 = scmp.eq.s32.totalorder %s39, 1
      %p356 = por %p354, %p355
      %p358 = scmp.ne.s32.totalorder %s343, %s357
      %p359 = scmp.eq.s32.totalorder %s39, 0
      %p360 = por %p358, %p359
      %s362 = sadd.s32 %s361, 1
      %p365 = scmp.eq.s32.totalorder %s33, 1
      %p366 = scmp.ne.s32.totalorder %s361, %s363
      %p367 = scmp.eq.s32.totalorder %s33, 0
      %p368 = por %p366, %p367
      %p369 = scmp.ne.s32.totalorder %s361, %s363
      %p370 = scmp.eq.s32.totalorder %s38, 1
      %p371 = por %p369, %p370
      %p372 = scmp.ne.s32.totalorder %s363, %s364
      %p373 = scmp.eq.s32.totalorder %s38, 0
      %p374 = por %p372, %p373
      %p375 = scmp.ne.s32.totalorder %s363, %s364
      %p376 = scmp.eq.s32.totalorder %s39, 1
      %p377 = por %p375, %p376
      %p379 = scmp.ne.s32.totalorder %s364, %s378
      %p380 = scmp.eq.s32.totalorder %s39, 0
      %p381 = por %p379, %p380
      %s383 = sadd.s32 %s382, 1
      %p386 = scmp.eq.s32.totalorder %s33, 1
      %p387 = scmp.ne.s32.totalorder %s382, %s384
      %p388 = scmp.eq.s32.totalorder %s33, 0
      %p389 = por %p387, %p388
      %p390 = scmp.ne.s32.totalorder %s382, %s384
      %p391 = scmp.eq.s32.totalorder %s38, 1
      %p392 = por %p390, %p391
      %p393 = scmp.ne.s32.totalorder %s384, %s385
      %p394 = scmp.eq.s32.totalorder %s38, 0
      %p395 = por %p393, %p394
      %p396 = scmp.ne.s32.totalorder %s384, %s385
      %p397 = scmp.eq.s32.totalorder %s39, 1
      %p398 = por %p396, %p397
      %p400 = scmp.ne.s32.totalorder %s385, %s399
      %p401 = scmp.eq.s32.totalorder %s39, 0
      %p402 = por %p400, %p401
      %s404 = sadd.s32 %s403, 1
      %p407 = scmp.eq.s32.totalorder %s33, 1
      %p408 = scmp.ne.s32.totalorder %s403, %s405
      %p409 = scmp.eq.s32.totalorder %s33, 0
      %p410 = por %p408, %p409
      %p411 = scmp.ne.s32.totalorder %s403, %s405
      %p412 = scmp.eq.s32.totalorder %s38, 1
      %p413 = por %p411, %p412
      %p414 = scmp.ne.s32.totalorder %s405, %s406
      %p415 = scmp.eq.s32.totalorder %s38, 0
      %p416 = por %p414, %p415
      %p417 = scmp.ne.s32.totalorder %s405, %s406
      %p418 = scmp.eq.s32.totalorder %s39, 1
      %p419 = por %p417, %p418
      %p421 = scmp.ne.s32.totalorder %s406, %s420
      %p422 = scmp.eq.s32.totalorder %s39, 0
      %p423 = por %p421, %p422
      %s425 = sadd.s32 %s424, 1
      %p428 = scmp.eq.s32.totalorder %s33, 1
      %p429 = scmp.ne.s32.totalorder %s424, %s426
      %p430 = scmp.eq.s32.totalorder %s33, 0
      %p431 = por %p429, %p430
      %p432 = scmp.ne.s32.totalorder %s424, %s426
      %p433 = scmp.eq.s32.totalorder %s38, 1
      %p434 = por %p432, %p433
      %p435 = scmp.ne.s32.totalorder %s426, %s427
      %p436 = scmp.eq.s32.totalorder %s38, 0
      %p437 = por %p435, %p436
      %p438 = scmp.ne.s32.totalorder %s426, %s427
      %p439 = scmp.eq.s32.totalorder %s39, 1
      %p440 = por %p438, %p439
      %p442 = scmp.ne.s32.totalorder %s427, %s441
      %p443 = scmp.eq.s32.totalorder %s39, 0
      %p444 = por %p442, %p443
      %s446 = sadd.s32 %s445, 1
      %p449 = scmp.eq.s32.totalorder %s33, 1
      %p450 = scmp.ne.s32.totalorder %s445, %s447
      %p451 = scmp.eq.s32.totalorder %s33, 0
      %p452 = por %p450, %p451
      %p453 = scmp.ne.s32.totalorder %s445, %s447
      %p454 = scmp.eq.s32.totalorder %s38, 1
      %p455 = por %p453, %p454
      %p456 = scmp.ne.s32.totalorder %s447, %s448
      %p457 = scmp.eq.s32.totalorder %s38, 0
      %p458 = por %p456, %p457
      %p459 = scmp.ne.s32.totalorder %s447, %s448
      %p460 = scmp.eq.s32.totalorder %s39, 1
      %p461 = por %p459, %p460
      %p463 = scmp.ne.s32.totalorder %s448, %s462
      %p464 = scmp.eq.s32.totalorder %s39, 0
      %p465 = por %p463, %p464
      %s467 = sadd.s32 %s466, 1
      %p470 = scmp.eq.s32.totalorder %s33, 1
      %p471 = scmp.ne.s32.totalorder %s466, %s468
      %p472 = scmp.eq.s32.totalorder %s33, 0
      %p473 = por %p471, %p472
      %p474 = scmp.ne.s32.totalorder %s466, %s468
      %p475 = scmp.eq.s32.totalorder %s38, 1
      %p476 = por %p474, %p475
      %p477 = scmp.ne.s32.totalorder %s468, %s469
      %p478 = scmp.eq.s32.totalorder %s38, 0
      %p479 = por %p477, %p478
      %p480 = scmp.ne.s32.totalorder %s468, %s469
      %p481 = scmp.eq.s32.totalorder %s39, 1
      %p482 = por %p480, %p481
      %p484 = scmp.ne.s32.totalorder %s469, %s483
      %p485 = scmp.eq.s32.totalorder %s39, 0
      %p486 = por %p484, %p485
      %s488 = sadd.s32 %s487, 1
      %p491 = scmp.eq.s32.totalorder %s33, 1
      %p492 = scmp.ne.s32.totalorder %s487, %s489
      %p493 = scmp.eq.s32.totalorder %s33, 0
      %p494 = por %p492, %p493
      %p495 = scmp.ne.s32.totalorder %s487, %s489
      %p496 = scmp.eq.s32.totalorder %s38, 1
      %p497 = por %p495, %p496
      %p498 = scmp.ne.s32.totalorder %s489, %s490
      %p499 = scmp.eq.s32.totalorder %s38, 0
      %p500 = por %p498, %p499
      %p501 = scmp.ne.s32.totalorder %s489, %s490
      %p502 = scmp.eq.s32.totalorder %s39, 1
      %p503 = por %p501, %p502
      %p505 = scmp.ne.s32.totalorder %s490, %s504
      %p506 = scmp.eq.s32.totalorder %s39, 0
      %p507 = por %p505, %p506
      %s509 = sadd.s32 %s508, 1
      %p512 = scmp.eq.s32.totalorder %s33, 1
      %p513 = scmp.ne.s32.totalorder %s508, %s510
      %p514 = scmp.eq.s32.totalorder %s33, 0
      %p515 = por %p513, %p514
      %p516 = scmp.ne.s32.totalorder %s508, %s510
      %p517 = scmp.eq.s32.totalorder %s38, 1
      %p518 = por %p516, %p517
      %p519 = scmp.ne.s32.totalorder %s510, %s511
      %p520 = scmp.eq.s32.totalorder %s38, 0
      %p521 = por %p519, %p520
      %p522 = scmp.ne.s32.totalorder %s510, %s511
      %p523 = scmp.eq.s32.totalorder %s39, 1
      %p524 = por %p522, %p523
      %p526 = scmp.ne.s32.totalorder %s511, %s525
      %p527 = scmp.eq.s32.totalorder %s39, 0
      %p528 = por %p526, %p527
      %s530 = sadd.s32 %s529, 1
      %p533 = scmp.eq.s32.totalorder %s33, 1
      %p534 = scmp.ne.s32.totalorder %s529, %s531
      %p535 = scmp.eq.s32.totalorder %s33, 0
      %p536 = por %p534, %p535
      %p537 = scmp.ne.s32.totalorder %s529, %s531
      %p538 = scmp.eq.s32.totalorder %s38, 1
      %p539 = por %p537, %p538
      %p540 = scmp.ne.s32.totalorder %s531, %s532
      %p541 = scmp.eq.s32.totalorder %s38, 0
      %p542 = por %p540, %p541
      %p543 = scmp.ne.s32.totalorder %s531, %s532
      %p544 = scmp.eq.s32.totalorder %s39, 1
      %p545 = por %p543, %p544
      %p547 = scmp.ne.s32.totalorder %s532, %s546
      %p548 = scmp.eq.s32.totalorder %s39, 0
      %p549 = por %p547, %p548
      %s550 = ssub.s32 %s33, %s40
      %p551 = scmp.eq.s32.totalorder %s550, 0
      %s553 = sadd.s32 %s552, 1
      %s554 = scalar_select %p551, %s552, %s553
      %p557 = pneg %p551
      %p558 = scmp.eq.s32.totalorder %s33, 1
      %p559 = por %p557, %p558
      %p560 = scmp.ne.s32.totalorder %s552, %s555
      %p561 = scmp.eq.s32.totalorder %s33, 0
      %p562 = por %p560, %p561
      %p563 = scmp.ne.s32.totalorder %s552, %s555
      %p564 = scmp.eq.s32.totalorder %s38, 1
      %p565 = por %p563, %p564
      %p566 = scmp.ne.s32.totalorder %s555, %s556
      %p567 = scmp.eq.s32.totalorder %s38, 0
      %p568 = por %p566, %p567
      %p569 = scmp.ne.s32.totalorder %s555, %s556
      %p570 = scmp.eq.s32.totalorder %s39, 1
      %p571 = por %p569, %p570
      %p573 = scmp.ne.s32.totalorder %s556, %s572
      %p574 = scmp.eq.s32.totalorder %s39, 0
      %p575 = por %p573, %p574
      %p576 = scmp.le.s32.totalorder 1, %s33
      %p577 = scmp.lt.s32.totalorder %s33, 3
      %p578 = pnand %p576, %p577
      %p579 = pneg %p578
      // Predicated region
      $region9: #{tpu_custom_call.1} parent=5 // pred_check
        _
      $region10: #{tpu_custom_call.1} parent=5 // pred_check_branch
        %581 = sbr.rel (%p578) target = $region12
      $region11: #{tpu_custom_call.1} parent=5 // pred_region
        %s582 = ssub.s32 %s33, 1
        // Predicated region
        $region13: #{tpu_custom_call.1} parent=11 // pred_check
          %p583 = pneg %p80
        $region14: #{tpu_custom_call.1} parent=11 // pred_check_branch
          %585 = sbr.rel (%p583) target = $region16
        $region15: #{tpu_custom_call.1} parent=11 // pred_region
          _
        $region16: #{tpu_custom_call.1} parent=11 // pred_fallthru
          _
        // Predicated region
        $region17: #{tpu_custom_call.1} parent=11 // pred_check
          %p586 = pneg %p101
        $region18: #{tpu_custom_call.1} parent=11 // pred_check_branch
          %588 = sbr.rel (%p586) target = $region20
        $region19: #{tpu_custom_call.1} parent=11 // pred_region
          _
        $region20: #{tpu_custom_call.1} parent=11 // pred_fallthru
          _
        // Predicated region
        $region21: #{tpu_custom_call.1} parent=11 // pred_check
          %p589 = pneg %p122
        $region22: #{tpu_custom_call.1} parent=11 // pred_check_branch
          %591 = sbr.rel (%p589) target = $region24
        $region23: #{tpu_custom_call.1} parent=11 // pred_region
          _
        $region24: #{tpu_custom_call.1} parent=11 // pred_fallthru
          _
        // Predicated region
        $region25: #{tpu_custom_call.1} parent=11 // pred_check
          %p592 = pneg %p143
        $region26: #{tpu_custom_call.1} parent=11 // pred_check_branch
          %594 = sbr.rel (%p592) target = $region28
        $region27: #{tpu_custom_call.1} parent=11 // pred_region
          _
        $region28: #{tpu_custom_call.1} parent=11 // pred_fallthru
          _
        // Predicated region
        $region29: #{tpu_custom_call.1} parent=11 // pred_check
          %p595 = pneg %p164
        $region30: #{tpu_custom_call.1} parent=11 // pred_check_branch
          %597 = sbr.rel (%p595) target = $region32
        $region31: #{tpu_custom_call.1} parent=11 // pred_region
          _
        $region32: #{tpu_custom_call.1} parent=11 // pred_fallthru
          _
        // Predicated region
        $region33: #{tpu_custom_call.1} parent=11 // pred_check
          %p598 = pneg %p185
        $region34: #{tpu_custom_call.1} parent=11 // pred_check_branch
          %600 = sbr.rel (%p598) target = $region36
        $region35: #{tpu_custom_call.1} parent=11 // pred_region
          _
        $region36: #{tpu_custom_call.1} parent=11 // pred_fallthru
          _
        // Predicated region
        $region37: #{tpu_custom_call.1} parent=11 // pred_check
          %p601 = pneg %p206
        $region38: #{tpu_custom_call.1} parent=11 // pred_check_branch
          %603 = sbr.rel (%p601) target = $region40
        $region39: #{tpu_custom_call.1} parent=11 // pred_region
          _
        $region40: #{tpu_custom_call.1} parent=11 // pred_fallthru
          _
        // Predicated region
        $region41: #{tpu_custom_call.1} parent=11 // pred_check
          %p604 = pneg %p227
        $region42: #{tpu_custom_call.1} parent=11 // pred_check_branch
          %606 = sbr.rel (%p604) target = $region44
        $region43: #{tpu_custom_call.1} parent=11 // pred_region
          _
        $region44: #{tpu_custom_call.1} parent=11 // pred_fallthru
          _
        // Predicated region
        $region45: #{tpu_custom_call.1} parent=11 // pred_check
          %p607 = pneg %p248
        $region46: #{tpu_custom_call.1} parent=11 // pred_check_branch
          %609 = sbr.rel (%p607) target = $region48
        $region47: #{tpu_custom_call.1} parent=11 // pred_region
          _
        $region48: #{tpu_custom_call.1} parent=11 // pred_fallthru
          _
        // Predicated region
        $region49: #{tpu_custom_call.1} parent=11 // pred_check
          %p610 = pneg %p269
        $region50: #{tpu_custom_call.1} parent=11 // pred_check_branch
          %612 = sbr.rel (%p610) target = $region52
        $region51: #{tpu_custom_call.1} parent=11 // pred_region
          _
        $region52: #{tpu_custom_call.1} parent=11 // pred_fallthru
          _
        // Predicated region
        $region53: #{tpu_custom_call.1} parent=11 // pred_check
          %p613 = pneg %p290
        $region54: #{tpu_custom_call.1} parent=11 // pred_check_branch
          %615 = sbr.rel (%p613) target = $region56
        $region55: #{tpu_custom_call.1} parent=11 // pred_region
          _
        $region56: #{tpu_custom_call.1} parent=11 // pred_fallthru
          _
        // Predicated region
        $region57: #{tpu_custom_call.1} parent=11 // pred_check
          %p616 = pneg %p311
        $region58: #{tpu_custom_call.1} parent=11 // pred_check_branch
          %618 = sbr.rel (%p616) target = $region60
        $region59: #{tpu_custom_call.1} parent=11 // pred_region
          _
        $region60: #{tpu_custom_call.1} parent=11 // pred_fallthru
          _
        // Predicated region
        $region61: #{tpu_custom_call.1} parent=11 // pred_check
          %p619 = pneg %p332
        $region62: #{tpu_custom_call.1} parent=11 // pred_check_branch
          %621 = sbr.rel (%p619) target = $region64
        $region63: #{tpu_custom_call.1} parent=11 // pred_region
          _
        $region64: #{tpu_custom_call.1} parent=11 // pred_fallthru
          _
        // Predicated region
        $region65: #{tpu_custom_call.1} parent=11 // pred_check
          %p622 = pneg %p353
        $region66: #{tpu_custom_call.1} parent=11 // pred_check_branch
          %624 = sbr.rel (%p622) target = $region68
        $region67: #{tpu_custom_call.1} parent=11 // pred_region
          _
        $region68: #{tpu_custom_call.1} parent=11 // pred_fallthru
          _
        // Predicated region
        $region69: #{tpu_custom_call.1} parent=11 // pred_check
          %p625 = pneg %p374
        $region70: #{tpu_custom_call.1} parent=11 // pred_check_branch
          %627 = sbr.rel (%p625) target = $region72
        $region71: #{tpu_custom_call.1} parent=11 // pred_region
          _
        $region72: #{tpu_custom_call.1} parent=11 // pred_fallthru
          _
        // Predicated region
        $region73: #{tpu_custom_call.1} parent=11 // pred_check
          %p628 = pneg %p395
        $region74: #{tpu_custom_call.1} parent=11 // pred_check_branch
          %630 = sbr.rel (%p628) target = $region76
        $region75: #{tpu_custom_call.1} parent=11 // pred_region
          _
        $region76: #{tpu_custom_call.1} parent=11 // pred_fallthru
          _
        // Predicated region
        $region77: #{tpu_custom_call.1} parent=11 // pred_check
          %p631 = pneg %p416
        $region78: #{tpu_custom_call.1} parent=11 // pred_check_branch
          %633 = sbr.rel (%p631) target = $region80
        $region79: #{tpu_custom_call.1} parent=11 // pred_region
          _
        $region80: #{tpu_custom_call.1} parent=11 // pred_fallthru
          _
        // Predicated region
        $region81: #{tpu_custom_call.1} parent=11 // pred_check
          %p634 = pneg %p437
        $region82: #{tpu_custom_call.1} parent=11 // pred_check_branch
          %636 = sbr.rel (%p634) target = $region84
        $region83: #{tpu_custom_call.1} parent=11 // pred_region
          _
        $region84: #{tpu_custom_call.1} parent=11 // pred_fallthru
          _
        // Predicated region
        $region85: #{tpu_custom_call.1} parent=11 // pred_check
          %p637 = pneg %p458
        $region86: #{tpu_custom_call.1} parent=11 // pred_check_branch
          %639 = sbr.rel (%p637) target = $region88
        $region87: #{tpu_custom_call.1} parent=11 // pred_region
          _
        $region88: #{tpu_custom_call.1} parent=11 // pred_fallthru
          _
        // Predicated region
        $region89: #{tpu_custom_call.1} parent=11 // pred_check
          %p640 = pneg %p479
        $region90: #{tpu_custom_call.1} parent=11 // pred_check_branch
          %642 = sbr.rel (%p640) target = $region92
        $region91: #{tpu_custom_call.1} parent=11 // pred_region
          _
        $region92: #{tpu_custom_call.1} parent=11 // pred_fallthru
          _
        // Predicated region
        $region93: #{tpu_custom_call.1} parent=11 // pred_check
          %p643 = pneg %p500
        $region94: #{tpu_custom_call.1} parent=11 // pred_check_branch
          %645 = sbr.rel (%p643) target = $region96
        $region95: #{tpu_custom_call.1} parent=11 // pred_region
          _
        $region96: #{tpu_custom_call.1} parent=11 // pred_fallthru
          _
        // Predicated region
        $region97: #{tpu_custom_call.1} parent=11 // pred_check
          %p646 = pneg %p521
        $region98: #{tpu_custom_call.1} parent=11 // pred_check_branch
          %648 = sbr.rel (%p646) target = $region100
        $region99: #{tpu_custom_call.1} parent=11 // pred_region
          _
        $region100: #{tpu_custom_call.1} parent=11 // pred_fallthru
          _
        // Predicated region
        $region101: #{tpu_custom_call.1} parent=11 // pred_check
          %p649 = pneg %p542
        $region102: #{tpu_custom_call.1} parent=11 // pred_check_branch
          %651 = sbr.rel (%p649) target = $region104
        $region103: #{tpu_custom_call.1} parent=11 // pred_region
          _
        $region104: #{tpu_custom_call.1} parent=11 // pred_fallthru
          _
      $region12: #{tpu_custom_call.1} parent=5 // pred_fallthru
        _
      %p652 = scmp.lt.s32.totalorder %s33, 2
      // Predicated region
      $region105: #{tpu_custom_call.1} parent=5 // pred_check
        %p653 = pneg %p652
      $region106: #{tpu_custom_call.1} parent=5 // pred_check_branch
        %655 = sbr.rel (%p653) target = $region108
      $region107: #{tpu_custom_call.1} parent=5 // pred_region
        // Predicated region
        $region109: #{tpu_custom_call.1} parent=107 // pred_check
          %p656 = pneg %p53
        $region110: #{tpu_custom_call.1} parent=107 // pred_check_branch
          %658 = sbr.rel (%p656) target = $region112
        $region111: #{tpu_custom_call.1} parent=107 // pred_region
          %p659 = scmp.lt.s32.totalorder %s33, 1
          %s660 = scalar_select %p659, %s33, 1
          %s661 = smul.addr %s660, 2
          %s662 = smul.addr %s661, 4
          %s663 = scalar_lea.vmem %s0, %s662
        $region112: #{tpu_custom_call.1} parent=107 // pred_fallthru
          _
      $region108: #{tpu_custom_call.1} parent=5 // pred_fallthru
        _
      %p664 = scmp.le.s32.totalorder 1, %s33
      %p665 = scmp.lt.s32.totalorder %s33, 3
      %p666 = pnand %p664, %p665
      %p667 = pneg %p666
      // Predicated region
      $region113: #{tpu_custom_call.1} parent=5 // pred_check
        _
      $region114: #{tpu_custom_call.1} parent=5 // pred_check_branch
        %669 = sbr.rel (%p666) target = $region116
      $region115: #{tpu_custom_call.1} parent=5 // pred_region
        %s670 = ssub.s32 %s33, 1
        %p671 = scmp.lt.s32.totalorder %s38, 1
        %s672 = scalar_select %p671, %s38, 1
        %s673 = smul.addr %s672, 2
        %s674 = smul.addr %s673, 4
        %s675 = scalar_lea.vmem %s0, %s674
        %p676 = pneg %p59
        %p677 = pneg %p56
        %p678 = pneg %p80
        %p679 = pneg %p77
        %p680 = pneg %p101
        %p681 = pneg %p98
        %p682 = pneg %p122
        %p683 = pneg %p119
        %p684 = pneg %p143
        %p685 = pneg %p140
        %p686 = pneg %p164
        %p687 = pneg %p161
        %p688 = pneg %p185
        %p689 = pneg %p182
        %p690 = pneg %p206
        %p691 = pneg %p203
        %p692 = pneg %p227
        %p693 = pneg %p224
        %p694 = pneg %p248
        %p695 = pneg %p245
        %p696 = pneg %p269
        %p697 = pneg %p266
        %p698 = pneg %p290
        %p699 = pneg %p287
        %p700 = pneg %p311
        %p701 = pneg %p308
        %p702 = pneg %p332
        %p703 = pneg %p329
        %p704 = pneg %p353
        %p705 = pneg %p350
        %p706 = pneg %p374
        %p707 = pneg %p371
        %p708 = pneg %p395
        %p709 = pneg %p392
        %p710 = pneg %p416
        %p711 = pneg %p413
        %p712 = pneg %p437
        %p713 = pneg %p434
        %p714 = pneg %p458
        %p715 = pneg %p455
        %p716 = pneg %p479
        %p717 = pneg %p476
        %p718 = pneg %p500
        %p719 = pneg %p497
        %p720 = pneg %p521
        %p721 = pneg %p518
        %p722 = pneg %p542
        %p723 = pneg %p539
        %p724 = pneg %p568
        %p725 = pneg %p565
        %s726 = sand.u32 %s555, 1
        %s727 = scalar_lea.sflag [#allocation4], %s726
        %s728 = sand.u32 %s555, 1
        %s729 = smul.addr %s728, 16
        %s730 = scalar_lea.vmem [#allocation3], %s729
        %p731 = scmp.lt.s32.totalorder %s38, 1
        %s732 = scalar_select %p731, %s38, 1
        %s733 = smul.addr %s732, 2
        %s734 = smul.addr %s733, 4
        %s735 = scalar_lea.vmem %s0, %s734
        %v736 = vld [vmem:[%s1] sm:$0x3]
        %737 = vst [vmem:[#allocation2] sm:$0xff] 0.0
        %738 = vst [vmem:[#allocation2 + $0x18] sm:$0xff] 0.0
        %v739 = vld [vmem:[%s735] sm:$0xff]
        %v740 = vld [vmem:[%s2] sm:$0xff]
        %v741 = vld [vmem:[%s2 + $0x8] sm:$0xff]
        %v742 = vld [vmem:[%s2 + $0x10] sm:$0xff]
        %v743 = vld [vmem:[%s2 + $0x18] sm:$0xff]
        %v744 = vld [vmem:[%s2 + $0x20] sm:$0xff]
        %v745 = vld [vmem:[%s3] sm:$0xff]
        %v746 = vld [vmem:[%s3 + $0x8] sm:$0xff]
        %v747 = vld [vmem:[%s3 + $0x10] sm:$0xff]
        %v748 = vld [vmem:[%s3 + $0x18] sm:$0xff]
        %v749 = vld [vmem:[%s3 + $0x20] sm:$0xff]
        %751 = vset.pattern.permute.xlu0 0
        %752 = vperm.xlu0 %751, %v745
        %v753 = vpop.permute.xlu0 %752
        %756 = vset.pattern.permute.xlu0 0
        %757 = vperm.xlu0 %756, %v746
        %v758 = vpop.permute.xlu0 %757
        %761 = vset.pattern.permute.xlu0 0
        %762 = vperm.xlu0 %761, %v747
        %v763 = vpop.permute.xlu0 %762
        %766 = vset.pattern.permute.xlu0 0
        %767 = vperm.xlu0 %766, %v748
        %v768 = vpop.permute.xlu0 %767
        %771 = vset.pattern.permute.xlu0 0
        %772 = vperm.xlu0 %771, %v749
        %v773 = vpop.permute.xlu0 %772
        %v776 = vcombine.high %v739, %v739
        %vm777 = vcmask 31744
        %v779 = vsel %vm777, %v740, 0
        %v782 = vsel %vm777, %v741, 0
        %v785 = vsel %vm777, %v742, 0
        %v788 = vsel %vm777, %v743, 0
        %v791 = vsel %vm777, %v744, 0
        %vm793 = vcmask 1043456
        %v794 = vsel %vm793, %v739, 0
        %v796 = vsel %vm793, %v776, 0
        %798 = vmatprep.subr.mxu0 0.0
        %799 = vmatpush1.msra.mxu0 0.0
        %800 = vmatprep.subr.mxu0 0.0
        %801 = vmatpush1.msra.mxu0 0.0
        %802 = vmatprep.subr.mxu0 0.0
        %803 = vmatpush1.msra.mxu0 0.0
        %804 = vmatprep.subr.mxu0 0.0
        %805 = vmatpush1.msra.mxu0 0.0
        %806 = vmatprep.subr.mxu0 0.0
        %807 = vmatpush1.msra.mxu0 0.0
        %808 = vmatprep.subr.mxu0 0.0
        %809 = vmatpush1.msra.mxu0 0.0
        %810 = vmatprep.subr.mxu0 0.0
        %811 = vmatpush1.msra.mxu0 0.0
        %812 = vmatprep.subr.mxu0 0.0
        %813 = vmatpush1.msra.mxu0 0.0
        %814 = vmatprep.subr.mxu0 0.0
        %815 = vmatpush1.msra.mxu0 0.0
        %816 = vmatprep.subr.mxu0 0.0
        %817 = vmatpush1.msra.mxu0 0.0
        %818 = vmatprep.subr.mxu0 0.0
        %819 = vmatpush1.msra.mxu0 0.0
        %820 = vmatprep.subr.mxu0 0.0
        %821 = vmatpush1.msra.mxu0 0.0
        %822 = vmatprep.subr.mxu0 0.0
        %823 = vmatpush1.msra.mxu0 0.0
        %824 = vmatprep.subr.mxu0 0.0
        %825 = vmatpush1.msra.mxu0 0.0
        %826 = vmatprep.subr.mxu0 0.0
        %827 = vmatpush1.msra.mxu0 0.0
        %828 = vmatprep.subr.mxu0 %v796
        %829 = vmatpush1.msra.mxu0 %v794
        %830 = vmatprep.subr.mxu0 0.0
        %831 = vmatpush2.msra.mxu0 0.0
        %832 = vmatprep.subr.mxu0 0.0
        %833 = vmatpush2.msra.mxu0 0.0
        %834 = vmatprep.subr.mxu0 0.0
        %835 = vmatpush2.msra.mxu0 0.0
        %836 = vmatprep.subr.mxu0 0.0
        %837 = vmatpush2.msra.mxu0 0.0
        %838 = vmatprep.subr.mxu0 0.0
        %839 = vmatpush2.msra.mxu0 0.0
        %840 = vmatprep.subr.mxu0 0.0
        %841 = vmatpush2.msra.mxu0 0.0
        %842 = vmatprep.subr.mxu0 0.0
        %843 = vmatpush2.msra.mxu0 0.0
        %844 = vmatprep.subr.mxu0 0.0
        %845 = vmatpush2.msra.mxu0 0.0
        %846 = vmatprep.subr.mxu0 0.0
        %847 = vmatpush2.msra.mxu0 0.0
        %848 = vmatprep.subr.mxu0 0.0
        %849 = vmatpush2.msra.mxu0 0.0
        %850 = vmatprep.subr.mxu0 0.0
        %851 = vmatpush2.msra.mxu0 0.0
        %852 = vmatprep.subr.mxu0 0.0
        %853 = vmatpush2.msra.mxu0 0.0
        %854 = vmatprep.subr.mxu0 0.0
        %855 = vmatpush2.msra.mxu0 0.0
        %856 = vmatprep.subr.mxu0 0.0
        %857 = vmatpush2.msra.mxu0 0.0
        %858 = vmatprep.subr.mxu0 0.0
        %859 = vmatpush2.msra.mxu0 0.0
        %860 = vmatprep.subr.mxu0 0.0
        %861 = vmatpush2.msra.mxu0 0.0
        %862 = vmatprep.mubr.f32.mxu0 0.0
        %863 = vmatmul.mubr.f32.gmra.mxu0 %v779
        %v864 = vpop.f32.mrf.mxu0
        %v865 = vadd.f32 %v753, %v864
        %v866 = vpop.f32.mrf.mxu0
        %v867 = vadd.f32 %v753, %v866
        %868 = vmatprep.mubr.f32.mxu0 0.0
        %869 = vmatmul.mubr.f32.gmra.mxu0 %v782
        %v870 = vpop.f32.mrf.mxu0
        %v871 = vadd.f32 %v758, %v870
        %v872 = vpop.f32.mrf.mxu0
        %v873 = vadd.f32 %v758, %v872
        %874 = vmatprep.mubr.f32.mxu0 0.0
        %875 = vmatmul.mubr.f32.gmra.mxu0 %v785
        %v876 = vpop.f32.mrf.mxu0
        %v877 = vadd.f32 %v763, %v876
        %v878 = vpop.f32.mrf.mxu0
        %v879 = vadd.f32 %v763, %v878
        %880 = vmatprep.mubr.f32.mxu0 0.0
        %881 = vmatmul.mubr.f32.gmra.mxu0 %v788
        %v882 = vpop.f32.mrf.mxu0
        %v883 = vadd.f32 %v768, %v882
        %v884 = vpop.f32.mrf.mxu0
        %v885 = vadd.f32 %v768, %v884
        %886 = vmatprep.mubr.f32.mxu0 0.0
        %887 = vmatmul.mubr.f32.gmra.mxu0 %v791
        %v888 = vpop.f32.mrf.mxu0
        %v889 = vadd.f32 %v773, %v888
        %v890 = vpop.f32.mrf.mxu0
        %v891 = vadd.f32 %v773, %v890
        %892 = vdwg.mxu0
        %v893 = vld [vmem:[%s22] sm:$0xff]
        %894 = vst [vmem:[#allocation2 + $0x8] sm:$0xff] %v865
        %895 = vst [vmem:[#allocation2 + $0x10] sm:$0xff] %v867
        %v896 = vld [vmem:[#allocation2] sm:$0xff]
        %v897 = vld [vmem:[#allocation2 + $0x8] sm:$0xff]
        %v898 = vld [vmem:[#allocation2 + $0x10] sm:$0xff]
        %vm899 = vcmp.ge.s32.totalorder %v736, 1
        %v900 = vsel %vm899, 1, 0
        %v901 = vlaneseq
        %v902 = vshrl.u32 %v901, 7
        %v903 = vsub.s32 0, %v902
        %v904 = vrot.slane %v900, %v903
        %v905 = vlaneseq
        %v906 = vshrl.u32 %v905, 7
        %v907 = vsub.s32 1, %v906
        %v908 = vrot.slane %v900, %v907
        %vm909 = vcmp.eq.s32.totalorder %v904, 1
        %vm910 = vcmp.eq.s32.totalorder %v908, 1
        %914 = vrot.lane.b32.xlu0 %v896, 17
        %v915 = vpop.permute.xlu0 %914
        %916 = vrot.lane.b32.xlu0 %v897, 17
        %v917 = vpop.permute.xlu0 %916
        %918 = vrot.lane.b32.xlu0 %v898, 17
        %v919 = vpop.permute.xlu0 %918
        %vm920 = vcmask 138240
        %v921 = vsel %vm920, %v915, %v917
        %v922 = vsel %vm920, %v917, %v919
        %v925 = vsel %vm909, %v921, 0.0
        %v926 = vsel %vm910, %v922, 0.0
        %vm927 = vcmp.lt.s32.totalorder %v736, 15
        %v928 = vsel %vm927, 1, 0
        %v929 = vlaneseq
        %v930 = vshrl.u32 %v929, 7
        %v931 = vsub.s32 0, %v930
        %v932 = vrot.slane %v928, %v931
        %v933 = vlaneseq
        %v934 = vshrl.u32 %v933, 7
        %v935 = vsub.s32 1, %v934
        %v936 = vrot.slane %v928, %v935
        %vm937 = vcmp.eq.s32.totalorder %v932, 1
        %vm938 = vcmp.eq.s32.totalorder %v936, 1
        %939 = vrot.lane.b32.xlu0 %v896, 15
        %v940 = vpop.permute.xlu0 %939
        %941 = vrot.lane.b32.xlu0 %v897, 15
        %v942 = vpop.permute.xlu0 %941
        %943 = vrot.lane.b32.xlu0 %v898, 15
        %v944 = vpop.permute.xlu0 %943
        %vm945 = vcmask 121856
        %v946 = vsel %vm945, %v940, %v942
        %v947 = vsel %vm945, %v942, %v944
        %v950 = vsel %vm937, %v946, 0.0
        %v951 = vsel %vm938, %v947, 0.0
        %952 = vrot.lane.b32.xlu0 %v896, 1
        %v953 = vpop.permute.xlu0 %952
        %954 = vrot.lane.b32.xlu0 %v897, 1
        %v955 = vpop.permute.xlu0 %954
        %956 = vrot.lane.b32.xlu0 %v898, 1
        %v957 = vpop.permute.xlu0 %956
        %vm958 = vcmask 7168
        %v959 = vsel %vm958, %v953, %v955
        %v960 = vsel %vm958, %v955, %v957
        %v963 = vsel %vm909, %v959, 0.0
        %v964 = vsel %vm910, %v960, 0.0
        %v965 = vld [vmem:[#allocation2 + $0x8] sm:$0xff]
        %v966 = vld [vmem:[#allocation2 + $0x10] sm:$0xff]
        %v967 = vld [vmem:[#allocation2 + $0x18] sm:$0xff]
        %971 = vrot.lane.b32.xlu0 %v965, 127
        %v972 = vpop.permute.xlu0 %971
        %973 = vrot.lane.b32.xlu0 %v966, 127
        %v974 = vpop.permute.xlu0 %973
        %975 = vrot.lane.b32.xlu0 %v967, 127
        %v976 = vpop.permute.xlu0 %975
        %vm977 = vcmask 1039360
        %v978 = vsel %vm977, %v972, %v974
        %v979 = vsel %vm977, %v974, %v976
        %v982 = vsel %vm937, %v978, 0.0
        %v983 = vsel %vm938, %v979, 0.0
        %984 = vrot.lane.b32.xlu0 %v965, 113
        %v985 = vpop.permute.xlu0 %984
        %986 = vrot.lane.b32.xlu0 %v966, 113
        %v987 = vpop.permute.xlu0 %986
        %988 = vrot.lane.b32.xlu0 %v967, 113
        %v989 = vpop.permute.xlu0 %988
        %vm990 = vcmask 924672
        %v991 = vsel %vm990, %v985, %v987
        %v992 = vsel %vm990, %v987, %v989
        %v995 = vsel %vm909, %v991, 0.0
        %v996 = vsel %vm910, %v992, 0.0
        %997 = vrot.lane.b32.xlu0 %v965, 111
        %v998 = vpop.permute.xlu0 %997
        %999 = vrot.lane.b32.xlu0 %v966, 111
        %v1000 = vpop.permute.xlu0 %999
        %1001 = vrot.lane.b32.xlu0 %v967, 111
        %v1002 = vpop.permute.xlu0 %1001
        %vm1003 = vcmask 908288
        %v1004 = vsel %vm1003, %v998, %v1000
        %v1005 = vsel %vm1003, %v1000, %v1002
        %v1008 = vsel %vm937, %v1004, 0.0
        %v1009 = vsel %vm938, %v1005, 0.0
        %1010 = vrot.lane.b32.xlu0 %v896, 16
        %v1011 = vpop.permute.xlu0 %1010
        %1012 = vrot.lane.b32.xlu0 %v897, 16
        %v1013 = vpop.permute.xlu0 %1012
        %1014 = vrot.lane.b32.xlu0 %v898, 16
        %v1015 = vpop.permute.xlu0 %1014
        %vm1016 = vcmask 130048
        %v1017 = vsel %vm1016, %v1011, %v1013
        %v1018 = vsel %vm1016, %v1013, %v1015
        %1021 = vrot.lane.b32.xlu0 %v965, 112
        %v1022 = vpop.permute.xlu0 %1021
        %1023 = vrot.lane.b32.xlu0 %v966, 112
        %v1024 = vpop.permute.xlu0 %1023
        %1025 = vrot.lane.b32.xlu0 %v967, 112
        %v1026 = vpop.permute.xlu0 %1025
        %vm1027 = vcmask 916480
        %v1028 = vsel %vm1027, %v1022, %v1024
        %v1029 = vsel %vm1027, %v1024, %v1026
        %v1032 = vld [vmem:[%s4] sm:$0xff]
        %1033 = vst [vmem:[#allocation2 + $0x8] sm:$0xff] %v871
        %1034 = vst [vmem:[#allocation2 + $0x10] sm:$0xff] %v873
        %v1035 = vld [vmem:[#allocation2] sm:$0xff]
        %v1036 = vld [vmem:[#allocation2 + $0x8] sm:$0xff]
        %v1037 = vld [vmem:[#allocation2 + $0x10] sm:$0xff]
        %1041 = vrot.lane.b32.xlu0 %v1035, 1
        %v1042 = vpop.permute.xlu0 %1041
        %1043 = vrot.lane.b32.xlu0 %v1036, 1
        %v1044 = vpop.permute.xlu0 %1043
        %1045 = vrot.lane.b32.xlu0 %v1037, 1
        %v1046 = vpop.permute.xlu0 %1045
        %v1047 = vsel %vm958, %v1042, %v1044
        %v1048 = vsel %vm958, %v1044, %v1046
        %v1051 = vsel %vm909, %v1047, 0.0
        %v1052 = vsel %vm910, %v1048, 0.0
        %v1053 = vld [vmem:[#allocation2 + $0x8] sm:$0xff]
        %v1054 = vld [vmem:[#allocation2 + $0x10] sm:$0xff]
        %v1055 = vld [vmem:[#allocation2 + $0x18] sm:$0xff]
        %1059 = vrot.lane.b32.xlu0 %v1053, 127
        %v1060 = vpop.permute.xlu0 %1059
        %1061 = vrot.lane.b32.xlu0 %v1054, 127
        %v1062 = vpop.permute.xlu0 %1061
        %1063 = vrot.lane.b32.xlu0 %v1055, 127
        %v1064 = vpop.permute.xlu0 %1063
        %v1065 = vsel %vm977, %v1060, %v1062
        %v1066 = vsel %vm977, %v1062, %v1064
        %v1069 = vsel %vm937, %v1065, 0.0
        %v1070 = vsel %vm938, %v1066, 0.0
        %v1071 = vld [vmem:[%s5] sm:$0xff]
        %1073 = vset.pattern.permute.xlu0 0
        %1074 = vperm.xlu0 %1073, %v1071
        %v1075 = vpop.permute.xlu0 %1074
        %vm1077 = vcmask 195584
        %v1079 = vsel %vm1077, %v1032, 0
        %1081 = vmatprep.subr.mxu0 0.0
        %1082 = vmatpush1.msra.mxu0 0.0
        %1083 = vmatprep.subr.mxu0 0.0
        %1084 = vmatpush1.msra.mxu0 0.0
        %1085 = vmatprep.subr.mxu0 0.0
        %1086 = vmatpush1.msra.mxu0 0.0
        %1087 = vmatprep.subr.mxu0 0.0
        %1088 = vmatpush1.msra.mxu0 0.0
        %1089 = vmatprep.subr.mxu0 0.0
        %1090 = vmatpush1.msra.mxu0 0.0
        %1091 = vmatprep.subr.mxu0 0.0
        %1092 = vmatpush1.msra.mxu0 0.0
        %1093 = vmatprep.subr.mxu0 0.0
        %1094 = vmatpush1.msra.mxu0 0.0
        %1095 = vmatprep.subr.mxu0 0.0
        %1096 = vmatpush1.msra.mxu0 0.0
        %1097 = vmatprep.subr.mxu0 0.0
        %1098 = vmatpush1.msra.mxu0 0.0
        %1099 = vmatprep.subr.mxu0 0.0
        %1100 = vmatpush1.msra.mxu0 0.0
        %1101 = vmatprep.subr.mxu0 0.0
        %1102 = vmatpush1.msra.mxu0 0.0
        %1103 = vmatprep.subr.mxu0 0.0
        %1104 = vmatpush1.msra.mxu0 0.0
        %1105 = vmatprep.subr.mxu0 0.0
        %1106 = vmatpush1.msra.mxu0 0.0
        %1107 = vmatprep.subr.mxu0 %v1070
        %1108 = vmatpush1.msra.mxu0 %v1069
        %1109 = vmatprep.subr.mxu0 %v1037
        %1110 = vmatpush1.msra.mxu0 %v1036
        %1111 = vmatprep.subr.mxu0 %v1052
        %1112 = vmatpush1.msra.mxu0 %v1051
        %1113 = vmatprep.subr.mxu0 0.0
        %1114 = vmatpush2.msra.mxu0 0.0
        %1115 = vmatprep.subr.mxu0 0.0
        %1116 = vmatpush2.msra.mxu0 0.0
        %1117 = vmatprep.subr.mxu0 0.0
        %1118 = vmatpush2.msra.mxu0 0.0
        %1119 = vmatprep.subr.mxu0 0.0
        %1120 = vmatpush2.msra.mxu0 0.0
        %1121 = vmatprep.subr.mxu0 0.0
        %1122 = vmatpush2.msra.mxu0 0.0
        %1123 = vmatprep.subr.mxu0 0.0
        %1124 = vmatpush2.msra.mxu0 0.0
        %1125 = vmatprep.subr.mxu0 0.0
        %1126 = vmatpush2.msra.mxu0 0.0
        %1127 = vmatprep.subr.mxu0 0.0
        %1128 = vmatpush2.msra.mxu0 0.0
        %1129 = vmatprep.subr.mxu0 0.0
        %1130 = vmatpush2.msra.mxu0 0.0
        %1131 = vmatprep.subr.mxu0 0.0
        %1132 = vmatpush2.msra.mxu0 0.0
        %1133 = vmatprep.subr.mxu0 0.0
        %1134 = vmatpush2.msra.mxu0 0.0
        %1135 = vmatprep.subr.mxu0 0.0
        %1136 = vmatpush2.msra.mxu0 0.0
        %1137 = vmatprep.subr.mxu0 0.0
        %1138 = vmatpush2.msra.mxu0 0.0
        %1139 = vmatprep.subr.mxu0 0.0
        %1140 = vmatpush2.msra.mxu0 0.0
        %1141 = vmatprep.subr.mxu0 0.0
        %1142 = vmatpush2.msra.mxu0 0.0
        %1143 = vmatprep.subr.mxu0 0.0
        %1144 = vmatpush2.msra.mxu0 0.0
        %1145 = vmatprep.mubr.f32.mxu0 0.0
        %1146 = vmatmul.mubr.f32.gmra.mxu0 %v1079
        %v1147 = vpop.f32.mrf.mxu0
        %v1148 = vadd.f32 %v1075, %v1147
        %v1149 = vpop.f32.mrf.mxu0
        %v1150 = vadd.f32 %v1075, %v1149
        %1151 = vdwg.mxu0
        %v1152 = vld [vmem:[%s6] sm:$0xff]
        %1153 = vst [vmem:[#allocation2 + $0x8] sm:$0xff] %v1148
        %1154 = vst [vmem:[#allocation2 + $0x10] sm:$0xff] %v1150
        %v1155 = vld [vmem:[#allocation2] sm:$0xff]
        %v1156 = vld [vmem:[#allocation2 + $0x8] sm:$0xff]
        %v1157 = vld [vmem:[#allocation2 + $0x10] sm:$0xff]
        %v1158 = vld [vmem:[#allocation2 + $0x8] sm:$0xff]
        %v1159 = vld [vmem:[#allocation2 + $0x10] sm:$0xff]
        %v1160 = vld [vmem:[#allocation2 + $0x18] sm:$0xff]
        %1163 = vrot.lane.b32.xlu0 %v1156, 112
        %v1164 = vpop.permute.xlu0 %1163
        %1165 = vrot.lane.b32.xlu0 %v1157, 112
        %v1166 = vpop.permute.xlu0 %1165
        %v1167 = vsel %vm1027, %v1164, %v1166
        %1171 = vrot.lane.b32.xlu0 %v1158, 96
        %v1172 = vpop.permute.xlu0 %1171
        %1173 = vrot.lane.b32.xlu0 %v1159, 96
        %v1174 = vpop.permute.xlu0 %1173
        %1175 = vrot.lane.b32.xlu0 %v1160, 96
        %v1176 = vpop.permute.xlu0 %1175
        %vm1177 = vcmask 785408
        %v1178 = vsel %vm1177, %v1172, %v1174
        %v1179 = vsel %vm1177, %v1174, %v1176
        %v1180 = vld [vmem:[%s7] sm:$0xff]
        %1182 = vset.pattern.permute.xlu0 0
        %1183 = vperm.xlu0 %1182, %v1180
        %v1184 = vpop.permute.xlu0 %1183
        %1187 = vrot.lane.b32.xlu0 %v1155, 16
        %v1188 = vpop.permute.xlu0 %1187
        %1189 = vrot.lane.b32.xlu0 %v1156, 16
        %v1190 = vpop.permute.xlu0 %1189
        %1191 = vrot.lane.b32.xlu0 %v1157, 16
        %v1192 = vpop.permute.xlu0 %1191
        %1193 = vrot.lane.b32.xlu0 %v1164, 16
        %v1194 = vpop.permute.xlu0 %1193
        %1195 = vrot.lane.b32.xlu0 %v1167, 16
        %v1196 = vpop.permute.xlu0 %1195
        %1197 = vrot.lane.b32.xlu0 %v1166, 16
        %v1198 = vpop.permute.xlu0 %1197
        %1199 = vrot.lane.b32.xlu0 %v1172, 16
        %v1200 = vpop.permute.xlu0 %1199
        %1201 = vrot.lane.b32.xlu0 %v1178, 16
        %v1202 = vpop.permute.xlu0 %1201
        %1203 = vrot.lane.b32.xlu0 %v1179, 16
        %v1204 = vpop.permute.xlu0 %1203
        %v1205 = vsel %vm1016, %v1188, %v1190
        %v1206 = vsel %vm1016, %v1190, %v1192
        %v1207 = vsel %vm1016, %v1194, %v1196
        %v1208 = vsel %vm1016, %v1196, %v1198
        %v1209 = vsel %vm1016, %v1200, %v1202
        %v1210 = vsel %vm1016, %v1202, %v1204
        %v1218 = vsel %vm1077, %v1152, 0
        %1220 = vmatprep.subr.mxu0 0.0
        %1221 = vmatpush1.msra.mxu0 0.0
        %1222 = vmatprep.subr.mxu0 0.0
        %1223 = vmatpush1.msra.mxu0 0.0
        %1224 = vmatprep.subr.mxu0 0.0
        %1225 = vmatpush1.msra.mxu0 0.0
        %1226 = vmatprep.subr.mxu0 0.0
        %1227 = vmatpush1.msra.mxu0 0.0
        %1228 = vmatprep.subr.mxu0 0.0
        %1229 = vmatpush1.msra.mxu0 0.0
        %1230 = vmatprep.subr.mxu0 0.0
        %1231 = vmatpush1.msra.mxu0 0.0
        %1232 = vmatprep.subr.mxu0 0.0
        %1233 = vmatpush1.msra.mxu0 0.0
        %1234 = vmatprep.subr.mxu0 0.0
        %1235 = vmatpush1.msra.mxu0 0.0
        %1236 = vmatprep.subr.mxu0 0.0
        %1237 = vmatpush1.msra.mxu0 0.0
        %1238 = vmatprep.subr.mxu0 0.0
        %1239 = vmatpush1.msra.mxu0 0.0
        %1240 = vmatprep.subr.mxu0 0.0
        %1241 = vmatpush1.msra.mxu0 0.0
        %1242 = vmatprep.subr.mxu0 0.0
        %1243 = vmatpush1.msra.mxu0 0.0
        %1244 = vmatprep.subr.mxu0 0.0
        %1245 = vmatpush1.msra.mxu0 0.0
        %1246 = vmatprep.subr.mxu0 %v1210
        %1247 = vmatpush1.msra.mxu0 %v1209
        %1248 = vmatprep.subr.mxu0 %v1208
        %1249 = vmatpush1.msra.mxu0 %v1207
        %1250 = vmatprep.subr.mxu0 %v1206
        %1251 = vmatpush1.msra.mxu0 %v1205
        %1252 = vmatprep.subr.mxu0 0.0
        %1253 = vmatpush2.msra.mxu0 0.0
        %1254 = vmatprep.subr.mxu0 0.0
        %1255 = vmatpush2.msra.mxu0 0.0
        %1256 = vmatprep.subr.mxu0 0.0
        %1257 = vmatpush2.msra.mxu0 0.0
        %1258 = vmatprep.subr.mxu0 0.0
        %1259 = vmatpush2.msra.mxu0 0.0
        %1260 = vmatprep.subr.mxu0 0.0
        %1261 = vmatpush2.msra.mxu0 0.0
        %1262 = vmatprep.subr.mxu0 0.0
        %1263 = vmatpush2.msra.mxu0 0.0
        %1264 = vmatprep.subr.mxu0 0.0
        %1265 = vmatpush2.msra.mxu0 0.0
        %1266 = vmatprep.subr.mxu0 0.0
        %1267 = vmatpush2.msra.mxu0 0.0
        %1268 = vmatprep.subr.mxu0 0.0
        %1269 = vmatpush2.msra.mxu0 0.0
        %1270 = vmatprep.subr.mxu0 0.0
        %1271 = vmatpush2.msra.mxu0 0.0
        %1272 = vmatprep.subr.mxu0 0.0
        %1273 = vmatpush2.msra.mxu0 0.0
        %1274 = vmatprep.subr.mxu0 0.0
        %1275 = vmatpush2.msra.mxu0 0.0
        %1276 = vmatprep.subr.mxu0 0.0
        %1277 = vmatpush2.msra.mxu0 0.0
        %1278 = vmatprep.subr.mxu0 0.0
        %1279 = vmatpush2.msra.mxu0 0.0
        %1280 = vmatprep.subr.mxu0 0.0
        %1281 = vmatpush2.msra.mxu0 0.0
        %1282 = vmatprep.subr.mxu0 0.0
        %1283 = vmatpush2.msra.mxu0 0.0
        %1284 = vmatprep.mubr.f32.mxu0 0.0
        %1285 = vmatmul.mubr.f32.gmra.mxu0 %v1218
        %v1286 = vpop.f32.mrf.mxu0
        %v1287 = vadd.f32 %v1184, %v1286
        %v1288 = vpop.f32.mrf.mxu0
        %v1289 = vadd.f32 %v1184, %v1288
        %1290 = vdwg.mxu0
        %v1291 = vld [vmem:[%s8] sm:$0xff]
        %1292 = vst [vmem:[#allocation2 + $0x8] sm:$0xff] %v1287
        %1293 = vst [vmem:[#allocation2 + $0x10] sm:$0xff] %v1289
        %v1294 = vld [vmem:[#allocation2] sm:$0xff]
        %v1295 = vld [vmem:[#allocation2 + $0x8] sm:$0xff]
        %v1296 = vld [vmem:[#allocation2 + $0x10] sm:$0xff]
        %vm1297 = vcmp.ge.s32.totalorder %v736, 3
        %v1298 = vsel %vm1297, 1, 0
        %v1299 = vlaneseq
        %v1300 = vshrl.u32 %v1299, 7
        %v1301 = vsub.s32 0, %v1300
        %v1302 = vrot.slane %v1298, %v1301
        %v1303 = vlaneseq
        %v1304 = vshrl.u32 %v1303, 7
        %v1305 = vsub.s32 1, %v1304
        %v1306 = vrot.slane %v1298, %v1305
        %vm1307 = vcmp.eq.s32.totalorder %v1302, 1
        %vm1308 = vcmp.eq.s32.totalorder %v1306, 1
        %1312 = vrot.lane.b32.xlu0 %v1294, 51
        %v1313 = vpop.permute.xlu0 %1312
        %1314 = vrot.lane.b32.xlu0 %v1295, 51
        %v1315 = vpop.permute.xlu0 %1314
        %1316 = vrot.lane.b32.xlu0 %v1296, 51
        %v1317 = vpop.permute.xlu0 %1316
        %vm1318 = vcmask 416768
        %v1319 = vsel %vm1318, %v1313, %v1315
        %v1320 = vsel %vm1318, %v1315, %v1317
        %v1323 = vsel %vm1307, %v1319, 0.0
        %v1324 = vsel %vm1308, %v1320, 0.0
        %vm1325 = vcmp.lt.s32.totalorder %v736, 13
        %v1326 = vsel %vm1325, 1, 0
        %v1327 = vlaneseq
        %v1328 = vshrl.u32 %v1327, 7
        %v1329 = vsub.s32 0, %v1328
        %v1330 = vrot.slane %v1326, %v1329
        %v1331 = vlaneseq
        %v1332 = vshrl.u32 %v1331, 7
        %v1333 = vsub.s32 1, %v1332
        %v1334 = vrot.slane %v1326, %v1333
        %vm1335 = vcmp.eq.s32.totalorder %v1330, 1
        %vm1336 = vcmp.eq.s32.totalorder %v1334, 1
        %1337 = vrot.lane.b32.xlu0 %v1294, 45
        %v1338 = vpop.permute.xlu0 %1337
        %1339 = vrot.lane.b32.xlu0 %v1295, 45
        %v1340 = vpop.permute.xlu0 %1339
        %1341 = vrot.lane.b32.xlu0 %v1296, 45
        %v1342 = vpop.permute.xlu0 %1341
        %vm1343 = vcmask 367616
        %v1344 = vsel %vm1343, %v1338, %v1340
        %v1345 = vsel %vm1343, %v1340, %v1342
        %v1348 = vsel %vm1335, %v1344, 0.0
        %v1349 = vsel %vm1336, %v1345, 0.0
        %1350 = vrot.lane.b32.xlu0 %v1294, 3
        %v1351 = vpop.permute.xlu0 %1350
        %1352 = vrot.lane.b32.xlu0 %v1295, 3
        %v1353 = vpop.permute.xlu0 %1352
        %1354 = vrot.lane.b32.xlu0 %v1296, 3
        %v1355 = vpop.permute.xlu0 %1354
        %vm1356 = vcmask 23552
        %v1357 = vsel %vm1356, %v1351, %v1353
        %v1358 = vsel %vm1356, %v1353, %v1355
        %v1361 = vsel %vm1307, %v1357, 0.0
        %v1362 = vsel %vm1308, %v1358, 0.0
        %v1363 = vld [vmem:[#allocation2 + $0x8] sm:$0xff]
        %v1364 = vld [vmem:[#allocation2 + $0x10] sm:$0xff]
        %v1365 = vld [vmem:[#allocation2 + $0x18] sm:$0xff]
        %1369 = vrot.lane.b32.xlu0 %v1363, 125
        %v1370 = vpop.permute.xlu0 %1369
        %1371 = vrot.lane.b32.xlu0 %v1364, 125
        %v1372 = vpop.permute.xlu0 %1371
        %1373 = vrot.lane.b32.xlu0 %v1365, 125
        %v1374 = vpop.permute.xlu0 %1373
        %vm1375 = vcmask 1022976
        %v1376 = vsel %vm1375, %v1370, %v1372
        %v1377 = vsel %vm1375, %v1372, %v1374
        %v1380 = vsel %vm1335, %v1376, 0.0
        %v1381 = vsel %vm1336, %v1377, 0.0
        %1382 = vrot.lane.b32.xlu0 %v1363, 83
        %v1383 = vpop.permute.xlu0 %1382
        %1384 = vrot.lane.b32.xlu0 %v1364, 83
        %v1385 = vpop.permute.xlu0 %1384
        %1386 = vrot.lane.b32.xlu0 %v1365, 83
        %v1387 = vpop.permute.xlu0 %1386
        %vm1388 = vcmask 678912
        %v1389 = vsel %vm1388, %v1383, %v1385
        %v1390 = vsel %vm1388, %v1385, %v1387
        %v1393 = vsel %vm1307, %v1389, 0.0
        %v1394 = vsel %vm1308, %v1390, 0.0
        %1395 = vrot.lane.b32.xlu0 %v1363, 77
        %v1396 = vpop.permute.xlu0 %1395
        %1397 = vrot.lane.b32.xlu0 %v1364, 77
        %v1398 = vpop.permute.xlu0 %1397
        %1399 = vrot.lane.b32.xlu0 %v1365, 77
        %v1400 = vpop.permute.xlu0 %1399
        %vm1401 = vcmask 629760
        %v1402 = vsel %vm1401, %v1396, %v1398
        %v1403 = vsel %vm1401, %v1398, %v1400
        %v1406 = vsel %vm1335, %v1402, 0.0
        %v1407 = vsel %vm1336, %v1403, 0.0
        %1408 = vrot.lane.b32.xlu0 %v1294, 48
        %v1409 = vpop.permute.xlu0 %1408
        %1410 = vrot.lane.b32.xlu0 %v1295, 48
        %v1411 = vpop.permute.xlu0 %1410
        %1412 = vrot.lane.b32.xlu0 %v1296, 48
        %v1413 = vpop.permute.xlu0 %1412
        %vm1414 = vcmask 392192
        %v1415 = vsel %vm1414, %v1409, %v1411
        %v1416 = vsel %vm1414, %v1411, %v1413
        %1419 = vrot.lane.b32.xlu0 %v1363, 80
        %v1420 = vpop.permute.xlu0 %1419
        %1421 = vrot.lane.b32.xlu0 %v1364, 80
        %v1422 = vpop.permute.xlu0 %1421
        %1423 = vrot.lane.b32.xlu0 %v1365, 80
        %v1424 = vpop.permute.xlu0 %1423
        %vm1425 = vcmask 654336
        %v1426 = vsel %vm1425, %v1420, %v1422
        %v1427 = vsel %vm1425, %v1422, %v1424
        %v1430 = vld [vmem:[%s9] sm:$0xff]
        %1432 = vset.pattern.permute.xlu0 0
        %1433 = vperm.xlu0 %1432, %v1430
        %v1434 = vpop.permute.xlu0 %1433
        %vm1436 = vcmask 588800
        %v1438 = vsel %vm1436, %v1291, 0
        %1440 = vmatprep.subr.mxu0 0.0
        %1441 = vmatpush1.msra.mxu0 0.0
        %1442 = vmatprep.subr.mxu0 0.0
        %1443 = vmatpush1.msra.mxu0 0.0
        %1444 = vmatprep.subr.mxu0 0.0
        %1445 = vmatpush1.msra.mxu0 0.0
        %1446 = vmatprep.subr.mxu0 0.0
        %1447 = vmatpush1.msra.mxu0 0.0
        %1448 = vmatprep.subr.mxu0 0.0
        %1449 = vmatpush1.msra.mxu0 0.0
        %1450 = vmatprep.subr.mxu0 0.0
        %1451 = vmatpush1.msra.mxu0 0.0
        %1452 = vmatprep.subr.mxu0 0.0
        %1453 = vmatpush1.msra.mxu0 0.0
        %1454 = vmatprep.subr.mxu0 %v1407
        %1455 = vmatpush1.msra.mxu0 %v1406
        %1456 = vmatprep.subr.mxu0 %v1427
        %1457 = vmatpush1.msra.mxu0 %v1426
        %1458 = vmatprep.subr.mxu0 %v1394
        %1459 = vmatpush1.msra.mxu0 %v1393
        %1460 = vmatprep.subr.mxu0 %v1381
        %1461 = vmatpush1.msra.mxu0 %v1380
        %1462 = vmatprep.subr.mxu0 %v1296
        %1463 = vmatpush1.msra.mxu0 %v1295
        %1464 = vmatprep.subr.mxu0 %v1362
        %1465 = vmatpush1.msra.mxu0 %v1361
        %1466 = vmatprep.subr.mxu0 %v1349
        %1467 = vmatpush1.msra.mxu0 %v1348
        %1468 = vmatprep.subr.mxu0 %v1416
        %1469 = vmatpush1.msra.mxu0 %v1415
        %1470 = vmatprep.subr.mxu0 %v1324
        %1471 = vmatpush1.msra.mxu0 %v1323
        %1472 = vmatprep.subr.mxu0 0.0
        %1473 = vmatpush2.msra.mxu0 0.0
        %1474 = vmatprep.subr.mxu0 0.0
        %1475 = vmatpush2.msra.mxu0 0.0
        %1476 = vmatprep.subr.mxu0 0.0
        %1477 = vmatpush2.msra.mxu0 0.0
        %1478 = vmatprep.subr.mxu0 0.0
        %1479 = vmatpush2.msra.mxu0 0.0
        %1480 = vmatprep.subr.mxu0 0.0
        %1481 = vmatpush2.msra.mxu0 0.0
        %1482 = vmatprep.subr.mxu0 0.0
        %1483 = vmatpush2.msra.mxu0 0.0
        %1484 = vmatprep.subr.mxu0 0.0
        %1485 = vmatpush2.msra.mxu0 0.0
        %1486 = vmatprep.subr.mxu0 0.0
        %1487 = vmatpush2.msra.mxu0 0.0
        %1488 = vmatprep.subr.mxu0 0.0
        %1489 = vmatpush2.msra.mxu0 0.0
        %1490 = vmatprep.subr.mxu0 0.0
        %1491 = vmatpush2.msra.mxu0 0.0
        %1492 = vmatprep.subr.mxu0 0.0
        %1493 = vmatpush2.msra.mxu0 0.0
        %1494 = vmatprep.subr.mxu0 0.0
        %1495 = vmatpush2.msra.mxu0 0.0
        %1496 = vmatprep.subr.mxu0 0.0
        %1497 = vmatpush2.msra.mxu0 0.0
        %1498 = vmatprep.subr.mxu0 0.0
        %1499 = vmatpush2.msra.mxu0 0.0
        %1500 = vmatprep.subr.mxu0 0.0
        %1501 = vmatpush2.msra.mxu0 0.0
        %1502 = vmatprep.subr.mxu0 0.0
        %1503 = vmatpush2.msra.mxu0 0.0
        %1504 = vmatprep.mubr.f32.mxu0 0.0
        %1505 = vmatmul.mubr.f32.gmra.mxu0 %v1438
        %v1506 = vpop.f32.mrf.mxu0
        %v1507 = vadd.f32 %v1434, %v1506
        %v1508 = vpop.f32.mrf.mxu0
        %v1509 = vadd.f32 %v1434, %v1508
        %1510 = vdwg.mxu0
        %s1511 = scalar_lea.vmem %s22, 8
        %v1512 = vld [vmem:[%s1511] sm:$0xff]
        %1513 = vst [vmem:[#allocation2 + $0x8] sm:$0xff] %v1507
        %1514 = vst [vmem:[#allocation2 + $0x10] sm:$0xff] %v1509
        %v1515 = vld [vmem:[#allocation2] sm:$0xff]
        %v1516 = vld [vmem:[#allocation2 + $0x8] sm:$0xff]
        %v1517 = vld [vmem:[#allocation2 + $0x10] sm:$0xff]
        %1521 = vrot.lane.b32.xlu0 %v1515, 17
        %v1522 = vpop.permute.xlu0 %1521
        %1523 = vrot.lane.b32.xlu0 %v1516, 17
        %v1524 = vpop.permute.xlu0 %1523
        %1525 = vrot.lane.b32.xlu0 %v1517, 17
        %v1526 = vpop.permute.xlu0 %1525
        %v1527 = vsel %vm920, %v1522, %v1524
        %v1528 = vsel %vm920, %v1524, %v1526
        %v1531 = vsel %vm909, %v1527, 0.0
        %v1532 = vsel %vm910, %v1528, 0.0
        %1533 = vrot.lane.b32.xlu0 %v1515, 15
        %v1534 = vpop.permute.xlu0 %1533
        %1535 = vrot.lane.b32.xlu0 %v1516, 15
        %v1536 = vpop.permute.xlu0 %1535
        %1537 = vrot.lane.b32.xlu0 %v1517, 15
        %v1538 = vpop.permute.xlu0 %1537
        %v1539 = vsel %vm945, %v1534, %v1536
        %v1540 = vsel %vm945, %v1536, %v1538
        %v1543 = vsel %vm937, %v1539, 0.0
        %v1544 = vsel %vm938, %v1540, 0.0
        %1545 = vrot.lane.b32.xlu0 %v1515, 1
        %v1546 = vpop.permute.xlu0 %1545
        %1547 = vrot.lane.b32.xlu0 %v1516, 1
        %v1548 = vpop.permute.xlu0 %1547
        %1549 = vrot.lane.b32.xlu0 %v1517, 1
        %v1550 = vpop.permute.xlu0 %1549
        %v1551 = vsel %vm958, %v1546, %v1548
        %v1552 = vsel %vm958, %v1548, %v1550
        %v1555 = vsel %vm909, %v1551, 0.0
        %v1556 = vsel %vm910, %v1552, 0.0
        %v1557 = vld [vmem:[#allocation2 + $0x8] sm:$0xff]
        %v1558 = vld [vmem:[#allocation2 + $0x10] sm:$0xff]
        %v1559 = vld [vmem:[#allocation2 + $0x18] sm:$0xff]
        %1563 = vrot.lane.b32.xlu0 %v1557, 127
        %v1564 = vpop.permute.xlu0 %1563
        %1565 = vrot.lane.b32.xlu0 %v1558, 127
        %v1566 = vpop.permute.xlu0 %1565
        %1567 = vrot.lane.b32.xlu0 %v1559, 127
        %v1568 = vpop.permute.xlu0 %1567
        %v1569 = vsel %vm977, %v1564, %v1566
        %v1570 = vsel %vm977, %v1566, %v1568
        %v1573 = vsel %vm937, %v1569, 0.0
        %v1574 = vsel %vm938, %v1570, 0.0
        %1575 = vrot.lane.b32.xlu0 %v1557, 113
        %v1576 = vpop.permute.xlu0 %1575
        %1577 = vrot.lane.b32.xlu0 %v1558, 113
        %v1578 = vpop.permute.xlu0 %1577
        %1579 = vrot.lane.b32.xlu0 %v1559, 113
        %v1580 = vpop.permute.xlu0 %1579
        %v1581 = vsel %vm990, %v1576, %v1578
        %v1582 = vsel %vm990, %v1578, %v1580
        %v1585 = vsel %vm909, %v1581, 0.0
        %v1586 = vsel %vm910, %v1582, 0.0
        %1587 = vrot.lane.b32.xlu0 %v1557, 111
        %v1588 = vpop.permute.xlu0 %1587
        %1589 = vrot.lane.b32.xlu0 %v1558, 111
        %v1590 = vpop.permute.xlu0 %1589
        %1591 = vrot.lane.b32.xlu0 %v1559, 111
        %v1592 = vpop.permute.xlu0 %1591
        %v1593 = vsel %vm1003, %v1588, %v1590
        %v1594 = vsel %vm1003, %v1590, %v1592
        %v1597 = vsel %vm937, %v1593, 0.0
        %v1598 = vsel %vm938, %v1594, 0.0
        %1599 = vrot.lane.b32.xlu0 %v1515, 16
        %v1600 = vpop.permute.xlu0 %1599
        %1601 = vrot.lane.b32.xlu0 %v1516, 16
        %v1602 = vpop.permute.xlu0 %1601
        %1603 = vrot.lane.b32.xlu0 %v1517, 16
        %v1604 = vpop.permute.xlu0 %1603
        %v1605 = vsel %vm1016, %v1600, %v1602
        %v1606 = vsel %vm1016, %v1602, %v1604
        %1609 = vrot.lane.b32.xlu0 %v1557, 112
        %v1610 = vpop.permute.xlu0 %1609
        %1611 = vrot.lane.b32.xlu0 %v1558, 112
        %v1612 = vpop.permute.xlu0 %1611
        %1613 = vrot.lane.b32.xlu0 %v1559, 112
        %v1614 = vpop.permute.xlu0 %1613
        %v1615 = vsel %vm1027, %v1610, %v1612
        %v1616 = vsel %vm1027, %v1612, %v1614
        %v1620 = vsel %vm1436, %v1512, 0
        %1622 = vmatprep.subr.mxu0 0.0
        %1623 = vmatpush1.msra.mxu0 0.0
        %1624 = vmatprep.subr.mxu0 0.0
        %1625 = vmatpush1.msra.mxu0 0.0
        %1626 = vmatprep.subr.mxu0 0.0
        %1627 = vmatpush1.msra.mxu0 0.0
        %1628 = vmatprep.subr.mxu0 0.0
        %1629 = vmatpush1.msra.mxu0 0.0
        %1630 = vmatprep.subr.mxu0 0.0
        %1631 = vmatpush1.msra.mxu0 0.0
        %1632 = vmatprep.subr.mxu0 0.0
        %1633 = vmatpush1.msra.mxu0 0.0
        %1634 = vmatprep.subr.mxu0 0.0
        %1635 = vmatpush1.msra.mxu0 0.0
        %1636 = vmatprep.subr.mxu0 %v1598
        %1637 = vmatpush1.msra.mxu0 %v1597
        %1638 = vmatprep.subr.mxu0 %v1616
        %1639 = vmatpush1.msra.mxu0 %v1615
        %1640 = vmatprep.subr.mxu0 %v1586
        %1641 = vmatpush1.msra.mxu0 %v1585
        %1642 = vmatprep.subr.mxu0 %v1574
        %1643 = vmatpush1.msra.mxu0 %v1573
        %1644 = vmatprep.subr.mxu0 %v1517
        %1645 = vmatpush1.msra.mxu0 %v1516
        %1646 = vmatprep.subr.mxu0 %v1556
        %1647 = vmatpush1.msra.mxu0 %v1555
        %1648 = vmatprep.subr.mxu0 %v1544
        %1649 = vmatpush1.msra.mxu0 %v1543
        %1650 = vmatprep.subr.mxu0 %v1606
        %1651 = vmatpush1.msra.mxu0 %v1605
        %1652 = vmatprep.subr.mxu0 %v1532
        %1653 = vmatpush1.msra.mxu0 %v1531
        %1654 = vmatprep.subr.mxu0 0.0
        %1655 = vmatpush2.msra.mxu0 0.0
        %1656 = vmatprep.subr.mxu0 0.0
        %1657 = vmatpush2.msra.mxu0 0.0
        %1658 = vmatprep.subr.mxu0 0.0
        %1659 = vmatpush2.msra.mxu0 0.0
        %1660 = vmatprep.subr.mxu0 0.0
        %1661 = vmatpush2.msra.mxu0 0.0
        %1662 = vmatprep.subr.mxu0 0.0
        %1663 = vmatpush2.msra.mxu0 0.0
        %1664 = vmatprep.subr.mxu0 0.0
        %1665 = vmatpush2.msra.mxu0 0.0
        %1666 = vmatprep.subr.mxu0 0.0
        %1667 = vmatpush2.msra.mxu0 0.0
        %1668 = vmatprep.subr.mxu0 0.0
        %1669 = vmatpush2.msra.mxu0 0.0
        %1670 = vmatprep.subr.mxu0 0.0
        %1671 = vmatpush2.msra.mxu0 0.0
        %1672 = vmatprep.subr.mxu0 0.0
        %1673 = vmatpush2.msra.mxu0 0.0
        %1674 = vmatprep.subr.mxu0 0.0
        %1675 = vmatpush2.msra.mxu0 0.0
        %1676 = vmatprep.subr.mxu0 0.0
        %1677 = vmatpush2.msra.mxu0 0.0
        %1678 = vmatprep.subr.mxu0 0.0
        %1679 = vmatpush2.msra.mxu0 0.0
        %1680 = vmatprep.subr.mxu0 0.0
        %1681 = vmatpush2.msra.mxu0 0.0
        %1682 = vmatprep.subr.mxu0 0.0
        %1683 = vmatpush2.msra.mxu0 0.0
        %1684 = vmatprep.subr.mxu0 0.0
        %1685 = vmatpush2.msra.mxu0 0.0
        %1686 = vmatprep.mubr.f32.mxu0 0.0
        %1687 = vmatmul.mubr.f32.gmra.mxu0 %v1620
        %v1688 = vpop.f32.mrf.mxu0
        %v1689 = vadd.f32 0.0, %v1688
        %v1690 = vpop.f32.mrf.mxu0
        %v1691 = vadd.f32 0.0, %v1690
        %1692 = vdwg.mxu0
        %v1694 = vsel %vm1436, %v893, 0
        %1696 = vmatprep.subr.mxu0 0.0
        %1697 = vmatpush1.msra.mxu0 0.0
        %1698 = vmatprep.subr.mxu0 0.0
        %1699 = vmatpush1.msra.mxu0 0.0
        %1700 = vmatprep.subr.mxu0 0.0
        %1701 = vmatpush1.msra.mxu0 0.0
        %1702 = vmatprep.subr.mxu0 0.0
        %1703 = vmatpush1.msra.mxu0 0.0
        %1704 = vmatprep.subr.mxu0 0.0
        %1705 = vmatpush1.msra.mxu0 0.0
        %1706 = vmatprep.subr.mxu0 0.0
        %1707 = vmatpush1.msra.mxu0 0.0
        %1708 = vmatprep.subr.mxu0 0.0
        %1709 = vmatpush1.msra.mxu0 0.0
        %1710 = vmatprep.subr.mxu0 %v1009
        %1711 = vmatpush1.msra.mxu0 %v1008
        %1712 = vmatprep.subr.mxu0 %v1029
        %1713 = vmatpush1.msra.mxu0 %v1028
        %1714 = vmatprep.subr.mxu0 %v996
        %1715 = vmatpush1.msra.mxu0 %v995
        %1716 = vmatprep.subr.mxu0 %v983
        %1717 = vmatpush1.msra.mxu0 %v982
        %1718 = vmatprep.subr.mxu0 %v898
        %1719 = vmatpush1.msra.mxu0 %v897
        %1720 = vmatprep.subr.mxu0 %v964
        %1721 = vmatpush1.msra.mxu0 %v963
        %1722 = vmatprep.subr.mxu0 %v951
        %1723 = vmatpush1.msra.mxu0 %v950
        %1724 = vmatprep.subr.mxu0 %v1018
        %1725 = vmatpush1.msra.mxu0 %v1017
        %1726 = vmatprep.subr.mxu0 %v926
        %1727 = vmatpush1.msra.mxu0 %v925
        %1728 = vmatprep.subr.mxu0 0.0
        %1729 = vmatpush2.msra.mxu0 0.0
        %1730 = vmatprep.subr.mxu0 0.0
        %1731 = vmatpush2.msra.mxu0 0.0
        %1732 = vmatprep.subr.mxu0 0.0
        %1733 = vmatpush2.msra.mxu0 0.0
        %1734 = vmatprep.subr.mxu0 0.0
        %1735 = vmatpush2.msra.mxu0 0.0
        %1736 = vmatprep.subr.mxu0 0.0
        %1737 = vmatpush2.msra.mxu0 0.0
        %1738 = vmatprep.subr.mxu0 0.0
        %1739 = vmatpush2.msra.mxu0 0.0
        %1740 = vmatprep.subr.mxu0 0.0
        %1741 = vmatpush2.msra.mxu0 0.0
        %1742 = vmatprep.subr.mxu0 0.0
        %1743 = vmatpush2.msra.mxu0 0.0
        %1744 = vmatprep.subr.mxu0 0.0
        %1745 = vmatpush2.msra.mxu0 0.0
        %1746 = vmatprep.subr.mxu0 0.0
        %1747 = vmatpush2.msra.mxu0 0.0
        %1748 = vmatprep.subr.mxu0 0.0
        %1749 = vmatpush2.msra.mxu0 0.0
        %1750 = vmatprep.subr.mxu0 0.0
        %1751 = vmatpush2.msra.mxu0 0.0
        %1752 = vmatprep.subr.mxu0 0.0
        %1753 = vmatpush2.msra.mxu0 0.0
        %1754 = vmatprep.subr.mxu0 0.0
        %1755 = vmatpush2.msra.mxu0 0.0
        %1756 = vmatprep.subr.mxu0 0.0
        %1757 = vmatpush2.msra.mxu0 0.0
        %1758 = vmatprep.subr.mxu0 0.0
        %1759 = vmatpush2.msra.mxu0 0.0
        %1760 = vmatprep.mubr.f32.mxu0 0.0
        %1761 = vmatmul.mubr.f32.gmra.mxu0 %v1694
        %v1762 = vpop.f32.mrf.mxu0
        %v1763 = vadd.f32 %v1689, %v1762
        %v1764 = vpop.f32.mrf.mxu0
        %v1765 = vadd.f32 %v1691, %v1764
        %1766 = vdwg.mxu0
        %v1767 = vld [vmem:[%s10] sm:$0xff]
        %1768 = vst [vmem:[#allocation2 + $0x8] sm:$0xff] %v877
        %1769 = vst [vmem:[#allocation2 + $0x10] sm:$0xff] %v879
        %v1770 = vld [vmem:[#allocation2] sm:$0xff]
        %v1771 = vld [vmem:[#allocation2 + $0x8] sm:$0xff]
        %v1772 = vld [vmem:[#allocation2 + $0x10] sm:$0xff]
        %vm1773 = vcmp.ge.s32.totalorder %v736, 2
        %v1774 = vsel %vm1773, 1, 0
        %v1775 = vlaneseq
        %v1776 = vshrl.u32 %v1775, 7
        %v1777 = vsub.s32 0, %v1776
        %v1778 = vrot.slane %v1774, %v1777
        %v1779 = vlaneseq
        %v1780 = vshrl.u32 %v1779, 7
        %v1781 = vsub.s32 1, %v1780
        %v1782 = vrot.slane %v1774, %v1781
        %vm1783 = vcmp.eq.s32.totalorder %v1778, 1
        %vm1784 = vcmp.eq.s32.totalorder %v1782, 1
        %1788 = vrot.lane.b32.xlu0 %v1770, 2
        %v1789 = vpop.permute.xlu0 %1788
        %1790 = vrot.lane.b32.xlu0 %v1771, 2
        %v1791 = vpop.permute.xlu0 %1790
        %1792 = vrot.lane.b32.xlu0 %v1772, 2
        %v1793 = vpop.permute.xlu0 %1792
        %vm1794 = vcmask 15360
        %v1795 = vsel %vm1794, %v1789, %v1791
        %v1796 = vsel %vm1794, %v1791, %v1793
        %v1799 = vsel %vm1783, %v1795, 0.0
        %v1800 = vsel %vm1784, %v1796, 0.0
        %1801 = vrot.lane.b32.xlu0 %v1770, 1
        %v1802 = vpop.permute.xlu0 %1801
        %1803 = vrot.lane.b32.xlu0 %v1771, 1
        %v1804 = vpop.permute.xlu0 %1803
        %1805 = vrot.lane.b32.xlu0 %v1772, 1
        %v1806 = vpop.permute.xlu0 %1805
        %v1807 = vsel %vm958, %v1802, %v1804
        %v1808 = vsel %vm958, %v1804, %v1806
        %v1811 = vsel %vm909, %v1807, 0.0
        %v1812 = vsel %vm910, %v1808, 0.0
        %v1813 = vld [vmem:[#allocation2 + $0x8] sm:$0xff]
        %v1814 = vld [vmem:[#allocation2 + $0x10] sm:$0xff]
        %v1815 = vld [vmem:[#allocation2 + $0x18] sm:$0xff]
        %1819 = vrot.lane.b32.xlu0 %v1813, 127
        %v1820 = vpop.permute.xlu0 %1819
        %1821 = vrot.lane.b32.xlu0 %v1814, 127
        %v1822 = vpop.permute.xlu0 %1821
        %1823 = vrot.lane.b32.xlu0 %v1815, 127
        %v1824 = vpop.permute.xlu0 %1823
        %v1825 = vsel %vm977, %v1820, %v1822
        %v1826 = vsel %vm977, %v1822, %v1824
        %v1829 = vsel %vm937, %v1825, 0.0
        %v1830 = vsel %vm938, %v1826, 0.0
        %vm1831 = vcmp.lt.s32.totalorder %v736, 14
        %v1832 = vsel %vm1831, 1, 0
        %v1833 = vlaneseq
        %v1834 = vshrl.u32 %v1833, 7
        %v1835 = vsub.s32 0, %v1834
        %v1836 = vrot.slane %v1832, %v1835
        %v1837 = vlaneseq
        %v1838 = vshrl.u32 %v1837, 7
        %v1839 = vsub.s32 1, %v1838
        %v1840 = vrot.slane %v1832, %v1839
        %vm1841 = vcmp.eq.s32.totalorder %v1836, 1
        %vm1842 = vcmp.eq.s32.totalorder %v1840, 1
        %1843 = vrot.lane.b32.xlu0 %v1813, 126
        %v1844 = vpop.permute.xlu0 %1843
        %1845 = vrot.lane.b32.xlu0 %v1814, 126
        %v1846 = vpop.permute.xlu0 %1845
        %1847 = vrot.lane.b32.xlu0 %v1815, 126
        %v1848 = vpop.permute.xlu0 %1847
        %vm1849 = vcmask 1031168
        %v1850 = vsel %vm1849, %v1844, %v1846
        %v1851 = vsel %vm1849, %v1846, %v1848
        %v1854 = vsel %vm1841, %v1850, 0.0
        %v1855 = vsel %vm1842, %v1851, 0.0
        %v1856 = vld [vmem:[%s11] sm:$0xff]
        %1858 = vset.pattern.permute.xlu0 0
        %1859 = vperm.xlu0 %1858, %v1856
        %v1860 = vpop.permute.xlu0 %1859
        %vm1862 = vcmask 326656
        %v1864 = vsel %vm1862, %v1767, 0
        %1866 = vmatprep.subr.mxu0 0.0
        %1867 = vmatpush1.msra.mxu0 0.0
        %1868 = vmatprep.subr.mxu0 0.0
        %1869 = vmatpush1.msra.mxu0 0.0
        %1870 = vmatprep.subr.mxu0 0.0
        %1871 = vmatpush1.msra.mxu0 0.0
        %1872 = vmatprep.subr.mxu0 0.0
        %1873 = vmatpush1.msra.mxu0 0.0
        %1874 = vmatprep.subr.mxu0 0.0
        %1875 = vmatpush1.msra.mxu0 0.0
        %1876 = vmatprep.subr.mxu0 0.0
        %1877 = vmatpush1.msra.mxu0 0.0
        %1878 = vmatprep.subr.mxu0 0.0
        %1879 = vmatpush1.msra.mxu0 0.0
        %1880 = vmatprep.subr.mxu0 0.0
        %1881 = vmatpush1.msra.mxu0 0.0
        %1882 = vmatprep.subr.mxu0 0.0
        %1883 = vmatpush1.msra.mxu0 0.0
        %1884 = vmatprep.subr.mxu0 0.0
        %1885 = vmatpush1.msra.mxu0 0.0
        %1886 = vmatprep.subr.mxu0 0.0
        %1887 = vmatpush1.msra.mxu0 0.0
        %1888 = vmatprep.subr.mxu0 %v1855
        %1889 = vmatpush1.msra.mxu0 %v1854
        %1890 = vmatprep.subr.mxu0 %v1830
        %1891 = vmatpush1.msra.mxu0 %v1829
        %1892 = vmatprep.subr.mxu0 %v1772
        %1893 = vmatpush1.msra.mxu0 %v1771
        %1894 = vmatprep.subr.mxu0 %v1812
        %1895 = vmatpush1.msra.mxu0 %v1811
        %1896 = vmatprep.subr.mxu0 %v1800
        %1897 = vmatpush1.msra.mxu0 %v1799
        %1898 = vmatprep.subr.mxu0 0.0
        %1899 = vmatpush2.msra.mxu0 0.0
        %1900 = vmatprep.subr.mxu0 0.0
        %1901 = vmatpush2.msra.mxu0 0.0
        %1902 = vmatprep.subr.mxu0 0.0
        %1903 = vmatpush2.msra.mxu0 0.0
        %1904 = vmatprep.subr.mxu0 0.0
        %1905 = vmatpush2.msra.mxu0 0.0
        %1906 = vmatprep.subr.mxu0 0.0
        %1907 = vmatpush2.msra.mxu0 0.0
        %1908 = vmatprep.subr.mxu0 0.0
        %1909 = vmatpush2.msra.mxu0 0.0
        %1910 = vmatprep.subr.mxu0 0.0
        %1911 = vmatpush2.msra.mxu0 0.0
        %1912 = vmatprep.subr.mxu0 0.0
        %1913 = vmatpush2.msra.mxu0 0.0
        %1914 = vmatprep.subr.mxu0 0.0
        %1915 = vmatpush2.msra.mxu0 0.0
        %1916 = vmatprep.subr.mxu0 0.0
        %1917 = vmatpush2.msra.mxu0 0.0
        %1918 = vmatprep.subr.mxu0 0.0
        %1919 = vmatpush2.msra.mxu0 0.0
        %1920 = vmatprep.subr.mxu0 0.0
        %1921 = vmatpush2.msra.mxu0 0.0
        %1922 = vmatprep.subr.mxu0 0.0
        %1923 = vmatpush2.msra.mxu0 0.0
        %1924 = vmatprep.subr.mxu0 0.0
        %1925 = vmatpush2.msra.mxu0 0.0
        %1926 = vmatprep.subr.mxu0 0.0
        %1927 = vmatpush2.msra.mxu0 0.0
        %1928 = vmatprep.subr.mxu0 0.0
        %1929 = vmatpush2.msra.mxu0 0.0
        %1930 = vmatprep.mubr.f32.mxu0 0.0
        %1931 = vmatmul.mubr.f32.gmra.mxu0 %v1864
        %v1932 = vpop.f32.mrf.mxu0
        %v1933 = vadd.f32 %v1860, %v1932
        %v1934 = vpop.f32.mrf.mxu0
        %v1935 = vadd.f32 %v1860, %v1934
        %1936 = vdwg.mxu0
        %v1937 = vld [vmem:[%s12] sm:$0xff]
        %1938 = vst [vmem:[#allocation2 + $0x8] sm:$0xff] %v1933
        %1939 = vst [vmem:[#allocation2 + $0x10] sm:$0xff] %v1935
        %v1940 = vld [vmem:[#allocation2] sm:$0xff]
        %v1941 = vld [vmem:[#allocation2 + $0x8] sm:$0xff]
        %v1942 = vld [vmem:[#allocation2 + $0x10] sm:$0xff]
        %v1943 = vld [vmem:[#allocation2 + $0x8] sm:$0xff]
        %v1944 = vld [vmem:[#allocation2 + $0x10] sm:$0xff]
        %v1945 = vld [vmem:[#allocation2 + $0x18] sm:$0xff]
        %1949 = vrot.lane.b32.xlu0 %v1940, 112
        %v1950 = vpop.permute.xlu0 %1949
        %1951 = vrot.lane.b32.xlu0 %v1941, 112
        %v1952 = vpop.permute.xlu0 %1951
        %1953 = vrot.lane.b32.xlu0 %v1942, 112
        %v1954 = vpop.permute.xlu0 %1953
        %v1955 = vsel %vm1027, %v1950, %v1952
        %v1956 = vsel %vm1027, %v1952, %v1954
        %1957 = vrot.lane.b32.xlu0 %v1941, 96
        %v1958 = vpop.permute.xlu0 %1957
        %1959 = vrot.lane.b32.xlu0 %v1942, 96
        %v1960 = vpop.permute.xlu0 %1959
        %v1961 = vsel %vm1177, %v1958, %v1960
        %1965 = vrot.lane.b32.xlu0 %v1943, 80
        %v1966 = vpop.permute.xlu0 %1965
        %1967 = vrot.lane.b32.xlu0 %v1944, 80
        %v1968 = vpop.permute.xlu0 %1967
        %1969 = vrot.lane.b32.xlu0 %v1945, 80
        %v1970 = vpop.permute.xlu0 %1969
        %v1971 = vsel %vm1425, %v1966, %v1968
        %v1972 = vsel %vm1425, %v1968, %v1970
        %1973 = vrot.lane.b32.xlu0 %v1943, 64
        %v1974 = vpop.permute.xlu0 %1973
        %1975 = vrot.lane.b32.xlu0 %v1944, 64
        %v1976 = vpop.permute.xlu0 %1975
        %1977 = vrot.lane.b32.xlu0 %v1945, 64
        %v1978 = vpop.permute.xlu0 %1977
        %vm1979 = vcmask 523264
        %v1980 = vsel %vm1979, %v1974, %v1976
        %v1981 = vsel %vm1979, %v1976, %v1978
        %v1982 = vld [vmem:[%s13] sm:$0xff]
        %1984 = vset.pattern.permute.xlu0 0
        %1985 = vperm.xlu0 %1984, %v1982
        %v1986 = vpop.permute.xlu0 %1985
        %1988 = vrot.lane.b32.xlu0 %v1940, 32
        %v1989 = vpop.permute.xlu0 %1988
        %1990 = vrot.lane.b32.xlu0 %v1941, 32
        %v1991 = vpop.permute.xlu0 %1990
        %1992 = vrot.lane.b32.xlu0 %v1942, 32
        %v1993 = vpop.permute.xlu0 %1992
        %1994 = vrot.lane.b32.xlu0 %v1955, 32
        %v1995 = vpop.permute.xlu0 %1994
        %1996 = vrot.lane.b32.xlu0 %v1956, 32
        %v1997 = vpop.permute.xlu0 %1996
        %1998 = vrot.lane.b32.xlu0 %v1954, 32
        %v1999 = vpop.permute.xlu0 %1998
        %2000 = vrot.lane.b32.xlu0 %v1958, 32
        %v2001 = vpop.permute.xlu0 %2000
        %2002 = vrot.lane.b32.xlu0 %v1961, 32
        %v2003 = vpop.permute.xlu0 %2002
        %2004 = vrot.lane.b32.xlu0 %v1960, 32
        %v2005 = vpop.permute.xlu0 %2004
        %2006 = vrot.lane.b32.xlu0 %v1966, 32
        %v2007 = vpop.permute.xlu0 %2006
        %2008 = vrot.lane.b32.xlu0 %v1971, 32
        %v2009 = vpop.permute.xlu0 %2008
        %2010 = vrot.lane.b32.xlu0 %v1972, 32
        %v2011 = vpop.permute.xlu0 %2010
        %2012 = vrot.lane.b32.xlu0 %v1974, 32
        %v2013 = vpop.permute.xlu0 %2012
        %2014 = vrot.lane.b32.xlu0 %v1980, 32
        %v2015 = vpop.permute.xlu0 %2014
        %2016 = vrot.lane.b32.xlu0 %v1981, 32
        %v2017 = vpop.permute.xlu0 %2016
        %vm2018 = vcmask 261120
        %v2019 = vsel %vm2018, %v1989, %v1991
        %v2020 = vsel %vm2018, %v1991, %v1993
        %v2021 = vsel %vm2018, %v1995, %v1997
        %v2022 = vsel %vm2018, %v1997, %v1999
        %v2023 = vsel %vm2018, %v2001, %v2003
        %v2024 = vsel %vm2018, %v2003, %v2005
        %v2025 = vsel %vm2018, %v2007, %v2009
        %v2026 = vsel %vm2018, %v2009, %v2011
        %v2027 = vsel %vm2018, %v2013, %v2015
        %v2028 = vsel %vm2018, %v2015, %v2017
        %v2040 = vsel %vm1862, %v1937, 0
        %2042 = vmatprep.subr.mxu0 0.0
        %2043 = vmatpush1.msra.mxu0 0.0
        %2044 = vmatprep.subr.mxu0 0.0
        %2045 = vmatpush1.msra.mxu0 0.0
        %2046 = vmatprep.subr.mxu0 0.0
        %2047 = vmatpush1.msra.mxu0 0.0
        %2048 = vmatprep.subr.mxu0 0.0
        %2049 = vmatpush1.msra.mxu0 0.0
        %2050 = vmatprep.subr.mxu0 0.0
        %2051 = vmatpush1.msra.mxu0 0.0
        %2052 = vmatprep.subr.mxu0 0.0
        %2053 = vmatpush1.msra.mxu0 0.0
        %2054 = vmatprep.subr.mxu0 0.0
        %2055 = vmatpush1.msra.mxu0 0.0
        %2056 = vmatprep.subr.mxu0 0.0
        %2057 = vmatpush1.msra.mxu0 0.0
        %2058 = vmatprep.subr.mxu0 0.0
        %2059 = vmatpush1.msra.mxu0 0.0
        %2060 = vmatprep.subr.mxu0 0.0
        %2061 = vmatpush1.msra.mxu0 0.0
        %2062 = vmatprep.subr.mxu0 0.0
        %2063 = vmatpush1.msra.mxu0 0.0
        %2064 = vmatprep.subr.mxu0 %v2028
        %2065 = vmatpush1.msra.mxu0 %v2027
        %2066 = vmatprep.subr.mxu0 %v2026
        %2067 = vmatpush1.msra.mxu0 %v2025
        %2068 = vmatprep.subr.mxu0 %v2024
        %2069 = vmatpush1.msra.mxu0 %v2023
        %2070 = vmatprep.subr.mxu0 %v2022
        %2071 = vmatpush1.msra.mxu0 %v2021
        %2072 = vmatprep.subr.mxu0 %v2020
        %2073 = vmatpush1.msra.mxu0 %v2019
        %2074 = vmatprep.subr.mxu0 0.0
        %2075 = vmatpush2.msra.mxu0 0.0
        %2076 = vmatprep.subr.mxu0 0.0
        %2077 = vmatpush2.msra.mxu0 0.0
        %2078 = vmatprep.subr.mxu0 0.0
        %2079 = vmatpush2.msra.mxu0 0.0
        %2080 = vmatprep.subr.mxu0 0.0
        %2081 = vmatpush2.msra.mxu0 0.0
        %2082 = vmatprep.subr.mxu0 0.0
        %2083 = vmatpush2.msra.mxu0 0.0
        %2084 = vmatprep.subr.mxu0 0.0
        %2085 = vmatpush2.msra.mxu0 0.0
        %2086 = vmatprep.subr.mxu0 0.0
        %2087 = vmatpush2.msra.mxu0 0.0
        %2088 = vmatprep.subr.mxu0 0.0
        %2089 = vmatpush2.msra.mxu0 0.0
        %2090 = vmatprep.subr.mxu0 0.0
        %2091 = vmatpush2.msra.mxu0 0.0
        %2092 = vmatprep.subr.mxu0 0.0
        %2093 = vmatpush2.msra.mxu0 0.0
        %2094 = vmatprep.subr.mxu0 0.0
        %2095 = vmatpush2.msra.mxu0 0.0
        %2096 = vmatprep.subr.mxu0 0.0
        %2097 = vmatpush2.msra.mxu0 0.0
        %2098 = vmatprep.subr.mxu0 0.0
        %2099 = vmatpush2.msra.mxu0 0.0
        %2100 = vmatprep.subr.mxu0 0.0
        %2101 = vmatpush2.msra.mxu0 0.0
        %2102 = vmatprep.subr.mxu0 0.0
        %2103 = vmatpush2.msra.mxu0 0.0
        %2104 = vmatprep.subr.mxu0 0.0
        %2105 = vmatpush2.msra.mxu0 0.0
        %2106 = vmatprep.mubr.f32.mxu0 0.0
        %2107 = vmatmul.mubr.f32.gmra.mxu0 %v2040
        %v2108 = vpop.f32.mrf.mxu0
        %v2109 = vadd.f32 %v1986, %v2108
        %v2110 = vpop.f32.mrf.mxu0
        %v2111 = vadd.f32 %v1986, %v2110
        %2112 = vdwg.mxu0
        %v2113 = vld [vmem:[%s14] sm:$0xff]
        %2114 = vst [vmem:[#allocation2 + $0x8] sm:$0xff] %v2109
        %2115 = vst [vmem:[#allocation2 + $0x10] sm:$0xff] %v2111
        %v2116 = vld [vmem:[#allocation2] sm:$0xff]
        %v2117 = vld [vmem:[#allocation2 + $0x8] sm:$0xff]
        %v2118 = vld [vmem:[#allocation2 + $0x10] sm:$0xff]
        %vm2119 = vcmp.ge.s32.totalorder %v736, 5
        %v2120 = vsel %vm2119, 1, 0
        %v2121 = vlaneseq
        %v2122 = vshrl.u32 %v2121, 7
        %v2123 = vsub.s32 0, %v2122
        %v2124 = vrot.slane %v2120, %v2123
        %v2125 = vlaneseq
        %v2126 = vshrl.u32 %v2125, 7
        %v2127 = vsub.s32 1, %v2126
        %v2128 = vrot.slane %v2120, %v2127
        %vm2129 = vcmp.eq.s32.totalorder %v2124, 1
        %vm2130 = vcmp.eq.s32.totalorder %v2128, 1
        %2134 = vrot.lane.b32.xlu0 %v2116, 85
        %v2135 = vpop.permute.xlu0 %2134
        %2136 = vrot.lane.b32.xlu0 %v2117, 85
        %v2137 = vpop.permute.xlu0 %2136
        %2138 = vrot.lane.b32.xlu0 %v2118, 85
        %v2139 = vpop.permute.xlu0 %2138
        %vm2140 = vcmask 695296
        %v2141 = vsel %vm2140, %v2135, %v2137
        %v2142 = vsel %vm2140, %v2137, %v2139
        %v2145 = vsel %vm2129, %v2141, 0.0
        %v2146 = vsel %vm2130, %v2142, 0.0
        %vm2147 = vcmp.lt.s32.totalorder %v736, 11
        %v2148 = vsel %vm2147, 1, 0
        %v2149 = vlaneseq
        %v2150 = vshrl.u32 %v2149, 7
        %v2151 = vsub.s32 0, %v2150
        %v2152 = vrot.slane %v2148, %v2151
        %v2153 = vlaneseq
        %v2154 = vshrl.u32 %v2153, 7
        %v2155 = vsub.s32 1, %v2154
        %v2156 = vrot.slane %v2148, %v2155
        %vm2157 = vcmp.eq.s32.totalorder %v2152, 1
        %vm2158 = vcmp.eq.s32.totalorder %v2156, 1
        %2159 = vrot.lane.b32.xlu0 %v2116, 75
        %v2160 = vpop.permute.xlu0 %2159
        %2161 = vrot.lane.b32.xlu0 %v2117, 75
        %v2162 = vpop.permute.xlu0 %2161
        %2163 = vrot.lane.b32.xlu0 %v2118, 75
        %v2164 = vpop.permute.xlu0 %2163
        %vm2165 = vcmask 613376
        %v2166 = vsel %vm2165, %v2160, %v2162
        %v2167 = vsel %vm2165, %v2162, %v2164
        %v2170 = vsel %vm2157, %v2166, 0.0
        %v2171 = vsel %vm2158, %v2167, 0.0
        %2172 = vrot.lane.b32.xlu0 %v2116, 5
        %v2173 = vpop.permute.xlu0 %2172
        %2174 = vrot.lane.b32.xlu0 %v2117, 5
        %v2175 = vpop.permute.xlu0 %2174
        %2176 = vrot.lane.b32.xlu0 %v2118, 5
        %v2177 = vpop.permute.xlu0 %2176
        %vm2178 = vcmask 39936
        %v2179 = vsel %vm2178, %v2173, %v2175
        %v2180 = vsel %vm2178, %v2175, %v2177
        %v2183 = vsel %vm2129, %v2179, 0.0
        %v2184 = vsel %vm2130, %v2180, 0.0
        %v2185 = vld [vmem:[#allocation2 + $0x8] sm:$0xff]
        %v2186 = vld [vmem:[#allocation2 + $0x10] sm:$0xff]
        %v2187 = vld [vmem:[#allocation2 + $0x18] sm:$0xff]
        %2191 = vrot.lane.b32.xlu0 %v2185, 123
        %v2192 = vpop.permute.xlu0 %2191
        %2193 = vrot.lane.b32.xlu0 %v2186, 123
        %v2194 = vpop.permute.xlu0 %2193
        %2195 = vrot.lane.b32.xlu0 %v2187, 123
        %v2196 = vpop.permute.xlu0 %2195
        %vm2197 = vcmask 1006592
        %v2198 = vsel %vm2197, %v2192, %v2194
        %v2199 = vsel %vm2197, %v2194, %v2196
        %v2202 = vsel %vm2157, %v2198, 0.0
        %v2203 = vsel %vm2158, %v2199, 0.0
        %2204 = vrot.lane.b32.xlu0 %v2185, 53
        %v2205 = vpop.permute.xlu0 %2204
        %2206 = vrot.lane.b32.xlu0 %v2186, 53
        %v2207 = vpop.permute.xlu0 %2206
        %2208 = vrot.lane.b32.xlu0 %v2187, 53
        %v2209 = vpop.permute.xlu0 %2208
        %vm2210 = vcmask 433152
        %v2211 = vsel %vm2210, %v2205, %v2207
        %v2212 = vsel %vm2210, %v2207, %v2209
        %v2215 = vsel %vm2129, %v2211, 0.0
        %v2216 = vsel %vm2130, %v2212, 0.0
        %2217 = vrot.lane.b32.xlu0 %v2185, 43
        %v2218 = vpop.permute.xlu0 %2217
        %2219 = vrot.lane.b32.xlu0 %v2186, 43
        %v2220 = vpop.permute.xlu0 %2219
        %2221 = vrot.lane.b32.xlu0 %v2187, 43
        %v2222 = vpop.permute.xlu0 %2221
        %vm2223 = vcmask 351232
        %v2224 = vsel %vm2223, %v2218, %v2220
        %v2225 = vsel %vm2223, %v2220, %v2222
        %v2228 = vsel %vm2157, %v2224, 0.0
        %v2229 = vsel %vm2158, %v2225, 0.0
        %2230 = vrot.lane.b32.xlu0 %v2116, 80
        %v2231 = vpop.permute.xlu0 %2230
        %2232 = vrot.lane.b32.xlu0 %v2117, 80
        %v2233 = vpop.permute.xlu0 %2232
        %2234 = vrot.lane.b32.xlu0 %v2118, 80
        %v2235 = vpop.permute.xlu0 %2234
        %v2236 = vsel %vm1425, %v2231, %v2233
        %v2237 = vsel %vm1425, %v2233, %v2235
        %2240 = vrot.lane.b32.xlu0 %v2185, 48
        %v2241 = vpop.permute.xlu0 %2240
        %2242 = vrot.lane.b32.xlu0 %v2186, 48
        %v2243 = vpop.permute.xlu0 %2242
        %2244 = vrot.lane.b32.xlu0 %v2187, 48
        %v2245 = vpop.permute.xlu0 %2244
        %v2246 = vsel %vm1414, %v2241, %v2243
        %v2247 = vsel %vm1414, %v2243, %v2245
        %v2250 = vld [vmem:[%s15] sm:$0xff]
        %2252 = vset.pattern.permute.xlu0 0
        %2253 = vperm.xlu0 %2252, %v2250
        %v2254 = vpop.permute.xlu0 %2253
        %v2257 = vsel %vm1436, %v2113, 0
        %2259 = vmatprep.subr.mxu0 0.0
        %2260 = vmatpush1.msra.mxu0 0.0
        %2261 = vmatprep.subr.mxu0 0.0
        %2262 = vmatpush1.msra.mxu0 0.0
        %2263 = vmatprep.subr.mxu0 0.0
        %2264 = vmatpush1.msra.mxu0 0.0
        %2265 = vmatprep.subr.mxu0 0.0
        %2266 = vmatpush1.msra.mxu0 0.0
        %2267 = vmatprep.subr.mxu0 0.0
        %2268 = vmatpush1.msra.mxu0 0.0
        %2269 = vmatprep.subr.mxu0 0.0
        %2270 = vmatpush1.msra.mxu0 0.0
        %2271 = vmatprep.subr.mxu0 0.0
        %2272 = vmatpush1.msra.mxu0 0.0
        %2273 = vmatprep.subr.mxu0 %v2229
        %2274 = vmatpush1.msra.mxu0 %v2228
        %2275 = vmatprep.subr.mxu0 %v2247
        %2276 = vmatpush1.msra.mxu0 %v2246
        %2277 = vmatprep.subr.mxu0 %v2216
        %2278 = vmatpush1.msra.mxu0 %v2215
        %2279 = vmatprep.subr.mxu0 %v2203
        %2280 = vmatpush1.msra.mxu0 %v2202
        %2281 = vmatprep.subr.mxu0 %v2118
        %2282 = vmatpush1.msra.mxu0 %v2117
        %2283 = vmatprep.subr.mxu0 %v2184
        %2284 = vmatpush1.msra.mxu0 %v2183
        %2285 = vmatprep.subr.mxu0 %v2171
        %2286 = vmatpush1.msra.mxu0 %v2170
        %2287 = vmatprep.subr.mxu0 %v2237
        %2288 = vmatpush1.msra.mxu0 %v2236
        %2289 = vmatprep.subr.mxu0 %v2146
        %2290 = vmatpush1.msra.mxu0 %v2145
        %2291 = vmatprep.subr.mxu0 0.0
        %2292 = vmatpush2.msra.mxu0 0.0
        %2293 = vmatprep.subr.mxu0 0.0
        %2294 = vmatpush2.msra.mxu0 0.0
        %2295 = vmatprep.subr.mxu0 0.0
        %2296 = vmatpush2.msra.mxu0 0.0
        %2297 = vmatprep.subr.mxu0 0.0
        %2298 = vmatpush2.msra.mxu0 0.0
        %2299 = vmatprep.subr.mxu0 0.0
        %2300 = vmatpush2.msra.mxu0 0.0
        %2301 = vmatprep.subr.mxu0 0.0
        %2302 = vmatpush2.msra.mxu0 0.0
        %2303 = vmatprep.subr.mxu0 0.0
        %2304 = vmatpush2.msra.mxu0 0.0
        %2305 = vmatprep.subr.mxu0 0.0
        %2306 = vmatpush2.msra.mxu0 0.0
        %2307 = vmatprep.subr.mxu0 0.0
        %2308 = vmatpush2.msra.mxu0 0.0
        %2309 = vmatprep.subr.mxu0 0.0
        %2310 = vmatpush2.msra.mxu0 0.0
        %2311 = vmatprep.subr.mxu0 0.0
        %2312 = vmatpush2.msra.mxu0 0.0
        %2313 = vmatprep.subr.mxu0 0.0
        %2314 = vmatpush2.msra.mxu0 0.0
        %2315 = vmatprep.subr.mxu0 0.0
        %2316 = vmatpush2.msra.mxu0 0.0
        %2317 = vmatprep.subr.mxu0 0.0
        %2318 = vmatpush2.msra.mxu0 0.0
        %2319 = vmatprep.subr.mxu0 0.0
        %2320 = vmatpush2.msra.mxu0 0.0
        %2321 = vmatprep.subr.mxu0 0.0
        %2322 = vmatpush2.msra.mxu0 0.0
        %2323 = vmatprep.mubr.f32.mxu0 0.0
        %2324 = vmatmul.mubr.f32.gmra.mxu0 %v2257
        %v2325 = vpop.f32.mrf.mxu0
        %v2326 = vadd.f32 %v2254, %v2325
        %v2327 = vpop.f32.mrf.mxu0
        %v2328 = vadd.f32 %v2254, %v2327
        %2329 = vdwg.mxu0
        %s2330 = scalar_lea.vmem %s22, 16
        %v2331 = vld [vmem:[%s2330] sm:$0xff]
        %2332 = vst [vmem:[#allocation2 + $0x8] sm:$0xff] %v2326
        %2333 = vst [vmem:[#allocation2 + $0x10] sm:$0xff] %v2328
        %v2334 = vld [vmem:[#allocation2] sm:$0xff]
        %v2335 = vld [vmem:[#allocation2 + $0x8] sm:$0xff]
        %v2336 = vld [vmem:[#allocation2 + $0x10] sm:$0xff]
        %2340 = vrot.lane.b32.xlu0 %v2334, 17
        %v2341 = vpop.permute.xlu0 %2340
        %2342 = vrot.lane.b32.xlu0 %v2335, 17
        %v2343 = vpop.permute.xlu0 %2342
        %2344 = vrot.lane.b32.xlu0 %v2336, 17
        %v2345 = vpop.permute.xlu0 %2344
        %v2346 = vsel %vm920, %v2341, %v2343
        %v2347 = vsel %vm920, %v2343, %v2345
        %v2350 = vsel %vm909, %v2346, 0.0
        %v2351 = vsel %vm910, %v2347, 0.0
        %2352 = vrot.lane.b32.xlu0 %v2334, 15
        %v2353 = vpop.permute.xlu0 %2352
        %2354 = vrot.lane.b32.xlu0 %v2335, 15
        %v2355 = vpop.permute.xlu0 %2354
        %2356 = vrot.lane.b32.xlu0 %v2336, 15
        %v2357 = vpop.permute.xlu0 %2356
        %v2358 = vsel %vm945, %v2353, %v2355
        %v2359 = vsel %vm945, %v2355, %v2357
        %v2362 = vsel %vm937, %v2358, 0.0
        %v2363 = vsel %vm938, %v2359, 0.0
        %2364 = vrot.lane.b32.xlu0 %v2334, 1
        %v2365 = vpop.permute.xlu0 %2364
        %2366 = vrot.lane.b32.xlu0 %v2335, 1
        %v2367 = vpop.permute.xlu0 %2366
        %2368 = vrot.lane.b32.xlu0 %v2336, 1
        %v2369 = vpop.permute.xlu0 %2368
        %v2370 = vsel %vm958, %v2365, %v2367
        %v2371 = vsel %vm958, %v2367, %v2369
        %v2374 = vsel %vm909, %v2370, 0.0
        %v2375 = vsel %vm910, %v2371, 0.0
        %v2376 = vld [vmem:[#allocation2 + $0x8] sm:$0xff]
        %v2377 = vld [vmem:[#allocation2 + $0x10] sm:$0xff]
        %v2378 = vld [vmem:[#allocation2 + $0x18] sm:$0xff]
        %2382 = vrot.lane.b32.xlu0 %v2376, 127
        %v2383 = vpop.permute.xlu0 %2382
        %2384 = vrot.lane.b32.xlu0 %v2377, 127
        %v2385 = vpop.permute.xlu0 %2384
        %2386 = vrot.lane.b32.xlu0 %v2378, 127
        %v2387 = vpop.permute.xlu0 %2386
        %v2388 = vsel %vm977, %v2383, %v2385
        %v2389 = vsel %vm977, %v2385, %v2387
        %v2392 = vsel %vm937, %v2388, 0.0
        %v2393 = vsel %vm938, %v2389, 0.0
        %2394 = vrot.lane.b32.xlu0 %v2376, 113
        %v2395 = vpop.permute.xlu0 %2394
        %2396 = vrot.lane.b32.xlu0 %v2377, 113
        %v2397 = vpop.permute.xlu0 %2396
        %2398 = vrot.lane.b32.xlu0 %v2378, 113
        %v2399 = vpop.permute.xlu0 %2398
        %v2400 = vsel %vm990, %v2395, %v2397
        %v2401 = vsel %vm990, %v2397, %v2399
        %v2404 = vsel %vm909, %v2400, 0.0
        %v2405 = vsel %vm910, %v2401, 0.0
        %2406 = vrot.lane.b32.xlu0 %v2376, 111
        %v2407 = vpop.permute.xlu0 %2406
        %2408 = vrot.lane.b32.xlu0 %v2377, 111
        %v2409 = vpop.permute.xlu0 %2408
        %2410 = vrot.lane.b32.xlu0 %v2378, 111
        %v2411 = vpop.permute.xlu0 %2410
        %v2412 = vsel %vm1003, %v2407, %v2409
        %v2413 = vsel %vm1003, %v2409, %v2411
        %v2416 = vsel %vm937, %v2412, 0.0
        %v2417 = vsel %vm938, %v2413, 0.0
        %2418 = vrot.lane.b32.xlu0 %v2334, 16
        %v2419 = vpop.permute.xlu0 %2418
        %2420 = vrot.lane.b32.xlu0 %v2335, 16
        %v2421 = vpop.permute.xlu0 %2420
        %2422 = vrot.lane.b32.xlu0 %v2336, 16
        %v2423 = vpop.permute.xlu0 %2422
        %v2424 = vsel %vm1016, %v2419, %v2421
        %v2425 = vsel %vm1016, %v2421, %v2423
        %2428 = vrot.lane.b32.xlu0 %v2376, 112
        %v2429 = vpop.permute.xlu0 %2428
        %2430 = vrot.lane.b32.xlu0 %v2377, 112
        %v2431 = vpop.permute.xlu0 %2430
        %2432 = vrot.lane.b32.xlu0 %v2378, 112
        %v2433 = vpop.permute.xlu0 %2432
        %v2434 = vsel %vm1027, %v2429, %v2431
        %v2435 = vsel %vm1027, %v2431, %v2433
        %v2439 = vsel %vm1436, %v2331, 0
        %2441 = vmatprep.subr.mxu0 0.0
        %2442 = vmatpush1.msra.mxu0 0.0
        %2443 = vmatprep.subr.mxu0 0.0
        %2444 = vmatpush1.msra.mxu0 0.0
        %2445 = vmatprep.subr.mxu0 0.0
        %2446 = vmatpush1.msra.mxu0 0.0
        %2447 = vmatprep.subr.mxu0 0.0
        %2448 = vmatpush1.msra.mxu0 0.0
        %2449 = vmatprep.subr.mxu0 0.0
        %2450 = vmatpush1.msra.mxu0 0.0
        %2451 = vmatprep.subr.mxu0 0.0
        %2452 = vmatpush1.msra.mxu0 0.0
        %2453 = vmatprep.subr.mxu0 0.0
        %2454 = vmatpush1.msra.mxu0 0.0
        %2455 = vmatprep.subr.mxu0 %v2417
        %2456 = vmatpush1.msra.mxu0 %v2416
        %2457 = vmatprep.subr.mxu0 %v2435
        %2458 = vmatpush1.msra.mxu0 %v2434
        %2459 = vmatprep.subr.mxu0 %v2405
        %2460 = vmatpush1.msra.mxu0 %v2404
        %2461 = vmatprep.subr.mxu0 %v2393
        %2462 = vmatpush1.msra.mxu0 %v2392
        %2463 = vmatprep.subr.mxu0 %v2336
        %2464 = vmatpush1.msra.mxu0 %v2335
        %2465 = vmatprep.subr.mxu0 %v2375
        %2466 = vmatpush1.msra.mxu0 %v2374
        %2467 = vmatprep.subr.mxu0 %v2363
        %2468 = vmatpush1.msra.mxu0 %v2362
        %2469 = vmatprep.subr.mxu0 %v2425
        %2470 = vmatpush1.msra.mxu0 %v2424
        %2471 = vmatprep.subr.mxu0 %v2351
        %2472 = vmatpush1.msra.mxu0 %v2350
        %2473 = vmatprep.subr.mxu0 0.0
        %2474 = vmatpush2.msra.mxu0 0.0
        %2475 = vmatprep.subr.mxu0 0.0
        %2476 = vmatpush2.msra.mxu0 0.0
        %2477 = vmatprep.subr.mxu0 0.0
        %2478 = vmatpush2.msra.mxu0 0.0
        %2479 = vmatprep.subr.mxu0 0.0
        %2480 = vmatpush2.msra.mxu0 0.0
        %2481 = vmatprep.subr.mxu0 0.0
        %2482 = vmatpush2.msra.mxu0 0.0
        %2483 = vmatprep.subr.mxu0 0.0
        %2484 = vmatpush2.msra.mxu0 0.0
        %2485 = vmatprep.subr.mxu0 0.0
        %2486 = vmatpush2.msra.mxu0 0.0
        %2487 = vmatprep.subr.mxu0 0.0
        %2488 = vmatpush2.msra.mxu0 0.0
        %2489 = vmatprep.subr.mxu0 0.0
        %2490 = vmatpush2.msra.mxu0 0.0
        %2491 = vmatprep.subr.mxu0 0.0
        %2492 = vmatpush2.msra.mxu0 0.0
        %2493 = vmatprep.subr.mxu0 0.0
        %2494 = vmatpush2.msra.mxu0 0.0
        %2495 = vmatprep.subr.mxu0 0.0
        %2496 = vmatpush2.msra.mxu0 0.0
        %2497 = vmatprep.subr.mxu0 0.0
        %2498 = vmatpush2.msra.mxu0 0.0
        %2499 = vmatprep.subr.mxu0 0.0
        %2500 = vmatpush2.msra.mxu0 0.0
        %2501 = vmatprep.subr.mxu0 0.0
        %2502 = vmatpush2.msra.mxu0 0.0
        %2503 = vmatprep.subr.mxu0 0.0
        %2504 = vmatpush2.msra.mxu0 0.0
        %2505 = vmatprep.mubr.f32.mxu0 0.0
        %2506 = vmatmul.mubr.f32.gmra.mxu0 %v2439
        %v2507 = vpop.f32.mrf.mxu0
        %v2508 = vadd.f32 0.0, %v2507
        %v2509 = vpop.f32.mrf.mxu0
        %v2510 = vadd.f32 0.0, %v2509
        %2511 = vdwg.mxu0
        %v2512 = vadd.f32 %v1763, %v2508
        %v2513 = vadd.f32 %v1765, %v2510
        %v2514 = vld [vmem:[%s16] sm:$0xff]
        %2515 = vst [vmem:[#allocation2 + $0x8] sm:$0xff] %v883
        %2516 = vst [vmem:[#allocation2 + $0x10] sm:$0xff] %v885
        %v2517 = vld [vmem:[#allocation2] sm:$0xff]
        %v2518 = vld [vmem:[#allocation2 + $0x8] sm:$0xff]
        %v2519 = vld [vmem:[#allocation2 + $0x10] sm:$0xff]
        %2523 = vrot.lane.b32.xlu0 %v2517, 3
        %v2524 = vpop.permute.xlu0 %2523
        %2525 = vrot.lane.b32.xlu0 %v2518, 3
        %v2526 = vpop.permute.xlu0 %2525
        %2527 = vrot.lane.b32.xlu0 %v2519, 3
        %v2528 = vpop.permute.xlu0 %2527
        %v2529 = vsel %vm1356, %v2524, %v2526
        %v2530 = vsel %vm1356, %v2526, %v2528
        %v2533 = vsel %vm1307, %v2529, 0.0
        %v2534 = vsel %vm1308, %v2530, 0.0
        %2535 = vrot.lane.b32.xlu0 %v2517, 2
        %v2536 = vpop.permute.xlu0 %2535
        %2537 = vrot.lane.b32.xlu0 %v2518, 2
        %v2538 = vpop.permute.xlu0 %2537
        %2539 = vrot.lane.b32.xlu0 %v2519, 2
        %v2540 = vpop.permute.xlu0 %2539
        %v2541 = vsel %vm1794, %v2536, %v2538
        %v2542 = vsel %vm1794, %v2538, %v2540
        %v2545 = vsel %vm1783, %v2541, 0.0
        %v2546 = vsel %vm1784, %v2542, 0.0
        %2547 = vrot.lane.b32.xlu0 %v2517, 1
        %v2548 = vpop.permute.xlu0 %2547
        %2549 = vrot.lane.b32.xlu0 %v2518, 1
        %v2550 = vpop.permute.xlu0 %2549
        %2551 = vrot.lane.b32.xlu0 %v2519, 1
        %v2552 = vpop.permute.xlu0 %2551
        %v2553 = vsel %vm958, %v2548, %v2550
        %v2554 = vsel %vm958, %v2550, %v2552
        %v2557 = vsel %vm909, %v2553, 0.0
        %v2558 = vsel %vm910, %v2554, 0.0
        %v2559 = vld [vmem:[#allocation2 + $0x8] sm:$0xff]
        %v2560 = vld [vmem:[#allocation2 + $0x10] sm:$0xff]
        %v2561 = vld [vmem:[#allocation2 + $0x18] sm:$0xff]
        %2565 = vrot.lane.b32.xlu0 %v2559, 127
        %v2566 = vpop.permute.xlu0 %2565
        %2567 = vrot.lane.b32.xlu0 %v2560, 127
        %v2568 = vpop.permute.xlu0 %2567
        %2569 = vrot.lane.b32.xlu0 %v2561, 127
        %v2570 = vpop.permute.xlu0 %2569
        %v2571 = vsel %vm977, %v2566, %v2568
        %v2572 = vsel %vm977, %v2568, %v2570
        %v2575 = vsel %vm937, %v2571, 0.0
        %v2576 = vsel %vm938, %v2572, 0.0
        %2577 = vrot.lane.b32.xlu0 %v2559, 126
        %v2578 = vpop.permute.xlu0 %2577
        %2579 = vrot.lane.b32.xlu0 %v2560, 126
        %v2580 = vpop.permute.xlu0 %2579
        %2581 = vrot.lane.b32.xlu0 %v2561, 126
        %v2582 = vpop.permute.xlu0 %2581
        %v2583 = vsel %vm1849, %v2578, %v2580
        %v2584 = vsel %vm1849, %v2580, %v2582
        %v2587 = vsel %vm1841, %v2583, 0.0
        %v2588 = vsel %vm1842, %v2584, 0.0
        %2589 = vrot.lane.b32.xlu0 %v2559, 125
        %v2590 = vpop.permute.xlu0 %2589
        %2591 = vrot.lane.b32.xlu0 %v2560, 125
        %v2592 = vpop.permute.xlu0 %2591
        %2593 = vrot.lane.b32.xlu0 %v2561, 125
        %v2594 = vpop.permute.xlu0 %2593
        %v2595 = vsel %vm1375, %v2590, %v2592
        %v2596 = vsel %vm1375, %v2592, %v2594
        %v2599 = vsel %vm1335, %v2595, 0.0
        %v2600 = vsel %vm1336, %v2596, 0.0
        %v2601 = vld [vmem:[%s17] sm:$0xff]
        %2603 = vset.pattern.permute.xlu0 0
        %2604 = vperm.xlu0 %2603, %v2601
        %v2605 = vpop.permute.xlu0 %2604
        %vm2607 = vcmask 457728
        %v2609 = vsel %vm2607, %v2514, 0
        %2611 = vmatprep.subr.mxu0 0.0
        %2612 = vmatpush1.msra.mxu0 0.0
        %2613 = vmatprep.subr.mxu0 0.0
        %2614 = vmatpush1.msra.mxu0 0.0
        %2615 = vmatprep.subr.mxu0 0.0
        %2616 = vmatpush1.msra.mxu0 0.0
        %2617 = vmatprep.subr.mxu0 0.0
        %2618 = vmatpush1.msra.mxu0 0.0
        %2619 = vmatprep.subr.mxu0 0.0
        %2620 = vmatpush1.msra.mxu0 0.0
        %2621 = vmatprep.subr.mxu0 0.0
        %2622 = vmatpush1.msra.mxu0 0.0
        %2623 = vmatprep.subr.mxu0 0.0
        %2624 = vmatpush1.msra.mxu0 0.0
        %2625 = vmatprep.subr.mxu0 0.0
        %2626 = vmatpush1.msra.mxu0 0.0
        %2627 = vmatprep.subr.mxu0 0.0
        %2628 = vmatpush1.msra.mxu0 0.0
        %2629 = vmatprep.subr.mxu0 %v2600
        %2630 = vmatpush1.msra.mxu0 %v2599
        %2631 = vmatprep.subr.mxu0 %v2588
        %2632 = vmatpush1.msra.mxu0 %v2587
        %2633 = vmatprep.subr.mxu0 %v2576
        %2634 = vmatpush1.msra.mxu0 %v2575
        %2635 = vmatprep.subr.mxu0 %v2519
        %2636 = vmatpush1.msra.mxu0 %v2518
        %2637 = vmatprep.subr.mxu0 %v2558
        %2638 = vmatpush1.msra.mxu0 %v2557
        %2639 = vmatprep.subr.mxu0 %v2546
        %2640 = vmatpush1.msra.mxu0 %v2545
        %2641 = vmatprep.subr.mxu0 %v2534
        %2642 = vmatpush1.msra.mxu0 %v2533
        %2643 = vmatprep.subr.mxu0 0.0
        %2644 = vmatpush2.msra.mxu0 0.0
        %2645 = vmatprep.subr.mxu0 0.0
        %2646 = vmatpush2.msra.mxu0 0.0
        %2647 = vmatprep.subr.mxu0 0.0
        %2648 = vmatpush2.msra.mxu0 0.0
        %2649 = vmatprep.subr.mxu0 0.0
        %2650 = vmatpush2.msra.mxu0 0.0
        %2651 = vmatprep.subr.mxu0 0.0
        %2652 = vmatpush2.msra.mxu0 0.0
        %2653 = vmatprep.subr.mxu0 0.0
        %2654 = vmatpush2.msra.mxu0 0.0
        %2655 = vmatprep.subr.mxu0 0.0
        %2656 = vmatpush2.msra.mxu0 0.0
        %2657 = vmatprep.subr.mxu0 0.0
        %2658 = vmatpush2.msra.mxu0 0.0
        %2659 = vmatprep.subr.mxu0 0.0
        %2660 = vmatpush2.msra.mxu0 0.0
        %2661 = vmatprep.subr.mxu0 0.0
        %2662 = vmatpush2.msra.mxu0 0.0
        %2663 = vmatprep.subr.mxu0 0.0
        %2664 = vmatpush2.msra.mxu0 0.0
        %2665 = vmatprep.subr.mxu0 0.0
        %2666 = vmatpush2.msra.mxu0 0.0
        %2667 = vmatprep.subr.mxu0 0.0
        %2668 = vmatpush2.msra.mxu0 0.0
        %2669 = vmatprep.subr.mxu0 0.0
        %2670 = vmatpush2.msra.mxu0 0.0
        %2671 = vmatprep.subr.mxu0 0.0
        %2672 = vmatpush2.msra.mxu0 0.0
        %2673 = vmatprep.subr.mxu0 0.0
        %2674 = vmatpush2.msra.mxu0 0.0
        %2675 = vmatprep.mubr.f32.mxu0 0.0
        %2676 = vmatmul.mubr.f32.gmra.mxu0 %v2609
        %v2677 = vpop.f32.mrf.mxu0
        %v2678 = vadd.f32 %v2605, %v2677
        %v2679 = vpop.f32.mrf.mxu0
        %v2680 = vadd.f32 %v2605, %v2679
        %2681 = vdwg.mxu0
        %v2682 = vld [vmem:[%s18] sm:$0xff]
        %2683 = vst [vmem:[#allocation2 + $0x8] sm:$0xff] %v2678
        %2684 = vst [vmem:[#allocation2 + $0x10] sm:$0xff] %v2680
        %v2685 = vld [vmem:[#allocation2] sm:$0xff]
        %v2686 = vld [vmem:[#allocation2 + $0x8] sm:$0xff]
        %v2687 = vld [vmem:[#allocation2 + $0x10] sm:$0xff]
        %v2688 = vld [vmem:[#allocation2 + $0x8] sm:$0xff]
        %v2689 = vld [vmem:[#allocation2 + $0x10] sm:$0xff]
        %v2690 = vld [vmem:[#allocation2 + $0x18] sm:$0xff]
        %2694 = vrot.lane.b32.xlu0 %v2685, 112
        %v2695 = vpop.permute.xlu0 %2694
        %2696 = vrot.lane.b32.xlu0 %v2686, 112
        %v2697 = vpop.permute.xlu0 %2696
        %2698 = vrot.lane.b32.xlu0 %v2687, 112
        %v2699 = vpop.permute.xlu0 %2698
        %v2700 = vsel %vm1027, %v2695, %v2697
        %v2701 = vsel %vm1027, %v2697, %v2699
        %2702 = vrot.lane.b32.xlu0 %v2685, 96
        %v2703 = vpop.permute.xlu0 %2702
        %2704 = vrot.lane.b32.xlu0 %v2686, 96
        %v2705 = vpop.permute.xlu0 %2704
        %2706 = vrot.lane.b32.xlu0 %v2687, 96
        %v2707 = vpop.permute.xlu0 %2706
        %v2708 = vsel %vm1177, %v2703, %v2705
        %v2709 = vsel %vm1177, %v2705, %v2707
        %2710 = vrot.lane.b32.xlu0 %v2686, 80
        %v2711 = vpop.permute.xlu0 %2710
        %2712 = vrot.lane.b32.xlu0 %v2687, 80
        %v2713 = vpop.permute.xlu0 %2712
        %v2714 = vsel %vm1425, %v2711, %v2713
        %2718 = vrot.lane.b32.xlu0 %v2688, 64
        %v2719 = vpop.permute.xlu0 %2718
        %2720 = vrot.lane.b32.xlu0 %v2689, 64
        %v2721 = vpop.permute.xlu0 %2720
        %2722 = vrot.lane.b32.xlu0 %v2690, 64
        %v2723 = vpop.permute.xlu0 %2722
        %v2724 = vsel %vm1979, %v2719, %v2721
        %v2725 = vsel %vm1979, %v2721, %v2723
        %2726 = vrot.lane.b32.xlu0 %v2688, 48
        %v2727 = vpop.permute.xlu0 %2726
        %2728 = vrot.lane.b32.xlu0 %v2689, 48
        %v2729 = vpop.permute.xlu0 %2728
        %2730 = vrot.lane.b32.xlu0 %v2690, 48
        %v2731 = vpop.permute.xlu0 %2730
        %v2732 = vsel %vm1414, %v2727, %v2729
        %v2733 = vsel %vm1414, %v2729, %v2731
        %2734 = vrot.lane.b32.xlu0 %v2688, 32
        %v2735 = vpop.permute.xlu0 %2734
        %2736 = vrot.lane.b32.xlu0 %v2689, 32
        %v2737 = vpop.permute.xlu0 %2736
        %2738 = vrot.lane.b32.xlu0 %v2690, 32
        %v2739 = vpop.permute.xlu0 %2738
        %v2740 = vsel %vm2018, %v2735, %v2737
        %v2741 = vsel %vm2018, %v2737, %v2739
        %v2742 = vld [vmem:[%s19] sm:$0xff]
        %2744 = vset.pattern.permute.xlu0 0
        %2745 = vperm.xlu0 %2744, %v2742
        %v2746 = vpop.permute.xlu0 %2745
        %2748 = vrot.lane.b32.xlu0 %v2685, 48
        %v2749 = vpop.permute.xlu0 %2748
        %2750 = vrot.lane.b32.xlu0 %v2686, 48
        %v2751 = vpop.permute.xlu0 %2750
        %2752 = vrot.lane.b32.xlu0 %v2687, 48
        %v2753 = vpop.permute.xlu0 %2752
        %2754 = vrot.lane.b32.xlu0 %v2700, 48
        %v2755 = vpop.permute.xlu0 %2754
        %2756 = vrot.lane.b32.xlu0 %v2701, 48
        %v2757 = vpop.permute.xlu0 %2756
        %2758 = vrot.lane.b32.xlu0 %v2699, 48
        %v2759 = vpop.permute.xlu0 %2758
        %2760 = vrot.lane.b32.xlu0 %v2708, 48
        %v2761 = vpop.permute.xlu0 %2760
        %2762 = vrot.lane.b32.xlu0 %v2709, 48
        %v2763 = vpop.permute.xlu0 %2762
        %2764 = vrot.lane.b32.xlu0 %v2707, 48
        %v2765 = vpop.permute.xlu0 %2764
        %2766 = vrot.lane.b32.xlu0 %v2711, 48
        %v2767 = vpop.permute.xlu0 %2766
        %2768 = vrot.lane.b32.xlu0 %v2714, 48
        %v2769 = vpop.permute.xlu0 %2768
        %2770 = vrot.lane.b32.xlu0 %v2713, 48
        %v2771 = vpop.permute.xlu0 %2770
        %2772 = vrot.lane.b32.xlu0 %v2719, 48
        %v2773 = vpop.permute.xlu0 %2772
        %2774 = vrot.lane.b32.xlu0 %v2724, 48
        %v2775 = vpop.permute.xlu0 %2774
        %2776 = vrot.lane.b32.xlu0 %v2725, 48
        %v2777 = vpop.permute.xlu0 %2776
        %2778 = vrot.lane.b32.xlu0 %v2727, 48
        %v2779 = vpop.permute.xlu0 %2778
        %2780 = vrot.lane.b32.xlu0 %v2732, 48
        %v2781 = vpop.permute.xlu0 %2780
        %2782 = vrot.lane.b32.xlu0 %v2733, 48
        %v2783 = vpop.permute.xlu0 %2782
        %2784 = vrot.lane.b32.xlu0 %v2735, 48
        %v2785 = vpop.permute.xlu0 %2784
        %2786 = vrot.lane.b32.xlu0 %v2740, 48
        %v2787 = vpop.permute.xlu0 %2786
        %2788 = vrot.lane.b32.xlu0 %v2741, 48
        %v2789 = vpop.permute.xlu0 %2788
        %v2790 = vsel %vm1414, %v2749, %v2751
        %v2791 = vsel %vm1414, %v2751, %v2753
        %v2792 = vsel %vm1414, %v2755, %v2757
        %v2793 = vsel %vm1414, %v2757, %v2759
        %v2794 = vsel %vm1414, %v2761, %v2763
        %v2795 = vsel %vm1414, %v2763, %v2765
        %v2796 = vsel %vm1414, %v2767, %v2769
        %v2797 = vsel %vm1414, %v2769, %v2771
        %v2798 = vsel %vm1414, %v2773, %v2775
        %v2799 = vsel %vm1414, %v2775, %v2777
        %v2800 = vsel %vm1414, %v2779, %v2781
        %v2801 = vsel %vm1414, %v2781, %v2783
        %v2802 = vsel %vm1414, %v2785, %v2787
        %v2803 = vsel %vm1414, %v2787, %v2789
        %v2819 = vsel %vm2607, %v2682, 0
        %2821 = vmatprep.subr.mxu0 0.0
        %2822 = vmatpush1.msra.mxu0 0.0
        %2823 = vmatprep.subr.mxu0 0.0
        %2824 = vmatpush1.msra.mxu0 0.0
        %2825 = vmatprep.subr.mxu0 0.0
        %2826 = vmatpush1.msra.mxu0 0.0
        %2827 = vmatprep.subr.mxu0 0.0
        %2828 = vmatpush1.msra.mxu0 0.0
        %2829 = vmatprep.subr.mxu0 0.0
        %2830 = vmatpush1.msra.mxu0 0.0
        %2831 = vmatprep.subr.mxu0 0.0
        %2832 = vmatpush1.msra.mxu0 0.0
        %2833 = vmatprep.subr.mxu0 0.0
        %2834 = vmatpush1.msra.mxu0 0.0
        %2835 = vmatprep.subr.mxu0 0.0
        %2836 = vmatpush1.msra.mxu0 0.0
        %2837 = vmatprep.subr.mxu0 0.0
        %2838 = vmatpush1.msra.mxu0 0.0
        %2839 = vmatprep.subr.mxu0 %v2803
        %2840 = vmatpush1.msra.mxu0 %v2802
        %2841 = vmatprep.subr.mxu0 %v2801
        %2842 = vmatpush1.msra.mxu0 %v2800
        %2843 = vmatprep.subr.mxu0 %v2799
        %2844 = vmatpush1.msra.mxu0 %v2798
        %2845 = vmatprep.subr.mxu0 %v2797
        %2846 = vmatpush1.msra.mxu0 %v2796
        %2847 = vmatprep.subr.mxu0 %v2795
        %2848 = vmatpush1.msra.mxu0 %v2794
        %2849 = vmatprep.subr.mxu0 %v2793
        %2850 = vmatpush1.msra.mxu0 %v2792
        %2851 = vmatprep.subr.mxu0 %v2791
        %2852 = vmatpush1.msra.mxu0 %v2790
        %2853 = vmatprep.subr.mxu0 0.0
        %2854 = vmatpush2.msra.mxu0 0.0
        %2855 = vmatprep.subr.mxu0 0.0
        %2856 = vmatpush2.msra.mxu0 0.0
        %2857 = vmatprep.subr.mxu0 0.0
        %2858 = vmatpush2.msra.mxu0 0.0
        %2859 = vmatprep.subr.mxu0 0.0
        %2860 = vmatpush2.msra.mxu0 0.0
        %2861 = vmatprep.subr.mxu0 0.0
        %2862 = vmatpush2.msra.mxu0 0.0
        %2863 = vmatprep.subr.mxu0 0.0
        %2864 = vmatpush2.msra.mxu0 0.0
        %2865 = vmatprep.subr.mxu0 0.0
        %2866 = vmatpush2.msra.mxu0 0.0
        %2867 = vmatprep.subr.mxu0 0.0
        %2868 = vmatpush2.msra.mxu0 0.0
        %2869 = vmatprep.subr.mxu0 0.0
        %2870 = vmatpush2.msra.mxu0 0.0
        %2871 = vmatprep.subr.mxu0 0.0
        %2872 = vmatpush2.msra.mxu0 0.0
        %2873 = vmatprep.subr.mxu0 0.0
        %2874 = vmatpush2.msra.mxu0 0.0
        %2875 = vmatprep.subr.mxu0 0.0
        %2876 = vmatpush2.msra.mxu0 0.0
        %2877 = vmatprep.subr.mxu0 0.0
        %2878 = vmatpush2.msra.mxu0 0.0
        %2879 = vmatprep.subr.mxu0 0.0
        %2880 = vmatpush2.msra.mxu0 0.0
        %2881 = vmatprep.subr.mxu0 0.0
        %2882 = vmatpush2.msra.mxu0 0.0
        %2883 = vmatprep.subr.mxu0 0.0
        %2884 = vmatpush2.msra.mxu0 0.0
        %2885 = vmatprep.mubr.f32.mxu0 0.0
        %2886 = vmatmul.mubr.f32.gmra.mxu0 %v2819
        %v2887 = vpop.f32.mrf.mxu0
        %v2888 = vadd.f32 %v2746, %v2887
        %v2889 = vpop.f32.mrf.mxu0
        %v2890 = vadd.f32 %v2746, %v2889
        %2891 = vdwg.mxu0
        %v2892 = vld [vmem:[%s20] sm:$0xff]
        %2893 = vst [vmem:[#allocation2 + $0x8] sm:$0xff] %v2888
        %2894 = vst [vmem:[#allocation2 + $0x10] sm:$0xff] %v2890
        %v2895 = vld [vmem:[#allocation2] sm:$0xff]
        %v2896 = vld [vmem:[#allocation2 + $0x8] sm:$0xff]
        %v2897 = vld [vmem:[#allocation2 + $0x10] sm:$0xff]
        %vm2898 = vcmp.ge.s32.totalorder %v736, 7
        %v2899 = vsel %vm2898, 1, 0
        %v2900 = vlaneseq
        %v2901 = vshrl.u32 %v2900, 7
        %v2902 = vsub.s32 0, %v2901
        %v2903 = vrot.slane %v2899, %v2902
        %v2904 = vlaneseq
        %v2905 = vshrl.u32 %v2904, 7
        %v2906 = vsub.s32 1, %v2905
        %v2907 = vrot.slane %v2899, %v2906
        %vm2908 = vcmp.eq.s32.totalorder %v2903, 1
        %vm2909 = vcmp.eq.s32.totalorder %v2907, 1
        %2913 = vrot.lane.b32.xlu0 %v2895, 119
        %v2914 = vpop.permute.xlu0 %2913
        %2915 = vrot.lane.b32.xlu0 %v2896, 119
        %v2916 = vpop.permute.xlu0 %2915
        %2917 = vrot.lane.b32.xlu0 %v2897, 119
        %v2918 = vpop.permute.xlu0 %2917
        %vm2919 = vcmask 973824
        %v2920 = vsel %vm2919, %v2914, %v2916
        %v2921 = vsel %vm2919, %v2916, %v2918
        %v2924 = vsel %vm2908, %v2920, 0.0
        %v2925 = vsel %vm2909, %v2921, 0.0
        %vm2926 = vcmp.lt.s32.totalorder %v736, 9
        %v2927 = vsel %vm2926, 1, 0
        %v2928 = vlaneseq
        %v2929 = vshrl.u32 %v2928, 7
        %v2930 = vsub.s32 0, %v2929
        %v2931 = vrot.slane %v2927, %v2930
        %v2932 = vlaneseq
        %v2933 = vshrl.u32 %v2932, 7
        %v2934 = vsub.s32 1, %v2933
        %v2935 = vrot.slane %v2927, %v2934
        %vm2936 = vcmp.eq.s32.totalorder %v2931, 1
        %vm2937 = vcmp.eq.s32.totalorder %v2935, 1
        %2938 = vrot.lane.b32.xlu0 %v2895, 105
        %v2939 = vpop.permute.xlu0 %2938
        %2940 = vrot.lane.b32.xlu0 %v2896, 105
        %v2941 = vpop.permute.xlu0 %2940
        %2942 = vrot.lane.b32.xlu0 %v2897, 105
        %v2943 = vpop.permute.xlu0 %2942
        %vm2944 = vcmask 859136
        %v2945 = vsel %vm2944, %v2939, %v2941
        %v2946 = vsel %vm2944, %v2941, %v2943
        %v2949 = vsel %vm2936, %v2945, 0.0
        %v2950 = vsel %vm2937, %v2946, 0.0
        %2951 = vrot.lane.b32.xlu0 %v2895, 7
        %v2952 = vpop.permute.xlu0 %2951
        %2953 = vrot.lane.b32.xlu0 %v2896, 7
        %v2954 = vpop.permute.xlu0 %2953
        %2955 = vrot.lane.b32.xlu0 %v2897, 7
        %v2956 = vpop.permute.xlu0 %2955
        %vm2957 = vcmask 56320
        %v2958 = vsel %vm2957, %v2952, %v2954
        %v2959 = vsel %vm2957, %v2954, %v2956
        %v2962 = vsel %vm2908, %v2958, 0.0
        %v2963 = vsel %vm2909, %v2959, 0.0
        %v2964 = vld [vmem:[#allocation2 + $0x8] sm:$0xff]
        %v2965 = vld [vmem:[#allocation2 + $0x10] sm:$0xff]
        %v2966 = vld [vmem:[#allocation2 + $0x18] sm:$0xff]
        %2970 = vrot.lane.b32.xlu0 %v2964, 121
        %v2971 = vpop.permute.xlu0 %2970
        %2972 = vrot.lane.b32.xlu0 %v2965, 121
        %v2973 = vpop.permute.xlu0 %2972
        %2974 = vrot.lane.b32.xlu0 %v2966, 121
        %v2975 = vpop.permute.xlu0 %2974
        %vm2976 = vcmask 990208
        %v2977 = vsel %vm2976, %v2971, %v2973
        %v2978 = vsel %vm2976, %v2973, %v2975
        %v2981 = vsel %vm2936, %v2977, 0.0
        %v2982 = vsel %vm2937, %v2978, 0.0
        %2983 = vrot.lane.b32.xlu0 %v2964, 23
        %v2984 = vpop.permute.xlu0 %2983
        %2985 = vrot.lane.b32.xlu0 %v2965, 23
        %v2986 = vpop.permute.xlu0 %2985
        %2987 = vrot.lane.b32.xlu0 %v2966, 23
        %v2988 = vpop.permute.xlu0 %2987
        %vm2989 = vcmask 187392
        %v2990 = vsel %vm2989, %v2984, %v2986
        %v2991 = vsel %vm2989, %v2986, %v2988
        %v2994 = vsel %vm2908, %v2990, 0.0
        %v2995 = vsel %vm2909, %v2991, 0.0
        %2996 = vrot.lane.b32.xlu0 %v2964, 9
        %v2997 = vpop.permute.xlu0 %2996
        %2998 = vrot.lane.b32.xlu0 %v2965, 9
        %v2999 = vpop.permute.xlu0 %2998
        %3000 = vrot.lane.b32.xlu0 %v2966, 9
        %v3001 = vpop.permute.xlu0 %3000
        %vm3002 = vcmask 72704
        %v3003 = vsel %vm3002, %v2997, %v2999
        %v3004 = vsel %vm3002, %v2999, %v3001
        %v3007 = vsel %vm2936, %v3003, 0.0
        %v3008 = vsel %vm2937, %v3004, 0.0
        %3009 = vrot.lane.b32.xlu0 %v2895, 112
        %v3010 = vpop.permute.xlu0 %3009
        %3011 = vrot.lane.b32.xlu0 %v2896, 112
        %v3012 = vpop.permute.xlu0 %3011
        %3013 = vrot.lane.b32.xlu0 %v2897, 112
        %v3014 = vpop.permute.xlu0 %3013
        %v3015 = vsel %vm1027, %v3010, %v3012
        %v3016 = vsel %vm1027, %v3012, %v3014
        %3019 = vrot.lane.b32.xlu0 %v2964, 16
        %v3020 = vpop.permute.xlu0 %3019
        %3021 = vrot.lane.b32.xlu0 %v2965, 16
        %v3022 = vpop.permute.xlu0 %3021
        %3023 = vrot.lane.b32.xlu0 %v2966, 16
        %v3024 = vpop.permute.xlu0 %3023
        %v3025 = vsel %vm1016, %v3020, %v3022
        %v3026 = vsel %vm1016, %v3022, %v3024
        %v3029 = vld [vmem:[%s21] sm:$0xff]
        %3031 = vset.pattern.permute.xlu0 0
        %3032 = vperm.xlu0 %3031, %v3029
        %v3033 = vpop.permute.xlu0 %3032
        %v3036 = vsel %vm1436, %v2892, 0
        %3038 = vmatprep.subr.mxu0 0.0
        %3039 = vmatpush1.msra.mxu0 0.0
        %3040 = vmatprep.subr.mxu0 0.0
        %3041 = vmatpush1.msra.mxu0 0.0
        %3042 = vmatprep.subr.mxu0 0.0
        %3043 = vmatpush1.msra.mxu0 0.0
        %3044 = vmatprep.subr.mxu0 0.0
        %3045 = vmatpush1.msra.mxu0 0.0
        %3046 = vmatprep.subr.mxu0 0.0
        %3047 = vmatpush1.msra.mxu0 0.0
        %3048 = vmatprep.subr.mxu0 0.0
        %3049 = vmatpush1.msra.mxu0 0.0
        %3050 = vmatprep.subr.mxu0 0.0
        %3051 = vmatpush1.msra.mxu0 0.0
        %3052 = vmatprep.subr.mxu0 %v3008
        %3053 = vmatpush1.msra.mxu0 %v3007
        %3054 = vmatprep.subr.mxu0 %v3026
        %3055 = vmatpush1.msra.mxu0 %v3025
        %3056 = vmatprep.subr.mxu0 %v2995
        %3057 = vmatpush1.msra.mxu0 %v2994
        %3058 = vmatprep.subr.mxu0 %v2982
        %3059 = vmatpush1.msra.mxu0 %v2981
        %3060 = vmatprep.subr.mxu0 %v2897
        %3061 = vmatpush1.msra.mxu0 %v2896
        %3062 = vmatprep.subr.mxu0 %v2963
        %3063 = vmatpush1.msra.mxu0 %v2962
        %3064 = vmatprep.subr.mxu0 %v2950
        %3065 = vmatpush1.msra.mxu0 %v2949
        %3066 = vmatprep.subr.mxu0 %v3016
        %3067 = vmatpush1.msra.mxu0 %v3015
        %3068 = vmatprep.subr.mxu0 %v2925
        %3069 = vmatpush1.msra.mxu0 %v2924
        %3070 = vmatprep.subr.mxu0 0.0
        %3071 = vmatpush2.msra.mxu0 0.0
        %3072 = vmatprep.subr.mxu0 0.0
        %3073 = vmatpush2.msra.mxu0 0.0
        %3074 = vmatprep.subr.mxu0 0.0
        %3075 = vmatpush2.msra.mxu0 0.0
        %3076 = vmatprep.subr.mxu0 0.0
        %3077 = vmatpush2.msra.mxu0 0.0
        %3078 = vmatprep.subr.mxu0 0.0
        %3079 = vmatpush2.msra.mxu0 0.0
        %3080 = vmatprep.subr.mxu0 0.0
        %3081 = vmatpush2.msra.mxu0 0.0
        %3082 = vmatprep.subr.mxu0 0.0
        %3083 = vmatpush2.msra.mxu0 0.0
        %3084 = vmatprep.subr.mxu0 0.0
        %3085 = vmatpush2.msra.mxu0 0.0
        %3086 = vmatprep.subr.mxu0 0.0
        %3087 = vmatpush2.msra.mxu0 0.0
        %3088 = vmatprep.subr.mxu0 0.0
        %3089 = vmatpush2.msra.mxu0 0.0
        %3090 = vmatprep.subr.mxu0 0.0
        %3091 = vmatpush2.msra.mxu0 0.0
        %3092 = vmatprep.subr.mxu0 0.0
        %3093 = vmatpush2.msra.mxu0 0.0
        %3094 = vmatprep.subr.mxu0 0.0
        %3095 = vmatpush2.msra.mxu0 0.0
        %3096 = vmatprep.subr.mxu0 0.0
        %3097 = vmatpush2.msra.mxu0 0.0
        %3098 = vmatprep.subr.mxu0 0.0
        %3099 = vmatpush2.msra.mxu0 0.0
        %3100 = vmatprep.subr.mxu0 0.0
        %3101 = vmatpush2.msra.mxu0 0.0
        %3102 = vmatprep.mubr.f32.mxu0 0.0
        %3103 = vmatmul.mubr.f32.gmra.mxu0 %v3036
        %v3104 = vpop.f32.mrf.mxu0
        %v3105 = vadd.f32 %v3033, %v3104
        %v3106 = vpop.f32.mrf.mxu0
        %v3107 = vadd.f32 %v3033, %v3106
        %3108 = vdwg.mxu0
        %s3109 = scalar_lea.vmem %s22, 24
        %v3110 = vld [vmem:[%s3109] sm:$0xff]
        %3111 = vst [vmem:[#allocation2 + $0x8] sm:$0xff] %v3105
        %3112 = vst [vmem:[#allocation2 + $0x10] sm:$0xff] %v3107
        %v3113 = vld [vmem:[#allocation2] sm:$0xff]
        %v3114 = vld [vmem:[#allocation2 + $0x8] sm:$0xff]
        %v3115 = vld [vmem:[#allocation2 + $0x10] sm:$0xff]
        %3119 = vrot.lane.b32.xlu0 %v3113, 17
        %v3120 = vpop.permute.xlu0 %3119
        %3121 = vrot.lane.b32.xlu0 %v3114, 17
        %v3122 = vpop.permute.xlu0 %3121
        %3123 = vrot.lane.b32.xlu0 %v3115, 17
        %v3124 = vpop.permute.xlu0 %3123
        %v3125 = vsel %vm920, %v3120, %v3122
        %v3126 = vsel %vm920, %v3122, %v3124
        %v3129 = vsel %vm909, %v3125, 0.0
        %v3130 = vsel %vm910, %v3126, 0.0
        %3131 = vrot.lane.b32.xlu0 %v3113, 15
        %v3132 = vpop.permute.xlu0 %3131
        %3133 = vrot.lane.b32.xlu0 %v3114, 15
        %v3134 = vpop.permute.xlu0 %3133
        %3135 = vrot.lane.b32.xlu0 %v3115, 15
        %v3136 = vpop.permute.xlu0 %3135
        %v3137 = vsel %vm945, %v3132, %v3134
        %v3138 = vsel %vm945, %v3134, %v3136
        %v3141 = vsel %vm937, %v3137, 0.0
        %v3142 = vsel %vm938, %v3138, 0.0
        %3143 = vrot.lane.b32.xlu0 %v3113, 1
        %v3144 = vpop.permute.xlu0 %3143
        %3145 = vrot.lane.b32.xlu0 %v3114, 1
        %v3146 = vpop.permute.xlu0 %3145
        %3147 = vrot.lane.b32.xlu0 %v3115, 1
        %v3148 = vpop.permute.xlu0 %3147
        %v3149 = vsel %vm958, %v3144, %v3146
        %v3150 = vsel %vm958, %v3146, %v3148
        %v3153 = vsel %vm909, %v3149, 0.0
        %v3154 = vsel %vm910, %v3150, 0.0
        %v3155 = vld [vmem:[#allocation2 + $0x8] sm:$0xff]
        %v3156 = vld [vmem:[#allocation2 + $0x10] sm:$0xff]
        %v3157 = vld [vmem:[#allocation2 + $0x18] sm:$0xff]
        %3161 = vrot.lane.b32.xlu0 %v3155, 127
        %v3162 = vpop.permute.xlu0 %3161
        %3163 = vrot.lane.b32.xlu0 %v3156, 127
        %v3164 = vpop.permute.xlu0 %3163
        %3165 = vrot.lane.b32.xlu0 %v3157, 127
        %v3166 = vpop.permute.xlu0 %3165
        %v3167 = vsel %vm977, %v3162, %v3164
        %v3168 = vsel %vm977, %v3164, %v3166
        %v3171 = vsel %vm937, %v3167, 0.0
        %v3172 = vsel %vm938, %v3168, 0.0
        %3173 = vrot.lane.b32.xlu0 %v3155, 113
        %v3174 = vpop.permute.xlu0 %3173
        %3175 = vrot.lane.b32.xlu0 %v3156, 113
        %v3176 = vpop.permute.xlu0 %3175
        %3177 = vrot.lane.b32.xlu0 %v3157, 113
        %v3178 = vpop.permute.xlu0 %3177
        %v3179 = vsel %vm990, %v3174, %v3176
        %v3180 = vsel %vm990, %v3176, %v3178
        %v3183 = vsel %vm909, %v3179, 0.0
        %v3184 = vsel %vm910, %v3180, 0.0
        %3185 = vrot.lane.b32.xlu0 %v3155, 111
        %v3186 = vpop.permute.xlu0 %3185
        %3187 = vrot.lane.b32.xlu0 %v3156, 111
        %v3188 = vpop.permute.xlu0 %3187
        %3189 = vrot.lane.b32.xlu0 %v3157, 111
        %v3190 = vpop.permute.xlu0 %3189
        %v3191 = vsel %vm1003, %v3186, %v3188
        %v3192 = vsel %vm1003, %v3188, %v3190
        %v3195 = vsel %vm937, %v3191, 0.0
        %v3196 = vsel %vm938, %v3192, 0.0
        %3197 = vrot.lane.b32.xlu0 %v3113, 16
        %v3198 = vpop.permute.xlu0 %3197
        %3199 = vrot.lane.b32.xlu0 %v3114, 16
        %v3200 = vpop.permute.xlu0 %3199
        %3201 = vrot.lane.b32.xlu0 %v3115, 16
        %v3202 = vpop.permute.xlu0 %3201
        %v3203 = vsel %vm1016, %v3198, %v3200
        %v3204 = vsel %vm1016, %v3200, %v3202
        %3207 = vrot.lane.b32.xlu0 %v3155, 112
        %v3208 = vpop.permute.xlu0 %3207
        %3209 = vrot.lane.b32.xlu0 %v3156, 112
        %v3210 = vpop.permute.xlu0 %3209
        %3211 = vrot.lane.b32.xlu0 %v3157, 112
        %v3212 = vpop.permute.xlu0 %3211
        %v3213 = vsel %vm1027, %v3208, %v3210
        %v3214 = vsel %vm1027, %v3210, %v3212
        %v3218 = vsel %vm1436, %v3110, 0
        %3220 = vmatprep.subr.mxu0 0.0
        %3221 = vmatpush1.msra.mxu0 0.0
        %3222 = vmatprep.subr.mxu0 0.0
        %3223 = vmatpush1.msra.mxu0 0.0
        %3224 = vmatprep.subr.mxu0 0.0
        %3225 = vmatpush1.msra.mxu0 0.0
        %3226 = vmatprep.subr.mxu0 0.0
        %3227 = vmatpush1.msra.mxu0 0.0
        %3228 = vmatprep.subr.mxu0 0.0
        %3229 = vmatpush1.msra.mxu0 0.0
        %3230 = vmatprep.subr.mxu0 0.0
        %3231 = vmatpush1.msra.mxu0 0.0
        %3232 = vmatprep.subr.mxu0 0.0
        %3233 = vmatpush1.msra.mxu0 0.0
        %3234 = vmatprep.subr.mxu0 %v3196
        %3235 = vmatpush1.msra.mxu0 %v3195
        %3236 = vmatprep.subr.mxu0 %v3214
        %3237 = vmatpush1.msra.mxu0 %v3213
        %3238 = vmatprep.subr.mxu0 %v3184
        %3239 = vmatpush1.msra.mxu0 %v3183
        %3240 = vmatprep.subr.mxu0 %v3172
        %3241 = vmatpush1.msra.mxu0 %v3171
        %3242 = vmatprep.subr.mxu0 %v3115
        %3243 = vmatpush1.msra.mxu0 %v3114
        %3244 = vmatprep.subr.mxu0 %v3154
        %3245 = vmatpush1.msra.mxu0 %v3153
        %3246 = vmatprep.subr.mxu0 %v3142
        %3247 = vmatpush1.msra.mxu0 %v3141
        %3248 = vmatprep.subr.mxu0 %v3204
        %3249 = vmatpush1.msra.mxu0 %v3203
        %3250 = vmatprep.subr.mxu0 %v3130
        %3251 = vmatpush1.msra.mxu0 %v3129
        %3252 = vmatprep.subr.mxu0 0.0
        %3253 = vmatpush2.msra.mxu0 0.0
        %3254 = vmatprep.subr.mxu0 0.0
        %3255 = vmatpush2.msra.mxu0 0.0
        %3256 = vmatprep.subr.mxu0 0.0
        %3257 = vmatpush2.msra.mxu0 0.0
        %3258 = vmatprep.subr.mxu0 0.0
        %3259 = vmatpush2.msra.mxu0 0.0
        %3260 = vmatprep.subr.mxu0 0.0
        %3261 = vmatpush2.msra.mxu0 0.0
        %3262 = vmatprep.subr.mxu0 0.0
        %3263 = vmatpush2.msra.mxu0 0.0
        %3264 = vmatprep.subr.mxu0 0.0
        %3265 = vmatpush2.msra.mxu0 0.0
        %3266 = vmatprep.subr.mxu0 0.0
        %3267 = vmatpush2.msra.mxu0 0.0
        %3268 = vmatprep.subr.mxu0 0.0
        %3269 = vmatpush2.msra.mxu0 0.0
        %3270 = vmatprep.subr.mxu0 0.0
        %3271 = vmatpush2.msra.mxu0 0.0
        %3272 = vmatprep.subr.mxu0 0.0
        %3273 = vmatpush2.msra.mxu0 0.0
        %3274 = vmatprep.subr.mxu0 0.0
        %3275 = vmatpush2.msra.mxu0 0.0
        %3276 = vmatprep.subr.mxu0 0.0
        %3277 = vmatpush2.msra.mxu0 0.0
        %3278 = vmatprep.subr.mxu0 0.0
        %3279 = vmatpush2.msra.mxu0 0.0
        %3280 = vmatprep.subr.mxu0 0.0
        %3281 = vmatpush2.msra.mxu0 0.0
        %3282 = vmatprep.subr.mxu0 0.0
        %3283 = vmatpush2.msra.mxu0 0.0
        %3284 = vmatprep.mubr.f32.mxu0 0.0
        %3285 = vmatmul.mubr.f32.gmra.mxu0 %v3218
        %v3286 = vpop.f32.mrf.mxu0
        %v3287 = vadd.f32 0.0, %v3286
        %v3288 = vpop.f32.mrf.mxu0
        %v3289 = vadd.f32 0.0, %v3288
        %3290 = vdwg.mxu0
        %v3291 = vadd.f32 %v2512, %v3287
        %v3292 = vadd.f32 %v2513, %v3289
        %v3293 = vld [vmem:[%s23] sm:$0xff]
        %3295 = vset.pattern.permute.xlu0 0
        %3296 = vperm.xlu0 %3295, %v3293
        %v3297 = vpop.permute.xlu0 %3296
        %v3299 = vadd.f32 %v3291, %v3297
        %v3300 = vadd.f32 %v3292, %v3297
        %v3301 = vadd.f32 %v3299, %v889
        %v3302 = vadd.f32 %v3300, %v891
        %v3303 = vmax.f32 %v3301, 0.0
        %v3304 = vmax.f32 %v3302, 0.0
        %3305 = vst [vmem:[%s730] sm:$0xff] %v3303
        %3306 = vst [vmem:[%s730 + $0x8] sm:$0xff] %v3304
        %s3307 = sand.u32 %s555, 1
        %s3308 = scalar_lea.sflag [#allocation4], %s3307
        %s3309 = sand.u32 %s555, 1
        %s3310 = smul.addr %s3309, 16
        %s3311 = scalar_lea.vmem [#allocation3], %s3310
        // Predicated region
        $region117: #{tpu_custom_call.1} parent=115 // pred_check
          %p3312 = pneg %p565
        $region118: #{tpu_custom_call.1} parent=115 // pred_check_branch
          %3314 = sbr.rel (%p3312) target = $region120
        $region119: #{tpu_custom_call.1} parent=115 // pred_region
          %s3316 = ssub.s32 256, 256
          %3317 = vsyncadd %s3308, %s3316
          %s3318 = smul.addr %s38, 2
          %s3319 = smul.addr %s3318, 128
          %s3320 = scalar_lea.hbm %s24, %s3319
          %s3322 = sshll.u32 %s3311, 4
          %s3323 = int_to_ptr.vmem [resolvable:$true] %s3322
          %3325 = dma.vmem_to_hbm [thread:$0]  %s3323, 256, %s3320, %s3308
        $region120: #{tpu_custom_call.1} parent=115 // pred_fallthru
          _
      $region116: #{tpu_custom_call.1} parent=5 // pred_fallthru
        _
      %p3326 = scmp.le.s32.totalorder 2, %s33
      // Predicated region
      $region121: #{tpu_custom_call.1} parent=5 // pred_check
        %p3327 = pneg %p3326
      $region122: #{tpu_custom_call.1} parent=5 // pred_check_branch
        %3329 = sbr.rel (%p3327) target = $region124
      $region123: #{tpu_custom_call.1} parent=5 // pred_region
        %s3330 = ssub.s32 %s33, 2
        // Predicated region
        $region125: #{tpu_custom_call.1} parent=123 // pred_check
          %p3331 = pneg %p571
        $region126: #{tpu_custom_call.1} parent=123 // pred_check_branch
          %3333 = sbr.rel (%p3331) target = $region128
        $region127: #{tpu_custom_call.1} parent=123 // pred_region
          %s3334 = sand.u32 %s556, 1
          %s3335 = scalar_lea.sflag [#allocation4], %s3334
          %s3336 = sand.u32 %s556, 1
          %s3337 = smul.addr %s3336, 16
          %s3338 = scalar_lea.vmem [#allocation3], %s3337
          %3339 = dma.done %s3335, 256
        $region128: #{tpu_custom_call.1} parent=123 // pred_fallthru
          _
      $region124: #{tpu_custom_call.1} parent=5 // pred_fallthru
        _
    $region6: #{tpu_custom_call.1} parent=1 // loop_footer
      %s37 = sadd.s32 1, %s33
    $region7: #{tpu_custom_call.1} parent=1 // loop_footer_branch
      %32 = sbr.rel target = $region3
    $region8: #{tpu_custom_call.1} parent=1 // loop_exit
      _
    %3340 = vsyncpa [#allocation4], 1
    %s3341 = scalar_lea.sflag [#allocation4], 1
    %3342 = vsyncpa %s3341, 1

</llo_original>
